<compile_context>
chip_gen: v5e
topology: v5e:2x2
jax: 0.10.0
libtpu: 0.0.40
codegen_flags: <defaults>
</compile_context>

<pallas_src>
import math

import jax
import jax.numpy as jnp
from jax.experimental import pallas as pl
from jax.experimental.pallas import tpu as pltpu


# ---------------------------------------------------------------------------
# Helpers
# ---------------------------------------------------------------------------

def _round_up(x, m):
    return (x + m - 1) // m * m


def _tpu_info():
    """(vmem bytes, #TensorCores) -- conservative v7x-like fallback."""
    vmem = 64 * 1024 * 1024
    try:
        vmem = int(pltpu.get_tpu_info().vmem_capacity_bytes)
    except Exception:
        pass
    num_tc = 2 if vmem <= 64 * 1024 * 1024 else 1
    return vmem, num_tc


# ---------------------------------------------------------------------------
# Conv 3x3 / stride 2 / pad 1  (use_conv=True)
# ---------------------------------------------------------------------------

def _conv3x3s2_kernel(xm_ref, xt_ref, w_ref, b_ref, o_ref, buf_ref):
    """One (cout-tile, image, row-block) grid step.

    xm_ref : (1, TH, 2*WQ, 2*CIN)   main row-pairs (bf16)
    xt_ref : (1, 1,  2*WQ, 2*CIN)   next row-pair (bottom halo)
    w_ref  : (9*CIN, TCO)           weights, K = 9*CIN (tap-major)
    b_ref  : (1, TCO)               bias (f32)
    o_ref  : (1, TH, WO, TCO)       output tile (bf16)
    buf_ref: (TH*WO, 9*CIN)         VMEM im2col scratch
    """
    th = xm_ref.shape[1]
    wq = xm_ref.shape[2] // 2
    cin_p = xm_ref.shape[3] // 2
    wo = o_ref.shape[2]
    tco = o_ref.shape[3]
    m = th * wo

    # In-kernel im2col straight from the pipelined blocks (no HBM patches and
    # no whole-block VMEM copy).  Tap t = kh*3 + kw lands at lane offset
    # t*cin_p; each slab is a static strided slice of the input block.
    for kh in range(3):
        ph, dr = kh % 2, kh // 2            # row parity / row-pair offset
        for kw in range(3):
            pw, dq = kw % 2, kw // 2        # col parity / col-pair offset
            t = kh * 3 + kw
            usl = pl.ds(ph * wq + dq, wo)   # (parity, col-pair) folded dim
            vsl = pl.ds(pw * cin_p, cin_p)
            ksl = pl.ds(t * cin_p, cin_p)
            if dr == 0:                     # kh = 0, 1: all rows from main
                buf_ref[:, ksl] = xm_ref[0, :, usl, vsl].reshape(m, cin_p)
            else:                           # kh = 2: main rows 1.. + halo row
                if th > 1:
                    buf_ref[pl.ds(0, (th - 1) * wo), ksl] = (
                        xm_ref[0, pl.ds(1, th - 1), usl, vsl]
                        .reshape((th - 1) * wo, cin_p))
                buf_ref[pl.ds((th - 1) * wo, wo), ksl] = xt_ref[0, 0, usl, vsl]

    # One K = 9*cin_p MXU matmul; f32 accumulation, bias add, bf16 store.
    out = jnp.dot(buf_ref[...], w_ref[...],
                  preferred_element_type=jnp.float32) + b_ref[...]
    o_ref[0] = out.reshape(th, wo, tco).astype(o_ref.dtype)


def conv_downsample(x_nchw, weight, bias, *, compute_dtype=jnp.bfloat16):
    """nn.Conv2d(C, C, kernel_size=3, stride=2, padding=1) forward (NCHW).

    Note: activations/weights are computed in bf16 with f32 accumulation
    (bf16-level accuracy vs. the f32 PyTorch reference).
    """
    N, C, H, W = x_nchw.shape
    out_dtype = x_nchw.dtype
    Ho = (H - 1) // 2 + 1
    Wo = (W - 1) // 2 + 1
    isz = jnp.dtype(compute_dtype).itemsize

    # TODO(synk): for C << 128 the channel padding wastes lanes / MXU K; a
    # small-C specialisation would fold the taps into K before padding.
    cin_p = _round_up(C, 128)
    cout_p = _round_up(C, 128)
    wq = Wo + 1

    cap, num_tc = _tpu_info()
    budget = (cap * 3) // 4

    # Output-channel tile: keep the FULL Cout weight resident whenever its
    # (double-buffered) size fits half the budget; otherwise the largest
    # 128-multiple divisor that fits.
    if 9 * cin_p * cout_p * isz * 2 <= budget // 2:
        tco = cout_p
    else:
        k128 = cout_p // 128
        tco = 128
        for d in range(k128, 0, -1):
            if k128 % d == 0 and 9 * cin_p * (128 * d) * isz * 2 <= budget // 2:
                tco = 128 * d
                break
    ncb = cout_p // tco

    def vmem_need(th):
        xm = th * 2 * wq * 2 * cin_p * isz * 2        # main rows, 2 buffers
        xt = 2 * wq * 2 * cin_p * isz * 2             # halo pair, 2 buffers
        wgt = (9 * cin_p * tco * isz + tco * 4) * 2   # weights + bias
        outb = th * Wo * tco * isz * 2                # bf16 output, 2 buffers
        buf = th * Wo * 9 * cin_p * isz               # im2col scratch
        tmp = th * Wo * tco * (4 + isz) + th * Wo * cin_p * isz * 2
        return xm + xt + wgt + outb + buf + tmp

    th = max(1, min(Ho, max(1, 1024 // max(Wo, 1))))  # target M = th*Wo ~ 1024
    while th > 1 and vmem_need(th) > budget:
        th -= 1
    if num_tc >= 2:
        # 2 TensorCores: keep >= 4 grid steps so both cores still pipeline.
        while th > 1 and N * ncb * pl.cdiv(Ho, th) < 4:
            th = max(1, th // 2)
    nrb = pl.cdiv(Ho, th)
    th = pl.cdiv(Ho, nrb)                              # balance row blocks
    nrb = pl.cdiv(Ho, th)

    ho_pad = nrb * th
    rp = ho_pad + 1                                    # row pairs incl. halo
    hp = 2 * rp
    wp = 2 * wq

    # NCHW -> NHWC, conv/alignment zero pad, channel pad to 128-multiple,
    # bf16 cast: one fused XLA pass.  The reshape into (row-pair, 2*wq,
    # 2*cin_p) is a free row-major regrouping.
    x = jnp.transpose(x_nchw, (0, 2, 3, 1)).astype(compute_dtype)
    xp = jnp.pad(x, ((0, 0), (1, hp - 1 - H), (1, wp - 1 - W), (0, cin_p - C)))
    xr = xp.reshape(N, rp, 2 * wq, 2 * cin_p)

    # Weights: OIHW -> (kh, kw, Cin, Cout), channel pad, flatten to K=9*cin_p.
    w = jnp.transpose(weight, (2, 3, 1, 0))
    w = jnp.pad(w, ((0, 0), (0, 0), (0, cin_p - C), (0, cout_p - C)))
    w = w.reshape(9 * cin_p, cout_p).astype(compute_dtype)
    b = jnp.pad(bias, (0, cout_p - C)).astype(jnp.float32).reshape(1, cout_p)

    def run(single_buffer_weights):
        wkw = {}
        if single_buffer_weights:
            # Weight/bias block index never changes (ncb == 1): single buffer.
            wkw = dict(pipeline_mode=pl.Buffered(1))
        return pl.pallas_call(
            _conv3x3s2_kernel,
            out_shape=jax.ShapeDtypeStruct((N, ho_pad, Wo, cout_p),
                                           compute_dtype),
            grid=(ncb, N, nrb),           # cout tile outermost -> weights stay
            in_specs=[
                pl.BlockSpec((1, th, 2 * wq, 2 * cin_p),
                             lambda j, n, r: (n, r, 0, 0)),
                pl.BlockSpec((1, 1, 2 * wq, 2 * cin_p),
                             lambda j, n, r: (n, (r + 1) * th, 0, 0)),
                pl.BlockSpec((9 * cin_p, tco), lambda j, n, r: (0, j), **wkw),
                pl.BlockSpec((1, tco), lambda j, n, r: (0, j), **wkw),
            ],
            out_specs=pl.BlockSpec((1, th, Wo, tco),
                                   lambda j, n, r: (n, r, 0, j)),
            scratch_shapes=[pltpu.VMEM((th * Wo, 9 * cin_p), compute_dtype)],
            compiler_params=pltpu.CompilerParams(
                dimension_semantics=("parallel", "parallel", "parallel"),
                vmem_limit_bytes=int(budget)),
        )(xr, xr, w, b)

    if ncb == 1:
        try:
            out = run(True)
        except Exception:       # pipeline_mode / Buffered(1) unsupported
            out = run(False)
    else:
        out = run(False)

    # Crop padding, back to NCHW, cast: slice + transpose + cast fuse in XLA.
    return jnp.transpose(out[:, :Ho, :, :C], (0, 3, 1, 2)).astype(out_dtype)


# ---------------------------------------------------------------------------
# 2x2 / stride-2 average pool  (use_conv=False)
# ---------------------------------------------------------------------------

def avgpool_downsample(x_nchw):
    """use_conv=False branch.

    # TODO(synk): the reference `nn.AvgPool2d(stride=2)` raises TypeError in
    # PyTorch (kernel_size is required); we implement the intended 2x2 /
    # stride-2 average pool.
    """
    N, C, H, W = x_nchw.shape
    Ho, Wo = H // 2, W // 2
    if Ho == 0 or Wo == 0:
        return jnp.zeros((N, C, Ho, Wo), x_nchw.dtype)
    if H != 2 * Ho or W != 2 * Wo:            # floor behaviour for odd sizes
        x_nchw = x_nchw[:, :, :2 * Ho, :2 * Wo]
    We = 2 * Wo

    M = N * C * Ho
    cap, num_tc = _tpu_info()

    # Fold g pooled rows into the lane dim so input/output blocks are lane
    # dense even for small Wo; g | M keeps the reshape a free regrouping.
    g = 1
    if Wo < 128 and M > 1:
        base = 128 // math.gcd(Wo, 128)
        cands = [4 * base, 2 * base, base]
        for cand in cands:
            if (cand <= M and M % cand == 0 and cand * 2 * We * 4 <= (1 << 20)
                    and M // cand >= 8):
                g = cand
                break
        if g == 1:
            for cand in cands:
                if cand <= M and M % cand == 0 and cand * 2 * We * 4 <= (1 << 20):
                    g = cand
                    break
        if g == 1:
            g = max(1, math.gcd(M, base))
    M2 = M // g

    a = x_nchw.reshape(M2, g * 2 * We)        # free row-major reshape

    itemsize = jnp.dtype(x_nchw.dtype).itemsize
    bytes_per_row = g * 2 * We * itemsize
    tm = min(M2, max(8, (2 << 20) // max(bytes_per_row, 1)))   # ~<=2 MiB blocks
    if num_tc >= 2:
        while tm > 8 and pl.cdiv(M2, tm) < 4:
            tm = max(8, tm // 2)
    if tm < M2:
        tm = max(8, (tm // 8) * 8)
    grid = (pl.cdiv(M2, tm),)

    out_shape = jax.ShapeDtypeStruct((M2, g * Wo), x_nchw.dtype)
    cparams = pltpu.CompilerParams(dimension_semantics=("parallel",),
                                   vmem_limit_bytes=int((cap * 3) // 4))
    in_spec = pl.BlockSpec((tm, g * 2 * We), lambda i: (i, 0))
    out_spec = pl.BlockSpec((tm, g * Wo), lambda i: (i, 0))

    def kernel(x_ref, o_ref):
        # Pure-VPU 2x2 mean: per group the two pooled input rows sit side by
        # side in the lane dim; stride-2 lane loads pick the four taps.
        for i in range(g):
            b0 = i * 2 * We
            x0 = x_ref[:, pl.ds(b0, Wo, stride=2)].astype(jnp.float32)
            x1 = x_ref[:, pl.ds(b0 + 1, Wo, stride=2)].astype(jnp.float32)
            x2 = x_ref[:, pl.ds(b0 + We, Wo, stride=2)].astype(jnp.float32)
            x3 = x_ref[:, pl.ds(b0 + We + 1, Wo, stride=2)].astype(jnp.float32)
            o_ref[:, pl.ds(i * Wo, Wo)] = (
                (x0 + x1 + x2 + x3) * 0.25).astype(o_ref.dtype)

    def kernel_matmul(x_ref, sel_ref, o_ref):
        # Fallback (exact, HIGHEST): one selector matmul does the 4-tap mean.
        o_ref[...] = jnp.dot(
            x_ref[...].astype(jnp.float32), sel_ref[...],
            preferred_element_type=jnp.float32,
            precision=jax.lax.Precision.HIGHEST).astype(o_ref.dtype)

    try:
        out = pl.pallas_call(
            kernel, out_shape=out_shape, grid=grid,
            in_specs=[in_spec], out_specs=out_spec,
            compiler_params=cparams)(a)
    except Exception:           # strided lane loads unsupported -> matmul path
        jj = jnp.arange(g * 2 * We)
        kk = jnp.arange(g * Wo)
        sel = jnp.where(
            (jj[:, None] // (2 * We) == kk[None, :] // Wo)
            & ((jj[:, None] % We) // 2 == kk[None, :] % Wo),
            0.25, 0.0).astype(jnp.float32)
        out = pl.pallas_call(
            kernel_matmul, out_shape=out_shape, grid=grid,
            in_specs=[in_spec,
                      pl.BlockSpec((g * 2 * We, g * Wo), lambda i: (0, 0))],
            out_specs=out_spec,
            compiler_params=cparams)(a, sel)

    return out.reshape(N, C, Ho, Wo)


# ---------------------------------------------------------------------------
# Demo / self-check
# ---------------------------------------------------------------------------

if __name__ == "__main__":
    key = jax.random.PRNGKey(0)
    kx, kw, kb = jax.random.split(key, 3)

    N, C, H, W = 2, 4, 16, 16
    x = jax.random.normal(kx, (N, C, H, W), dtype=jnp.float32)

    # Deterministic Conv2d(C, C, 3) params (PyTorch-style uniform init bounds).
    fan_in = C * 3 * 3
    bound = 1.0 / math.sqrt(fan_in)
    weight = jax.random.uniform(kw, (C, C, 3, 3), jnp.float32, -bound, bound)
    bias = jax.random.uniform(kb, (C,), jnp.float32, -bound, bound)

    # --- use_conv=True path ---
    y = jax.block_until_ready(conv_downsample(x, weight, bias))
    y_ref = jax.lax.conv_general_dilated(
        x, weight, window_strides=(2, 2), padding=((1, 1), (1, 1)),
        dimension_numbers=("NCHW", "OIHW", "NCHW"),
        precision=jax.lax.Precision.HIGHEST) + bias.reshape(1, C, 1, 1)
    assert y.shape == (N, C, H // 2, W // 2), y.shape
    err = float(jnp.max(jnp.abs(y - y_ref)))
    assert err < 5e-2, f"conv max err {err}"   # bf16 MXU inputs, f32 accum

    # --- use_conv=False path (intended avg-pool semantics) ---
    z = jax.block_until_ready(avgpool_downsample(x))
    z_ref = x.reshape(N, C, H // 2, 2, W // 2, 2).mean(axis=(3, 5))
    assert z.shape == (N, C, H // 2, W // 2), z.shape
    errz = float(jnp.max(jnp.abs(z - z_ref)))
    assert errz < 1e-5, f"avgpool max err {errz}"

    print("KERNEL_OK")
</pallas_src>

<mosaic_0001>
module attributes {stable_mosaic.version = 11 : i64} {
  func.func @_conv3x3s2_kernel(%arg0: i32, %arg1: i32, %arg2: i32, %arg3: memref<1x4x18x256xbf16, #tpu.memory_space<vmem>>, %arg4: memref<1x1x18x256xbf16, #tpu.memory_space<vmem>>, %arg5: memref<1152x128xbf16, #tpu.memory_space<vmem>>, %arg6: memref<1x128xf32, #tpu.memory_space<vmem>>, %arg7: memref<1x4x8x128xbf16, #tpu.memory_space<vmem>>, %arg8: memref<32x1152xbf16, #tpu.memory_space<vmem>>) attributes {dimension_semantics = [#tpu.dimension_semantics<parallel>, #tpu.dimension_semantics<parallel>, #tpu.dimension_semantics<parallel>], iteration_bounds = array<i64: 1, 2, 2>, scalar_prefetch = 0 : i64, scratch_operands = 1 : i64, tpu.core_type = #tpu.core_type<tc>, window_params = [{transform_indices = @transform_0, window_bounds = array<i64: 1, 4, 18, 256>}, {transform_indices = @transform_1, window_bounds = array<i64: 1, 1, 18, 256>}, {pipeline_mode = #tpu.pipeline_mode<synchronous>, transform_indices = @transform_2, window_bounds = array<i64: 1152, 128>}, {pipeline_mode = #tpu.pipeline_mode<synchronous>, transform_indices = @transform_3, window_bounds = array<i64: 1, 128>}, {transform_indices = @transform_4, window_bounds = array<i64: 1, 4, 8, 128>}]} {
    %c0 = arith.constant 0 : index
    %c0_0 = arith.constant 0 : index
    %c0_1 = arith.constant 0 : index
    %c0_2 = arith.constant 0 : index
    %0 = vector.load %arg3[%c0, %c0_0, %c0_1, %c0_2] : memref<1x4x18x256xbf16, #tpu.memory_space<vmem>>, vector<1x4x8x128xbf16>
    %1 = vector.shape_cast %0 : vector<1x4x8x128xbf16> to vector<4x8x128xbf16>
    %2 = vector.shape_cast %1 : vector<4x8x128xbf16> to vector<32x128xbf16>
    %c0_3 = arith.constant 0 : index
    %c0_4 = arith.constant 0 : index
    %3 = vector.load %arg8[%c0_3, %c0_4] : memref<32x1152xbf16, #tpu.memory_space<vmem>>, vector<32x128xbf16>
    tpu.vector_store %arg8[%c0_3, %c0_4], %2 {strides = array<i32>} : memref<32x1152xbf16, #tpu.memory_space<vmem>>, vector<32x128xbf16>,
    %c0_5 = arith.constant 0 : index
    %c0_6 = arith.constant 0 : index
    %c0_7 = arith.constant 0 : index
    %c128 = arith.constant 128 : index
    %4 = vector.load %arg3[%c0_5, %c0_6, %c0_7, %c128] : memref<1x4x18x256xbf16, #tpu.memory_space<vmem>>, vector<1x4x8x128xbf16>
    %5 = vector.shape_cast %4 : vector<1x4x8x128xbf16> to vector<4x8x128xbf16>
    %6 = vector.shape_cast %5 : vector<4x8x128xbf16> to vector<32x128xbf16>
    %c0_8 = arith.constant 0 : index
    %c128_9 = arith.constant 128 : index
    %7 = vector.load %arg8[%c0_8, %c128_9] : memref<32x1152xbf16, #tpu.memory_space<vmem>>, vector<32x128xbf16>
    tpu.vector_store %arg8[%c0_8, %c128_9], %6 {strides = array<i32>} : memref<32x1152xbf16, #tpu.memory_space<vmem>>, vector<32x128xbf16>,
    %c0_10 = arith.constant 0 : index
    %c0_11 = arith.constant 0 : index
    %c1 = arith.constant 1 : index
    %c0_12 = arith.constant 0 : index
    %8 = vector.load %arg3[%c0_10, %c0_11, %c1, %c0_12] : memref<1x4x18x256xbf16, #tpu.memory_space<vmem>>, vector<1x4x8x128xbf16>
    %9 = vector.shape_cast %8 : vector<1x4x8x128xbf16> to vector<4x8x128xbf16>
    %10 = vector.shape_cast %9 : vector<4x8x128xbf16> to vector<32x128xbf16>
    %c0_13 = arith.constant 0 : index
    %c256 = arith.constant 256 : index
    %11 = vector.load %arg8[%c0_13, %c256] : memref<32x1152xbf16, #tpu.memory_space<vmem>>, vector<32x128xbf16>
    tpu.vector_store %arg8[%c0_13, %c256], %10 {strides = array<i32>} : memref<32x1152xbf16, #tpu.memory_space<vmem>>, vector<32x128xbf16>,
    %c0_14 = arith.constant 0 : index
    %c0_15 = arith.constant 0 : index
    %c9 = arith.constant 9 : index
    %c0_16 = arith.constant 0 : index
    %12 = vector.load %arg3[%c0_14, %c0_15, %c9, %c0_16] : memref<1x4x18x256xbf16, #tpu.memory_space<vmem>>, vector<1x4x8x128xbf16>
    %13 = vector.shape_cast %12 : vector<1x4x8x128xbf16> to vector<4x8x128xbf16>
    %14 = vector.shape_cast %13 : vector<4x8x128xbf16> to vector<32x128xbf16>
    %c0_17 = arith.constant 0 : index
    %c384 = arith.constant 384 : index
    %15 = vector.load %arg8[%c0_17, %c384] : memref<32x1152xbf16, #tpu.memory_space<vmem>>, vector<32x128xbf16>
    tpu.vector_store %arg8[%c0_17, %c384], %14 {strides = array<i32>} : memref<32x1152xbf16, #tpu.memory_space<vmem>>, vector<32x128xbf16>,
    %c0_18 = arith.constant 0 : index
    %c0_19 = arith.constant 0 : index
    %c9_20 = arith.constant 9 : index
    %c128_21 = arith.constant 128 : index
    %16 = vector.load %arg3[%c0_18, %c0_19, %c9_20, %c128_21] : memref<1x4x18x256xbf16, #tpu.memory_space<vmem>>, vector<1x4x8x128xbf16>
    %17 = vector.shape_cast %16 : vector<1x4x8x128xbf16> to vector<4x8x128xbf16>
    %18 = vector.shape_cast %17 : vector<4x8x128xbf16> to vector<32x128xbf16>
    %c0_22 = arith.constant 0 : index
    %c512 = arith.constant 512 : index
    %19 = vector.load %arg8[%c0_22, %c512] : memref<32x1152xbf16, #tpu.memory_space<vmem>>, vector<32x128xbf16>
    tpu.vector_store %arg8[%c0_22, %c512], %18 {strides = array<i32>} : memref<32x1152xbf16, #tpu.memory_space<vmem>>, vector<32x128xbf16>,
    %c0_23 = arith.constant 0 : index
    %c0_24 = arith.constant 0 : index
    %c10 = arith.constant 10 : index
    %c0_25 = arith.constant 0 : index
    %20 = vector.load %arg3[%c0_23, %c0_24, %c10, %c0_25] : memref<1x4x18x256xbf16, #tpu.memory_space<vmem>>, vector<1x4x8x128xbf16>
    %21 = vector.shape_cast %20 : vector<1x4x8x128xbf16> to vector<4x8x128xbf16>
    %22 = vector.shape_cast %21 : vector<4x8x128xbf16> to vector<32x128xbf16>
    %c0_26 = arith.constant 0 : index
    %c640 = arith.constant 640 : index
    %23 = vector.load %arg8[%c0_26, %c640] : memref<32x1152xbf16, #tpu.memory_space<vmem>>, vector<32x128xbf16>
    tpu.vector_store %arg8[%c0_26, %c640], %22 {strides = array<i32>} : memref<32x1152xbf16, #tpu.memory_space<vmem>>, vector<32x128xbf16>,
    %c0_27 = arith.constant 0 : index
    %c1_28 = arith.constant 1 : index
    %c0_29 = arith.constant 0 : index
    %c0_30 = arith.constant 0 : index
    %24 = vector.load %arg3[%c0_27, %c1_28, %c0_29, %c0_30] : memref<1x4x18x256xbf16, #tpu.memory_space<vmem>>, vector<1x3x8x128xbf16>
    %25 = vector.shape_cast %24 : vector<1x3x8x128xbf16> to vector<3x8x128xbf16>
    %26 = vector.shape_cast %25 : vector<3x8x128xbf16> to vector<24x128xbf16>
    %c0_31 = arith.constant 0 : index
    %c768 = arith.constant 768 : index
    %27 = vector.load %arg8[%c0_31, %c768] : memref<32x1152xbf16, #tpu.memory_space<vmem>>, vector<24x128xbf16>
    tpu.vector_store %arg8[%c0_31, %c768], %26 {strides = array<i32>} : memref<32x1152xbf16, #tpu.memory_space<vmem>>, vector<24x128xbf16>,
    %c0_32 = arith.constant 0 : index
    %c0_33 = arith.constant 0 : index
    %c0_34 = arith.constant 0 : index
    %c0_35 = arith.constant 0 : index
    %28 = vector.load %arg4[%c0_32, %c0_33, %c0_34, %c0_35] : memref<1x1x18x256xbf16, #tpu.memory_space<vmem>>, vector<1x1x8x128xbf16>
    %29 = vector.shape_cast %28 : vector<1x1x8x128xbf16> to vector<8x128xbf16>
    %c24 = arith.constant 24 : index
    %c768_36 = arith.constant 768 : index
    %30 = vector.load %arg8[%c24, %c768_36] : memref<32x1152xbf16, #tpu.memory_space<vmem>>, vector<8x128xbf16>
    tpu.vector_store %arg8[%c24, %c768_36], %29 {strides = array<i32>} : memref<32x1152xbf16, #tpu.memory_space<vmem>>, vector<8x128xbf16>,
    %c0_37 = arith.constant 0 : index
    %c1_38 = arith.constant 1 : index
    %c0_39 = arith.constant 0 : index
    %c128_40 = arith.constant 128 : index
    %31 = vector.load %arg3[%c0_37, %c1_38, %c0_39, %c128_40] : memref<1x4x18x256xbf16, #tpu.memory_space<vmem>>, vector<1x3x8x128xbf16>
    %32 = vector.shape_cast %31 : vector<1x3x8x128xbf16> to vector<3x8x128xbf16>
    %33 = vector.shape_cast %32 : vector<3x8x128xbf16> to vector<24x128xbf16>
    %c0_41 = arith.constant 0 : index
    %c896 = arith.constant 896 : index
    %34 = vector.load %arg8[%c0_41, %c896] : memref<32x1152xbf16, #tpu.memory_space<vmem>>, vector<24x128xbf16>
    tpu.vector_store %arg8[%c0_41, %c896], %33 {strides = array<i32>} : memref<32x1152xbf16, #tpu.memory_space<vmem>>, vector<24x128xbf16>,
    %c0_42 = arith.constant 0 : index
    %c0_43 = arith.constant 0 : index
    %c0_44 = arith.constant 0 : index
    %c128_45 = arith.constant 128 : index
    %35 = vector.load %arg4[%c0_42, %c0_43, %c0_44, %c128_45] : memref<1x1x18x256xbf16, #tpu.memory_space<vmem>>, vector<1x1x8x128xbf16>
    %36 = vector.shape_cast %35 : vector<1x1x8x128xbf16> to vector<8x128xbf16>
    %c24_46 = arith.constant 24 : index
    %c896_47 = arith.constant 896 : index
    %37 = vector.load %arg8[%c24_46, %c896_47] : memref<32x1152xbf16, #tpu.memory_space<vmem>>, vector<8x128xbf16>
    tpu.vector_store %arg8[%c24_46, %c896_47], %36 {strides = array<i32>} : memref<32x1152xbf16, #tpu.memory_space<vmem>>, vector<8x128xbf16>,
    %c0_48 = arith.constant 0 : index
    %c1_49 = arith.constant 1 : index
    %c1_50 = arith.constant 1 : index
    %c0_51 = arith.constant 0 : index
    %38 = vector.load %arg3[%c0_48, %c1_49, %c1_50, %c0_51] : memref<1x4x18x256xbf16, #tpu.memory_space<vmem>>, vector<1x3x8x128xbf16>
    %39 = vector.shape_cast %38 : vector<1x3x8x128xbf16> to vector<3x8x128xbf16>
    %40 = vector.shape_cast %39 : vector<3x8x128xbf16> to vector<24x128xbf16>
    %c0_52 = arith.constant 0 : index
    %c1024 = arith.constant 1024 : index
    %41 = vector.load %arg8[%c0_52, %c1024] : memref<32x1152xbf16, #tpu.memory_space<vmem>>, vector<24x128xbf16>
    tpu.vector_store %arg8[%c0_52, %c1024], %40 {strides = array<i32>} : memref<32x1152xbf16, #tpu.memory_space<vmem>>, vector<24x128xbf16>,
    %c0_53 = arith.constant 0 : index
    %c0_54 = arith.constant 0 : index
    %c1_55 = arith.constant 1 : index
    %c0_56 = arith.constant 0 : index
    %42 = vector.load %arg4[%c0_53, %c0_54, %c1_55, %c0_56] : memref<1x1x18x256xbf16, #tpu.memory_space<vmem>>, vector<1x1x8x128xbf16>
    %43 = vector.shape_cast %42 : vector<1x1x8x128xbf16> to vector<8x128xbf16>
    %c24_57 = arith.constant 24 : index
    %c1024_58 = arith.constant 1024 : index
    %44 = vector.load %arg8[%c24_57, %c1024_58] : memref<32x1152xbf16, #tpu.memory_space<vmem>>, vector<8x128xbf16>
    tpu.vector_store %arg8[%c24_57, %c1024_58], %43 {strides = array<i32>} : memref<32x1152xbf16, #tpu.memory_space<vmem>>, vector<8x128xbf16>,
    %c0_59 = arith.constant 0 : index
    %c0_60 = arith.constant 0 : index
    %45 = vector.load %arg8[%c0_59, %c0_60] : memref<32x1152xbf16, #tpu.memory_space<vmem>>, vector<32x1152xbf16>
    %c0_61 = arith.constant 0 : index
    %c0_62 = arith.constant 0 : index
    %46 = vector.load %arg5[%c0_61, %c0_62] : memref<1152x128xbf16, #tpu.memory_space<vmem>>, vector<1152x128xbf16>
    %cst = arith.constant dense<0.000000e+00> : vector<32x128xf32>
    %47 = tpu.matmul %45, %46, %cst {dimension_numbers = #tpu.dot_dimension_numbers<[1], [0], [0], [1], [0, 0, 1, 1], [], []>} : vector<32x1152xbf16>, vector<1152x128xbf16>, vector<32x128xf32> -> vector<32x128xf32>
    %c0_63 = arith.constant 0 : index
    %c0_64 = arith.constant 0 : index
    %48 = vector.load %arg6[%c0_63, %c0_64] : memref<1x128xf32, #tpu.memory_space<vmem>>, vector<1x128xf32>
    %49 = vector.broadcast %48 : vector<1x128xf32> to vector<32x128xf32>
    %50 = arith.addf %47, %49 : vector<32x128xf32>
    %51 = vector.shape_cast %50 : vector<32x128xf32> to vector<4x8x128xf32>
    %52 = arith.truncf %51 : vector<4x8x128xf32> to vector<4x8x128xbf16>
    %c0_65 = arith.constant 0 : index
    %c0_66 = arith.constant 0 : index
    %c0_67 = arith.constant 0 : index
    %c0_68 = arith.constant 0 : index
    %53 = vector.load %arg7[%c0_65, %c0_66, %c0_67, %c0_68] : memref<1x4x8x128xbf16, #tpu.memory_space<vmem>>, vector<1x4x8x128xbf16>
    %54 = vector.shape_cast %53 : vector<1x4x8x128xbf16> to vector<4x8x128xbf16>
    %55 = vector.shape_cast %52 : vector<4x8x128xbf16> to vector<1x4x8x128xbf16>
    tpu.vector_store %arg7[%c0_65, %c0_66, %c0_67, %c0_68], %55 {strides = array<i32>} : memref<1x4x8x128xbf16, #tpu.memory_space<vmem>>, vector<1x4x8x128xbf16>,
    return
  }
  func.func @transform_0(%arg0: i32, %arg1: i32, %arg2: i32) -> (i32, i32, i32, i32) {
    %c0_i32 = arith.constant 0 : i32
    %c0_i32_0 = arith.constant 0 : i32
    %c0_i32_1 = arith.constant 0 : i32
    return %arg1, %arg2, %c0_i32, %c0_i32_0 : i32, i32, i32, i32
  }
  func.func @transform_1(%arg0: i32, %arg1: i32, %arg2: i32) -> (i32, i32, i32, i32) {
    %c1_i32 = arith.constant 1 : i32
    %0 = arith.addi %arg2, %c1_i32 : i32
    %c4_i32 = arith.constant 4 : i32
    %1 = arith.muli %0, %c4_i32 : i32
    %c0_i32 = arith.constant 0 : i32
    %c0_i32_0 = arith.constant 0 : i32
    %c0_i32_1 = arith.constant 0 : i32
    return %arg1, %1, %c0_i32, %c0_i32_0 : i32, i32, i32, i32
  }
  func.func @transform_2(%arg0: i32, %arg1: i32, %arg2: i32) -> (i32, i32) {
    %c0_i32 = arith.constant 0 : i32
    %c0_i32_0 = arith.constant 0 : i32
    return %c0_i32, %arg0 : i32, i32
  }
  func.func @transform_3(%arg0: i32, %arg1: i32, %arg2: i32) -> (i32, i32) {
    %c0_i32 = arith.constant 0 : i32
    %c0_i32_0 = arith.constant 0 : i32
    return %c0_i32, %arg0 : i32, i32
  }
  func.func @transform_4(%arg0: i32, %arg1: i32, %arg2: i32) -> (i32, i32, i32, i32) {
    %c0_i32 = arith.constant 0 : i32
    %c0_i32_0 = arith.constant 0 : i32
    return %arg1, %arg2, %c0_i32, %arg0 : i32, i32, i32, i32
  }
}

module attributes {stable_mosaic.version = 11 : i64} {
  func.func @_conv3x3s2_kernel(%arg0: i32, %arg1: i32, %arg2: i32, %arg3: memref<1x4x18x256xbf16, #tpu.memory_space<vmem>>, %arg4: memref<1x1x18x256xbf16, #tpu.memory_space<vmem>>, %arg5: memref<1152x128xbf16, #tpu.memory_space<vmem>>, %arg6: memref<1x128xf32, #tpu.memory_space<vmem>>, %arg7: memref<1x4x8x128xbf16, #tpu.memory_space<vmem>>, %arg8: memref<32x1152xbf16, #tpu.memory_space<vmem>>) attributes {dimension_semantics = [#tpu.dimension_semantics<parallel>, #tpu.dimension_semantics<parallel>, #tpu.dimension_semantics<parallel>], iteration_bounds = array<i64: 1, 2, 2>, scalar_prefetch = 0 : i64, scratch_operands = 1 : i64, tpu.core_type = #tpu.core_type<tc>, window_params = [{transform_indices = @transform_0, window_bounds = array<i64: 1, 4, 18, 256>}, {transform_indices = @transform_1, window_bounds = array<i64: 1, 1, 18, 256>}, {transform_indices = @transform_2, window_bounds = array<i64: 1152, 128>}, {transform_indices = @transform_3, window_bounds = array<i64: 1, 128>}, {transform_indices = @transform_4, window_bounds = array<i64: 1, 4, 8, 128>}]} {
    %c0 = arith.constant 0 : index
    %c0_0 = arith.constant 0 : index
    %c0_1 = arith.constant 0 : index
    %c0_2 = arith.constant 0 : index
    %0 = vector.load %arg3[%c0, %c0_0, %c0_1, %c0_2] : memref<1x4x18x256xbf16, #tpu.memory_space<vmem>>, vector<1x4x8x128xbf16>
    %1 = vector.shape_cast %0 : vector<1x4x8x128xbf16> to vector<4x8x128xbf16>
    %2 = vector.shape_cast %1 : vector<4x8x128xbf16> to vector<32x128xbf16>
    %c0_3 = arith.constant 0 : index
    %c0_4 = arith.constant 0 : index
    %3 = vector.load %arg8[%c0_3, %c0_4] : memref<32x1152xbf16, #tpu.memory_space<vmem>>, vector<32x128xbf16>
    tpu.vector_store %arg8[%c0_3, %c0_4], %2 {strides = array<i32>} : memref<32x1152xbf16, #tpu.memory_space<vmem>>, vector<32x128xbf16>,
    %c0_5 = arith.constant 0 : index
    %c0_6 = arith.constant 0 : index
    %c0_7 = arith.constant 0 : index
    %c128 = arith.constant 128 : index
    %4 = vector.load %arg3[%c0_5, %c0_6, %c0_7, %c128] : memref<1x4x18x256xbf16, #tpu.memory_space<vmem>>, vector<1x4x8x128xbf16>
    %5 = vector.shape_cast %4 : vector<1x4x8x128xbf16> to vector<4x8x128xbf16>
    %6 = vector.shape_cast %5 : vector<4x8x128xbf16> to vector<32x128xbf16>
    %c0_8 = arith.constant 0 : index
    %c128_9 = arith.constant 128 : index
    %7 = vector.load %arg8[%c0_8, %c128_9] : memref<32x1152xbf16, #tpu.memory_space<vmem>>, vector<32x128xbf16>
    tpu.vector_store %arg8[%c0_8, %c128_9], %6 {strides = array<i32>} : memref<32x1152xbf16, #tpu.memory_space<vmem>>, vector<32x128xbf16>,
    %c0_10 = arith.constant 0 : index
    %c0_11 = arith.constant 0 : index
    %c1 = arith.constant 1 : index
    %c0_12 = arith.constant 0 : index
    %8 = vector.load %arg3[%c0_10, %c0_11, %c1, %c0_12] : memref<1x4x18x256xbf16, #tpu.memory_space<vmem>>, vector<1x4x8x128xbf16>
    %9 = vector.shape_cast %8 : vector<1x4x8x128xbf16> to vector<4x8x128xbf16>
    %10 = vector.shape_cast %9 : vector<4x8x128xbf16> to vector<32x128xbf16>
    %c0_13 = arith.constant 0 : index
    %c256 = arith.constant 256 : index
    %11 = vector.load %arg8[%c0_13, %c256] : memref<32x1152xbf16, #tpu.memory_space<vmem>>, vector<32x128xbf16>
    tpu.vector_store %arg8[%c0_13, %c256], %10 {strides = array<i32>} : memref<32x1152xbf16, #tpu.memory_space<vmem>>, vector<32x128xbf16>,
    %c0_14 = arith.constant 0 : index
    %c0_15 = arith.constant 0 : index
    %c9 = arith.constant 9 : index
    %c0_16 = arith.constant 0 : index
    %12 = vector.load %arg3[%c0_14, %c0_15, %c9, %c0_16] : memref<1x4x18x256xbf16, #tpu.memory_space<vmem>>, vector<1x4x8x128xbf16>
    %13 = vector.shape_cast %12 : vector<1x4x8x128xbf16> to vector<4x8x128xbf16>
    %14 = vector.shape_cast %13 : vector<4x8x128xbf16> to vector<32x128xbf16>
    %c0_17 = arith.constant 0 : index
    %c384 = arith.constant 384 : index
    %15 = vector.load %arg8[%c0_17, %c384] : memref<32x1152xbf16, #tpu.memory_space<vmem>>, vector<32x128xbf16>
    tpu.vector_store %arg8[%c0_17, %c384], %14 {strides = array<i32>} : memref<32x1152xbf16, #tpu.memory_space<vmem>>, vector<32x128xbf16>,
    %c0_18 = arith.constant 0 : index
    %c0_19 = arith.constant 0 : index
    %c9_20 = arith.constant 9 : index
    %c128_21 = arith.constant 128 : index
    %16 = vector.load %arg3[%c0_18, %c0_19, %c9_20, %c128_21] : memref<1x4x18x256xbf16, #tpu.memory_space<vmem>>, vector<1x4x8x128xbf16>
    %17 = vector.shape_cast %16 : vector<1x4x8x128xbf16> to vector<4x8x128xbf16>
    %18 = vector.shape_cast %17 : vector<4x8x128xbf16> to vector<32x128xbf16>
    %c0_22 = arith.constant 0 : index
    %c512 = arith.constant 512 : index
    %19 = vector.load %arg8[%c0_22, %c512] : memref<32x1152xbf16, #tpu.memory_space<vmem>>, vector<32x128xbf16>
    tpu.vector_store %arg8[%c0_22, %c512], %18 {strides = array<i32>} : memref<32x1152xbf16, #tpu.memory_space<vmem>>, vector<32x128xbf16>,
    %c0_23 = arith.constant 0 : index
    %c0_24 = arith.constant 0 : index
    %c10 = arith.constant 10 : index
    %c0_25 = arith.constant 0 : index
    %20 = vector.load %arg3[%c0_23, %c0_24, %c10, %c0_25] : memref<1x4x18x256xbf16, #tpu.memory_space<vmem>>, vector<1x4x8x128xbf16>
    %21 = vector.shape_cast %20 : vector<1x4x8x128xbf16> to vector<4x8x128xbf16>
    %22 = vector.shape_cast %21 : vector<4x8x128xbf16> to vector<32x128xbf16>
    %c0_26 = arith.constant 0 : index
    %c640 = arith.constant 640 : index
    %23 = vector.load %arg8[%c0_26, %c640] : memref<32x1152xbf16, #tpu.memory_space<vmem>>, vector<32x128xbf16>
    tpu.vector_store %arg8[%c0_26, %c640], %22 {strides = array<i32>} : memref<32x1152xbf16, #tpu.memory_space<vmem>>, vector<32x128xbf16>,
    %c0_27 = arith.constant 0 : index
    %c1_28 = arith.constant 1 : index
    %c0_29 = arith.constant 0 : index
    %c0_30 = arith.constant 0 : index
    %24 = vector.load %arg3[%c0_27, %c1_28, %c0_29, %c0_30] : memref<1x4x18x256xbf16, #tpu.memory_space<vmem>>, vector<1x3x8x128xbf16>
    %25 = vector.shape_cast %24 : vector<1x3x8x128xbf16> to vector<3x8x128xbf16>
    %26 = vector.shape_cast %25 : vector<3x8x128xbf16> to vector<24x128xbf16>
    %c0_31 = arith.constant 0 : index
    %c768 = arith.constant 768 : index
    %27 = vector.load %arg8[%c0_31, %c768] : memref<32x1152xbf16, #tpu.memory_space<vmem>>, vector<24x128xbf16>
    tpu.vector_store %arg8[%c0_31, %c768], %26 {strides = array<i32>} : memref<32x1152xbf16, #tpu.memory_space<vmem>>, vector<24x128xbf16>,
    %c0_32 = arith.constant 0 : index
    %c0_33 = arith.constant 0 : index
    %c0_34 = arith.constant 0 : index
    %c0_35 = arith.constant 0 : index
    %28 = vector.load %arg4[%c0_32, %c0_33, %c0_34, %c0_35] : memref<1x1x18x256xbf16, #tpu.memory_space<vmem>>, vector<1x1x8x128xbf16>
    %29 = vector.shape_cast %28 : vector<1x1x8x128xbf16> to vector<8x128xbf16>
    %c24 = arith.constant 24 : index
    %c768_36 = arith.constant 768 : index
    %30 = vector.load %arg8[%c24, %c768_36] : memref<32x1152xbf16, #tpu.memory_space<vmem>>, vector<8x128xbf16>
    tpu.vector_store %arg8[%c24, %c768_36], %29 {strides = array<i32>} : memref<32x1152xbf16, #tpu.memory_space<vmem>>, vector<8x128xbf16>,
    %c0_37 = arith.constant 0 : index
    %c1_38 = arith.constant 1 : index
    %c0_39 = arith.constant 0 : index
    %c128_40 = arith.constant 128 : index
    %31 = vector.load %arg3[%c0_37, %c1_38, %c0_39, %c128_40] : memref<1x4x18x256xbf16, #tpu.memory_space<vmem>>, vector<1x3x8x128xbf16>
    %32 = vector.shape_cast %31 : vector<1x3x8x128xbf16> to vector<3x8x128xbf16>
    %33 = vector.shape_cast %32 : vector<3x8x128xbf16> to vector<24x128xbf16>
    %c0_41 = arith.constant 0 : index
    %c896 = arith.constant 896 : index
    %34 = vector.load %arg8[%c0_41, %c896] : memref<32x1152xbf16, #tpu.memory_space<vmem>>, vector<24x128xbf16>
    tpu.vector_store %arg8[%c0_41, %c896], %33 {strides = array<i32>} : memref<32x1152xbf16, #tpu.memory_space<vmem>>, vector<24x128xbf16>,
    %c0_42 = arith.constant 0 : index
    %c0_43 = arith.constant 0 : index
    %c0_44 = arith.constant 0 : index
    %c128_45 = arith.constant 128 : index
    %35 = vector.load %arg4[%c0_42, %c0_43, %c0_44, %c128_45] : memref<1x1x18x256xbf16, #tpu.memory_space<vmem>>, vector<1x1x8x128xbf16>
    %36 = vector.shape_cast %35 : vector<1x1x8x128xbf16> to vector<8x128xbf16>
    %c24_46 = arith.constant 24 : index
    %c896_47 = arith.constant 896 : index
    %37 = vector.load %arg8[%c24_46, %c896_47] : memref<32x1152xbf16, #tpu.memory_space<vmem>>, vector<8x128xbf16>
    tpu.vector_store %arg8[%c24_46, %c896_47], %36 {strides = array<i32>} : memref<32x1152xbf16, #tpu.memory_space<vmem>>, vector<8x128xbf16>,
    %c0_48 = arith.constant 0 : index
    %c1_49 = arith.constant 1 : index
    %c1_50 = arith.constant 1 : index
    %c0_51 = arith.constant 0 : index
    %38 = vector.load %arg3[%c0_48, %c1_49, %c1_50, %c0_51] : memref<1x4x18x256xbf16, #tpu.memory_space<vmem>>, vector<1x3x8x128xbf16>
    %39 = vector.shape_cast %38 : vector<1x3x8x128xbf16> to vector<3x8x128xbf16>
    %40 = vector.shape_cast %39 : vector<3x8x128xbf16> to vector<24x128xbf16>
    %c0_52 = arith.constant 0 : index
    %c1024 = arith.constant 1024 : index
    %41 = vector.load %arg8[%c0_52, %c1024] : memref<32x1152xbf16, #tpu.memory_space<vmem>>, vector<24x128xbf16>
    tpu.vector_store %arg8[%c0_52, %c1024], %40 {strides = array<i32>} : memref<32x1152xbf16, #tpu.memory_space<vmem>>, vector<24x128xbf16>,
    %c0_53 = arith.constant 0 : index
    %c0_54 = arith.constant 0 : index
    %c1_55 = arith.constant 1 : index
    %c0_56 = arith.constant 0 : index
    %42 = vector.load %arg4[%c0_53, %c0_54, %c1_55, %c0_56] : memref<1x1x18x256xbf16, #tpu.memory_space<vmem>>, vector<1x1x8x128xbf16>
    %43 = vector.shape_cast %42 : vector<1x1x8x128xbf16> to vector<8x128xbf16>
    %c24_57 = arith.constant 24 : index
    %c1024_58 = arith.constant 1024 : index
    %44 = vector.load %arg8[%c24_57, %c1024_58] : memref<32x1152xbf16, #tpu.memory_space<vmem>>, vector<8x128xbf16>
    tpu.vector_store %arg8[%c24_57, %c1024_58], %43 {strides = array<i32>} : memref<32x1152xbf16, #tpu.memory_space<vmem>>, vector<8x128xbf16>,
    %c0_59 = arith.constant 0 : index
    %c0_60 = arith.constant 0 : index
    %45 = vector.load %arg8[%c0_59, %c0_60] : memref<32x1152xbf16, #tpu.memory_space<vmem>>, vector<32x1152xbf16>
    %c0_61 = arith.constant 0 : index
    %c0_62 = arith.constant 0 : index
    %46 = vector.load %arg5[%c0_61, %c0_62] : memref<1152x128xbf16, #tpu.memory_space<vmem>>, vector<1152x128xbf16>
    %cst = arith.constant dense<0.000000e+00> : vector<32x128xf32>
    %47 = tpu.matmul %45, %46, %cst {dimension_numbers = #tpu.dot_dimension_numbers<[1], [0], [0], [1], [0, 0, 1, 1], [], []>} : vector<32x1152xbf16>, vector<1152x128xbf16>, vector<32x128xf32> -> vector<32x128xf32>
    %c0_63 = arith.constant 0 : index
    %c0_64 = arith.constant 0 : index
    %48 = vector.load %arg6[%c0_63, %c0_64] : memref<1x128xf32, #tpu.memory_space<vmem>>, vector<1x128xf32>
    %49 = vector.broadcast %48 : vector<1x128xf32> to vector<32x128xf32>
    %50 = arith.addf %47, %49 : vector<32x128xf32>
    %51 = vector.shape_cast %50 : vector<32x128xf32> to vector<4x8x128xf32>
    %52 = arith.truncf %51 : vector<4x8x128xf32> to vector<4x8x128xbf16>
    %c0_65 = arith.constant 0 : index
    %c0_66 = arith.constant 0 : index
    %c0_67 = arith.constant 0 : index
    %c0_68 = arith.constant 0 : index
    %53 = vector.load %arg7[%c0_65, %c0_66, %c0_67, %c0_68] : memref<1x4x8x128xbf16, #tpu.memory_space<vmem>>, vector<1x4x8x128xbf16>
    %54 = vector.shape_cast %53 : vector<1x4x8x128xbf16> to vector<4x8x128xbf16>
    %55 = vector.shape_cast %52 : vector<4x8x128xbf16> to vector<1x4x8x128xbf16>
    tpu.vector_store %arg7[%c0_65, %c0_66, %c0_67, %c0_68], %55 {strides = array<i32>} : memref<1x4x8x128xbf16, #tpu.memory_space<vmem>>, vector<1x4x8x128xbf16>,
    return
  }
  func.func @transform_0(%arg0: i32, %arg1: i32, %arg2: i32) -> (i32, i32, i32, i32) {
    %c0_i32 = arith.constant 0 : i32
    %c0_i32_0 = arith.constant 0 : i32
    %c0_i32_1 = arith.constant 0 : i32
    return %arg1, %arg2, %c0_i32, %c0_i32_0 : i32, i32, i32, i32
  }
  func.func @transform_1(%arg0: i32, %arg1: i32, %arg2: i32) -> (i32, i32, i32, i32) {
    %c1_i32 = arith.constant 1 : i32
    %0 = arith.addi %arg2, %c1_i32 : i32
    %c4_i32 = arith.constant 4 : i32
    %1 = arith.muli %0, %c4_i32 : i32
    %c0_i32 = arith.constant 0 : i32
    %c0_i32_0 = arith.constant 0 : i32
    %c0_i32_1 = arith.constant 0 : i32
    return %arg1, %1, %c0_i32, %c0_i32_0 : i32, i32, i32, i32
  }
  func.func @transform_2(%arg0: i32, %arg1: i32, %arg2: i32) -> (i32, i32) {
    %c0_i32 = arith.constant 0 : i32
    %c0_i32_0 = arith.constant 0 : i32
    return %c0_i32, %arg0 : i32, i32
  }
  func.func @transform_3(%arg0: i32, %arg1: i32, %arg2: i32) -> (i32, i32) {
    %c0_i32 = arith.constant 0 : i32
    %c0_i32_0 = arith.constant 0 : i32
    return %c0_i32, %arg0 : i32, i32
  }
  func.func @transform_4(%arg0: i32, %arg1: i32, %arg2: i32) -> (i32, i32, i32, i32) {
    %c0_i32 = arith.constant 0 : i32
    %c0_i32_0 = arith.constant 0 : i32
    return %arg1, %arg2, %c0_i32, %arg0 : i32, i32, i32, i32
  }
}

</mosaic_0001>

<llo_original>
// kernel: tpu_custom_call.1
$region0: #{tpu_custom_call.1}
  #allocation0 [shape = 'u32[]', space=smem, size = 0x4, offset = 0x4, fixed_abs, tag = 'smem constant byte address 0x4 - core index']
  #allocation1 [shape = 'u32[72,128]{1,0:T(1,128)}', space=vmem, size = 0x9000, scoped, tag = 'internal scratch']
  #allocation2 [shape = 'bf16[32,1152]{1,0:T(8,128)(2,1)}', space=vmem, size = 0x12000, scoped, tag = 'scratch operand']
  %s0 = inlined_call_operand.vmem [shape: bf16[2,9,18,256], index: 0, kind: input, shape index: {}]
  %s1 = inlined_call_operand.vmem [shape: bf16[2,9,18,256], index: 1, kind: input, shape index: {}]
  %s2 = inlined_call_operand.vmem [shape: bf16[1152,128], index: 2, kind: input, shape index: {}]
  %s3 = inlined_call_operand.vmem [shape: f32[1,128], index: 3, kind: input, shape index: {}]
  %s4 = inlined_call_operand.hbm [shape: bf16[2,8,8,128], index: 4, kind: output, shape index: {}]
  %s5 = sld [smem:[#allocation0]]
  $region49: #{tpu_custom_call.1} parent=0
    _
  %s7 = ssub.s32 1, %s5
  %s8 = scalar_select 0, %s7, %s5
  $region1: #{tpu_custom_call.1} parent=0
    #allocation3 [shape = 'u8[16384]{0}', space=vmem, size = 0x4000, scoped, tag = 'output window, operand 0']
    #allocation4 [shape = 's32[2]{0}', space=sflag, size = 0x8, scoped, tag = 'scoped memory for tpu_custom_call.1']
    %9 = vsyncpa [#allocation4], 0
    %s10 = scalar_lea.sflag [#allocation4], 1
    %11 = vsyncpa %s10, 0
    loop: start=0, step=1, limit=6
    $region2: #{tpu_custom_call.1} parent=1 // loop_pre_header
      _
    $region3: #{tpu_custom_call.1} parent=1 // loop_header
      %s13 = sphi 0, %s17
      %p14 = scmp.ge.s32.totalorder %s13, 6
      %s20 = sphi 0, %s39
      %s21 = sphi 0, %s35
      %s22 = sphi 0, %s31
      %s23 = sphi 0, %s20
      %s24 = sphi 0, %s21
      %s25 = sphi 0, %s22
      %s26 = sphi 0, %s23
      %s27 = sphi 0, %s24
      %s28 = sphi 0, %s25
      %s44 = sphi 0, %s46
      %s47 = sphi 0, %s44
      %s48 = sphi 0, %s47
      %s64 = sphi 0, %s48
      %s76 = sphi 0, %s78
      %s79 = sphi 0, %s76
      %s80 = sphi 0, %s79
      %s96 = sphi 0, %s80
      %s102 = sphi 0, %s104
      %s105 = sphi 0, %s102
      %s106 = sphi 0, %s105
      %s122 = sphi 0, %s106
      %s128 = sphi 0, %s130
      %s131 = sphi 0, %s128
      %s132 = sphi 0, %s131
      %s148 = sphi 0, %s132
      %s158 = sphi 0, %s160
      %s161 = sphi 0, %s158
      %s162 = sphi 0, %s161
      %s178 = sphi 0, %s162
    $region4: #{tpu_custom_call.1} parent=1 // loop_header_branch
      %16 = sbr.rel (%p14) target = $region8
    $region5: #{tpu_custom_call.1} parent=1 // loop_body
      %s18 = ssub.s32 %s13, 1
      %s19 = ssub.s32 %s13, 2
      %s29 = sadd.s32 1, %s22
      %p30 = scmp.ge.s32.totalorder %s29, 2
      %s31 = scalar_select %p30, 0, %s29
      %s32 = sadd.s32 1, %s21
      %s33 = scalar_select %p30, %s32, %s21
      %p34 = scmp.ge.s32.totalorder %s33, 2
      %s35 = scalar_select %p34, 0, %s33
      %s36 = sadd.s32 1, %s20
      %s37 = scalar_select %p34, %s36, %s20
      %p38 = scmp.ge.s32.totalorder %s37, 1
      %s39 = scalar_select %p38, 0, %s37
      %s40 = ssub.s32 %s21, %s35
      %s41 = ssub.s32 %s22, %s31
      %s42 = sor.u32 %s40, %s41
      %p43 = scmp.eq.s32.totalorder %s42, 0
      %s45 = sadd.s32 %s44, 1
      %s46 = scalar_select %p43, %s44, %s45
      %p49 = pneg %p43
      %p50 = scmp.eq.s32.totalorder %s13, 3
      %p51 = por %p49, %p50
      %p52 = scmp.ne.s32.totalorder %s44, %s47
      %p53 = scmp.eq.s32.totalorder %s13, 0
      %p54 = por %p52, %p53
      %p55 = scmp.ne.s32.totalorder %s44, %s47
      %p56 = scmp.eq.s32.totalorder %s18, 3
      %p57 = por %p55, %p56
      %p58 = scmp.ne.s32.totalorder %s47, %s48
      %p59 = scmp.eq.s32.totalorder %s18, 0
      %p60 = por %p58, %p59
      %p61 = scmp.ne.s32.totalorder %s47, %s48
      %p62 = scmp.eq.s32.totalorder %s19, 3
      %p63 = por %p61, %p62
      %p65 = scmp.ne.s32.totalorder %s48, %s64
      %p66 = scmp.eq.s32.totalorder %s19, 0
      %p67 = por %p65, %p66
      %s68 = sadd.s32 %s22, 1
      %s69 = smul.u32 %s68, 4
      %s70 = sadd.s32 %s31, 1
      %s71 = smul.u32 %s70, 4
      %s72 = ssub.s32 %s21, %s35
      %s73 = ssub.s32 %s69, %s71
      %s74 = sor.u32 %s72, %s73
      %p75 = scmp.eq.s32.totalorder %s74, 0
      %s77 = sadd.s32 %s76, 1
      %s78 = scalar_select %p75, %s76, %s77
      %p81 = pneg %p75
      %p82 = scmp.eq.s32.totalorder %s13, 3
      %p83 = por %p81, %p82
      %p84 = scmp.ne.s32.totalorder %s76, %s79
      %p85 = scmp.eq.s32.totalorder %s13, 0
      %p86 = por %p84, %p85
      %p87 = scmp.ne.s32.totalorder %s76, %s79
      %p88 = scmp.eq.s32.totalorder %s18, 3
      %p89 = por %p87, %p88
      %p90 = scmp.ne.s32.totalorder %s79, %s80
      %p91 = scmp.eq.s32.totalorder %s18, 0
      %p92 = por %p90, %p91
      %p93 = scmp.ne.s32.totalorder %s79, %s80
      %p94 = scmp.eq.s32.totalorder %s19, 3
      %p95 = por %p93, %p94
      %p97 = scmp.ne.s32.totalorder %s80, %s96
      %p98 = scmp.eq.s32.totalorder %s19, 0
      %p99 = por %p97, %p98
      %s100 = ssub.s32 %s20, %s39
      %p101 = scmp.eq.s32.totalorder %s100, 0
      %s103 = sadd.s32 %s102, 1
      %s104 = scalar_select %p101, %s102, %s103
      %p107 = pneg %p101
      %p108 = scmp.eq.s32.totalorder %s13, 3
      %p109 = por %p107, %p108
      %p110 = scmp.ne.s32.totalorder %s102, %s105
      %p111 = scmp.eq.s32.totalorder %s13, 0
      %p112 = por %p110, %p111
      %p113 = scmp.ne.s32.totalorder %s102, %s105
      %p114 = scmp.eq.s32.totalorder %s18, 3
      %p115 = por %p113, %p114
      %p116 = scmp.ne.s32.totalorder %s105, %s106
      %p117 = scmp.eq.s32.totalorder %s18, 0
      %p118 = por %p116, %p117
      %p119 = scmp.ne.s32.totalorder %s105, %s106
      %p120 = scmp.eq.s32.totalorder %s19, 3
      %p121 = por %p119, %p120
      %p123 = scmp.ne.s32.totalorder %s106, %s122
      %p124 = scmp.eq.s32.totalorder %s19, 0
      %p125 = por %p123, %p124
      %s126 = ssub.s32 %s20, %s39
      %p127 = scmp.eq.s32.totalorder %s126, 0
      %s129 = sadd.s32 %s128, 1
      %s130 = scalar_select %p127, %s128, %s129
      %p133 = pneg %p127
      %p134 = scmp.eq.s32.totalorder %s13, 3
      %p135 = por %p133, %p134
      %p136 = scmp.ne.s32.totalorder %s128, %s131
      %p137 = scmp.eq.s32.totalorder %s13, 0
      %p138 = por %p136, %p137
      %p139 = scmp.ne.s32.totalorder %s128, %s131
      %p140 = scmp.eq.s32.totalorder %s18, 3
      %p141 = por %p139, %p140
      %p142 = scmp.ne.s32.totalorder %s131, %s132
      %p143 = scmp.eq.s32.totalorder %s18, 0
      %p144 = por %p142, %p143
      %p145 = scmp.ne.s32.totalorder %s131, %s132
      %p146 = scmp.eq.s32.totalorder %s19, 3
      %p147 = por %p145, %p146
      %p149 = scmp.ne.s32.totalorder %s132, %s148
      %p150 = scmp.eq.s32.totalorder %s19, 0
      %p151 = por %p149, %p150
      %s152 = ssub.s32 %s21, %s35
      %s153 = ssub.s32 %s22, %s31
      %s154 = sor.u32 %s152, %s153
      %s155 = ssub.s32 %s20, %s39
      %s156 = sor.u32 %s154, %s155
      %p157 = scmp.eq.s32.totalorder %s156, 0
      %s159 = sadd.s32 %s158, 1
      %s160 = scalar_select %p157, %s158, %s159
      %p163 = pneg %p157
      %p164 = scmp.eq.s32.totalorder %s13, 3
      %p165 = por %p163, %p164
      %p166 = scmp.ne.s32.totalorder %s158, %s161
      %p167 = scmp.eq.s32.totalorder %s13, 0
      %p168 = por %p166, %p167
      %p169 = scmp.ne.s32.totalorder %s158, %s161
      %p170 = scmp.eq.s32.totalorder %s18, 3
      %p171 = por %p169, %p170
      %p172 = scmp.ne.s32.totalorder %s161, %s162
      %p173 = scmp.eq.s32.totalorder %s18, 0
      %p174 = por %p172, %p173
      %p175 = scmp.ne.s32.totalorder %s161, %s162
      %p176 = scmp.eq.s32.totalorder %s19, 3
      %p177 = por %p175, %p176
      %p179 = scmp.ne.s32.totalorder %s162, %s178
      %p180 = scmp.eq.s32.totalorder %s19, 0
      %p181 = por %p179, %p180
      %p182 = scmp.le.s32.totalorder 1, %s13
      %p183 = scmp.lt.s32.totalorder %s13, 5
      %p184 = pnand %p182, %p183
      %p185 = pneg %p184
      // Predicated region
      $region9: #{tpu_custom_call.1} parent=5 // pred_check
        _
      $region10: #{tpu_custom_call.1} parent=5 // pred_check_branch
        %187 = sbr.rel (%p184) target = $region12
      $region11: #{tpu_custom_call.1} parent=5 // pred_region
        %s188 = ssub.s32 %s13, 1
        // Predicated region
        $region13: #{tpu_custom_call.1} parent=11 // pred_check
          %p189 = pneg %p118
        $region14: #{tpu_custom_call.1} parent=11 // pred_check_branch
          %191 = sbr.rel (%p189) target = $region16
        $region15: #{tpu_custom_call.1} parent=11 // pred_region
          %p192 = scmp.lt.s32.totalorder %s23, 0
          %s193 = scalar_select %p192, %s23, 0
          %s194 = smul.addr %s193, 4
          %s195 = scalar_lea.vmem %s2, %s194
        $region16: #{tpu_custom_call.1} parent=11 // pred_fallthru
          _
        // Predicated region
        $region17: #{tpu_custom_call.1} parent=11 // pred_check
          %p196 = pneg %p144
        $region18: #{tpu_custom_call.1} parent=11 // pred_check_branch
          %198 = sbr.rel (%p196) target = $region20
        $region19: #{tpu_custom_call.1} parent=11 // pred_region
          %p199 = scmp.lt.s32.totalorder %s23, 0
          %s200 = scalar_select %p199, %s23, 0
          %s201 = scalar_lea.vmem %s3, %s200
        $region20: #{tpu_custom_call.1} parent=11 // pred_fallthru
          _
      $region12: #{tpu_custom_call.1} parent=5 // pred_fallthru
        _
      %p202 = scmp.lt.s32.totalorder %s13, 4
      // Predicated region
      $region21: #{tpu_custom_call.1} parent=5 // pred_check
        %p203 = pneg %p202
      $region22: #{tpu_custom_call.1} parent=5 // pred_check_branch
        %205 = sbr.rel (%p203) target = $region24
      $region23: #{tpu_custom_call.1} parent=5 // pred_region
        // Predicated region
        $region25: #{tpu_custom_call.1} parent=23 // pred_check
          %p206 = pneg %p54
        $region26: #{tpu_custom_call.1} parent=23 // pred_check_branch
          %208 = sbr.rel (%p206) target = $region28
        $region27: #{tpu_custom_call.1} parent=23 // pred_region
          %s209 = smul.u32 4, %s22
          %s210 = ssub.s32 9, %s209
          %p211 = scmp.lt.s32.totalorder %s210, 4
          %s212 = scalar_select %p211, %s210, 4
          %s213 = smul.u32 4, %s212
          %s214 = smul.u32 %s213, 3
          %s215 = smul.u32 %s214, 2
          %p216 = scmp.lt.s32.totalorder %s21, 1
          %s217 = scalar_select %p216, %s21, 1
          %p218 = scmp.lt.s32.totalorder %s209, 8
          %s219 = scalar_select %p218, %s209, 8
          %s220 = smul.addr %s219, 6
          %s221 = smul.addr %s217, 54
          %s222 = sadd.s32 %s220, %s221
          %s223 = smul.addr %s222, 4
          %s224 = scalar_lea.vmem %s0, %s223
          %s225 = smul.u32 4, %s22
          %s226 = ssub.s32 9, %s225
          %p227 = scmp.lt.s32.totalorder %s226, 4
          %s228 = scalar_select %p227, %s226, 4
          %s229 = smul.u32 4, %s228
          %s230 = smul.u32 %s229, 3
          %s231 = smul.u32 %s230, 2
        $region28: #{tpu_custom_call.1} parent=23 // pred_fallthru
          _
        // Predicated region
        $region29: #{tpu_custom_call.1} parent=23 // pred_check
          %p232 = pneg %p86
        $region30: #{tpu_custom_call.1} parent=23 // pred_check_branch
          %234 = sbr.rel (%p232) target = $region32
        $region31: #{tpu_custom_call.1} parent=23 // pred_region
          %s235 = sadd.s32 %s22, 1
          %s236 = smul.u32 %s235, 4
          %p237 = scmp.lt.s32.totalorder %s21, 1
          %s238 = scalar_select %p237, %s21, 1
          %p239 = scmp.lt.s32.totalorder %s236, 8
          %s240 = scalar_select %p239, %s236, 8
          %s241 = smul.addr %s240, 6
          %s242 = smul.addr %s238, 54
          %s243 = sadd.s32 %s241, %s242
          %s244 = smul.addr %s243, 4
          %s245 = scalar_lea.vmem %s1, %s244
          %s246 = sadd.s32 %s22, 1
          %s247 = smul.u32 %s246, 4
        $region32: #{tpu_custom_call.1} parent=23 // pred_fallthru
          _
      $region24: #{tpu_custom_call.1} parent=5 // pred_fallthru
        _
      %p248 = scmp.le.s32.totalorder 1, %s13
      %p249 = scmp.lt.s32.totalorder %s13, 5
      %p250 = pnand %p248, %p249
      %p251 = pneg %p250
      // Predicated region
      $region33: #{tpu_custom_call.1} parent=5 // pred_check
        _
      $region34: #{tpu_custom_call.1} parent=5 // pred_check_branch
        %253 = sbr.rel (%p250) target = $region36
      $region35: #{tpu_custom_call.1} parent=5 // pred_region
        %s254 = ssub.s32 %s13, 1
        %s255 = smul.u32 4, %s25
        %s256 = ssub.s32 9, %s255
        %p257 = scmp.lt.s32.totalorder %s256, 4
        %s258 = scalar_select %p257, %s256, 4
        %s259 = smul.u32 4, %s258
        %s260 = smul.u32 %s259, 3
        %s261 = smul.u32 %s260, 2
        %p262 = scmp.lt.s32.totalorder %s24, 1
        %s263 = scalar_select %p262, %s24, 1
        %p264 = scmp.lt.s32.totalorder %s255, 8
        %s265 = scalar_select %p264, %s255, 8
        %s266 = smul.addr %s265, 6
        %s267 = smul.addr %s263, 54
        %s268 = sadd.s32 %s266, %s267
        %s269 = smul.addr %s268, 4
        %s270 = scalar_lea.vmem %s0, %s269
        %p271 = pneg %p60
        %p272 = pneg %p57
        %s273 = sadd.s32 %s25, 1
        %s274 = smul.u32 %s273, 4
        %p275 = scmp.lt.s32.totalorder %s24, 1
        %s276 = scalar_select %p275, %s24, 1
        %p277 = scmp.lt.s32.totalorder %s274, 8
        %s278 = scalar_select %p277, %s274, 8
        %s279 = smul.addr %s278, 6
        %s280 = smul.addr %s276, 54
        %s281 = sadd.s32 %s279, %s280
        %s282 = smul.addr %s281, 4
        %s283 = scalar_lea.vmem %s1, %s282
        %p284 = pneg %p92
        %p285 = pneg %p89
        %p286 = scmp.lt.s32.totalorder %s23, 0
        %s287 = scalar_select %p286, %s23, 0
        %s288 = smul.addr %s287, 4
        %s289 = scalar_lea.vmem %s2, %s288
        %p290 = pneg %p118
        %p291 = pneg %p115
        %p292 = scmp.lt.s32.totalorder %s23, 0
        %s293 = scalar_select %p292, %s23, 0
        %s294 = scalar_lea.vmem %s3, %s293
        %p295 = pneg %p144
        %p296 = pneg %p141
        %p297 = pneg %p174
        %p298 = pneg %p171
        %s299 = sand.u32 %s161, 1
        %s300 = scalar_lea.sflag [#allocation4], %s299
        %s301 = sand.u32 %s161, 1
        %s302 = smul.addr %s301, 16
        %s303 = scalar_lea.vmem [#allocation3], %s302
        %s304 = smul.u32 4, %s25
        %s305 = ssub.s32 9, %s304
        %p306 = scmp.lt.s32.totalorder %s305, 4
        %s307 = scalar_select %p306, %s305, 4
        %s308 = smul.u32 4, %s307
        %s309 = smul.u32 %s308, 3
        %s310 = smul.u32 %s309, 2
        %p311 = scmp.lt.s32.totalorder %s24, 1
        %s312 = scalar_select %p311, %s24, 1
        %p313 = scmp.lt.s32.totalorder %s304, 8
        %s314 = scalar_select %p313, %s304, 8
        %s315 = smul.addr %s314, 6
        %s316 = smul.addr %s312, 54
        %s317 = sadd.s32 %s315, %s316
        %s318 = smul.addr %s317, 4
        %s319 = scalar_lea.vmem %s0, %s318
        %s320 = smul.u32 4, %s25
        %s321 = ssub.s32 9, %s320
        %p322 = scmp.lt.s32.totalorder %s321, 4
        %s323 = scalar_select %p322, %s321, 4
        %s324 = smul.u32 4, %s323
        %s325 = smul.u32 %s324, 3
        %s326 = smul.u32 %s325, 2
        %s327 = sadd.s32 %s25, 1
        %s328 = smul.u32 %s327, 4
        %p329 = scmp.lt.s32.totalorder %s24, 1
        %s330 = scalar_select %p329, %s24, 1
        %p331 = scmp.lt.s32.totalorder %s328, 8
        %s332 = scalar_select %p331, %s328, 8
        %s333 = smul.addr %s332, 6
        %s334 = smul.addr %s330, 54
        %s335 = sadd.s32 %s333, %s334
        %s336 = smul.addr %s335, 4
        %s337 = scalar_lea.vmem %s1, %s336
        %s338 = sadd.s32 %s25, 1
        %s339 = smul.u32 %s338, 4
        %p340 = scmp.lt.s32.totalorder %s23, 0
        %s341 = scalar_select %p340, %s23, 0
        %s342 = smul.addr %s341, 4
        %s343 = scalar_lea.vmem %s2, %s342
        %p344 = scmp.lt.s32.totalorder %s23, 0
        %s345 = scalar_select %p344, %s23, 0
        %s346 = scalar_lea.vmem %s3, %s345
        %s347 = smul.u32 4, %s25
        %v348 = vld [vmem:[%s319] sm:$0xf]
        %v349 = vld [vmem:[%s319 + $0x18] sm:$0xf]
        %v350 = vld [vmem:[%s319 + $0x30] sm:$0xf]
        %v351 = vld [vmem:[%s319 + $0x48] sm:$0xf]
        %352 = vst [vmem:[#allocation2] sm:$0xf] %v348
        %353 = vst [vmem:[#allocation2 + $0x24] sm:$0xf] %v349
        %354 = vst [vmem:[#allocation2 + $0x48] sm:$0xf] %v350
        %355 = vst [vmem:[#allocation2 + $0x6c] sm:$0xf] %v351
        %v356 = vld [vmem:[%s319 + $0x4] sm:$0xf]
        %v357 = vld [vmem:[%s319 + $0x1c] sm:$0xf]
        %v358 = vld [vmem:[%s319 + $0x34] sm:$0xf]
        %v359 = vld [vmem:[%s319 + $0x4c] sm:$0xf]
        %360 = vst [vmem:[#allocation2 + $0x4] sm:$0xf] %v356
        %361 = vst [vmem:[#allocation2 + $0x28] sm:$0xf] %v357
        %362 = vst [vmem:[#allocation2 + $0x4c] sm:$0xf] %v358
        %363 = vst [vmem:[#allocation2 + $0x70] sm:$0xf] %v359
        %v364 = vld [vmem:[%s319] sm:$0xf]
        %v365 = vld [vmem:[%s319 + $0x8] sm:$0x1]
        %v366 = vld [vmem:[%s319 + $0x18] sm:$0xf]
        %v367 = vld [vmem:[%s319 + $0x20] sm:$0x1]
        %v368 = vld [vmem:[%s319 + $0x30] sm:$0xf]
        %v369 = vld [vmem:[%s319 + $0x38] sm:$0x1]
        %v370 = vld [vmem:[%s319 + $0x48] sm:$0xf]
        %v371 = vld [vmem:[%s319 + $0x50] sm:$0x1]
        %vm372 = vsmask.f32 3328
        %vm373 = vsmask.f32 7440
        %vm374 = vmor %vm372, %vm373
        %v376 = vshrl.u32 %v364, 16
        %v378 = vrot.slane %v376, 4
        %v379 = vshll.u32 %v364, 16
        %v381 = vrot.slane %v379, 5
        %v382 = vor.u32 %v378, %v381
        %v383 = vrot.slane %v382, 4
        %v385 = vshll.u32 %v365, 16
        %v387 = vrot.slane %v385, 5
        %v388 = vsel %vm374, %v383, %v387
        %v390 = vshrl.u32 %v366, 16
        %v392 = vrot.slane %v390, 4
        %v393 = vshll.u32 %v366, 16
        %v395 = vrot.slane %v393, 5
        %v396 = vor.u32 %v392, %v395
        %v397 = vrot.slane %v396, 4
        %v399 = vshll.u32 %v367, 16
        %v401 = vrot.slane %v399, 5
        %v402 = vsel %vm374, %v397, %v401
        %v404 = vshrl.u32 %v368, 16
        %v406 = vrot.slane %v404, 4
        %v407 = vshll.u32 %v368, 16
        %v409 = vrot.slane %v407, 5
        %v410 = vor.u32 %v406, %v409
        %v411 = vrot.slane %v410, 4
        %v413 = vshll.u32 %v369, 16
        %v415 = vrot.slane %v413, 5
        %v416 = vsel %vm374, %v411, %v415
        %v418 = vshrl.u32 %v370, 16
        %v420 = vrot.slane %v418, 4
        %v421 = vshll.u32 %v370, 16
        %v423 = vrot.slane %v421, 5
        %v424 = vor.u32 %v420, %v423
        %v425 = vrot.slane %v424, 4
        %v427 = vshll.u32 %v371, 16
        %v429 = vrot.slane %v427, 5
        %v430 = vsel %vm374, %v425, %v429
        %435 = vst [vmem:[#allocation2 + $0x8] sm:$0xf] %v388
        %436 = vst [vmem:[#allocation2 + $0x2c] sm:$0xf] %v402
        %437 = vst [vmem:[#allocation2 + $0x50] sm:$0xf] %v416
        %438 = vst [vmem:[#allocation2 + $0x74] sm:$0xf] %v430
        %v439 = vld [vmem:[%s319 + $0x8] sm:$0xf]
        %v440 = vld [vmem:[%s319 + $0x10] sm:$0x1]
        %v441 = vld [vmem:[%s319 + $0x20] sm:$0xf]
        %v442 = vld [vmem:[%s319 + $0x28] sm:$0x1]
        %v443 = vld [vmem:[%s319 + $0x38] sm:$0xf]
        %v444 = vld [vmem:[%s319 + $0x40] sm:$0x1]
        %v445 = vld [vmem:[%s319 + $0x50] sm:$0xf]
        %v446 = vld [vmem:[%s319 + $0x58] sm:$0x1]
        %v448 = vshrl.u32 %v439, 16
        %v450 = vrot.slane %v448, 4
        %v451 = vshll.u32 %v439, 16
        %v453 = vrot.slane %v451, 5
        %v454 = vor.u32 %v450, %v453
        %v455 = vrot.slane %v454, 4
        %v457 = vshll.u32 %v440, 16
        %v459 = vrot.slane %v457, 5
        %v460 = vsel %vm374, %v455, %v459
        %v462 = vshrl.u32 %v441, 16
        %v464 = vrot.slane %v462, 4
        %v465 = vshll.u32 %v441, 16
        %v467 = vrot.slane %v465, 5
        %v468 = vor.u32 %v464, %v467
        %v469 = vrot.slane %v468, 4
        %v471 = vshll.u32 %v442, 16
        %v473 = vrot.slane %v471, 5
        %v474 = vsel %vm374, %v469, %v473
        %v476 = vshrl.u32 %v443, 16
        %v478 = vrot.slane %v476, 4
        %v479 = vshll.u32 %v443, 16
        %v481 = vrot.slane %v479, 5
        %v482 = vor.u32 %v478, %v481
        %v483 = vrot.slane %v482, 4
        %v485 = vshll.u32 %v444, 16
        %v487 = vrot.slane %v485, 5
        %v488 = vsel %vm374, %v483, %v487
        %v490 = vshrl.u32 %v445, 16
        %v492 = vrot.slane %v490, 4
        %v493 = vshll.u32 %v445, 16
        %v495 = vrot.slane %v493, 5
        %v496 = vor.u32 %v492, %v495
        %v497 = vrot.slane %v496, 4
        %v499 = vshll.u32 %v446, 16
        %v501 = vrot.slane %v499, 5
        %v502 = vsel %vm374, %v497, %v501
        %507 = vst [vmem:[#allocation2 + $0xc] sm:$0xf] %v460
        %508 = vst [vmem:[#allocation2 + $0x30] sm:$0xf] %v474
        %509 = vst [vmem:[#allocation2 + $0x54] sm:$0xf] %v488
        %510 = vst [vmem:[#allocation2 + $0x78] sm:$0xf] %v502
        %v511 = vld [vmem:[%s319 + $0xc] sm:$0xf]
        %v512 = vld [vmem:[%s319 + $0x14] sm:$0x1]
        %v513 = vld [vmem:[%s319 + $0x24] sm:$0xf]
        %v514 = vld [vmem:[%s319 + $0x2c] sm:$0x1]
        %v515 = vld [vmem:[%s319 + $0x3c] sm:$0xf]
        %v516 = vld [vmem:[%s319 + $0x44] sm:$0x1]
        %v517 = vld [vmem:[%s319 + $0x54] sm:$0xf]
        %v518 = vld [vmem:[%s319 + $0x5c] sm:$0x1]
        %v520 = vshrl.u32 %v511, 16
        %v522 = vrot.slane %v520, 4
        %v523 = vshll.u32 %v511, 16
        %v525 = vrot.slane %v523, 5
        %v526 = vor.u32 %v522, %v525
        %v527 = vrot.slane %v526, 4
        %v529 = vshll.u32 %v512, 16
        %v531 = vrot.slane %v529, 5
        %v532 = vsel %vm374, %v527, %v531
        %v534 = vshrl.u32 %v513, 16
        %v536 = vrot.slane %v534, 4
        %v537 = vshll.u32 %v513, 16
        %v539 = vrot.slane %v537, 5
        %v540 = vor.u32 %v536, %v539
        %v541 = vrot.slane %v540, 4
        %v543 = vshll.u32 %v514, 16
        %v545 = vrot.slane %v543, 5
        %v546 = vsel %vm374, %v541, %v545
        %v548 = vshrl.u32 %v515, 16
        %v550 = vrot.slane %v548, 4
        %v551 = vshll.u32 %v515, 16
        %v553 = vrot.slane %v551, 5
        %v554 = vor.u32 %v550, %v553
        %v555 = vrot.slane %v554, 4
        %v557 = vshll.u32 %v516, 16
        %v559 = vrot.slane %v557, 5
        %v560 = vsel %vm374, %v555, %v559
        %v562 = vshrl.u32 %v517, 16
        %v564 = vrot.slane %v562, 4
        %v565 = vshll.u32 %v517, 16
        %v567 = vrot.slane %v565, 5
        %v568 = vor.u32 %v564, %v567
        %v569 = vrot.slane %v568, 4
        %v571 = vshll.u32 %v518, 16
        %v573 = vrot.slane %v571, 5
        %v574 = vsel %vm374, %v569, %v573
        %579 = vst [vmem:[#allocation2 + $0x10] sm:$0xf] %v532
        %580 = vst [vmem:[#allocation2 + $0x34] sm:$0xf] %v546
        %581 = vst [vmem:[#allocation2 + $0x58] sm:$0xf] %v560
        %582 = vst [vmem:[#allocation2 + $0x7c] sm:$0xf] %v574
        %v583 = vld [vmem:[%s319 + $0x8] sm:$0xe]
        %v584 = vld [vmem:[%s319 + $0x10] sm:$0x1]
        %v585 = vld [vmem:[%s319 + $0x20] sm:$0xe]
        %v586 = vld [vmem:[%s319 + $0x28] sm:$0x1]
        %v587 = vld [vmem:[%s319 + $0x38] sm:$0xe]
        %v588 = vld [vmem:[%s319 + $0x40] sm:$0x1]
        %v589 = vld [vmem:[%s319 + $0x50] sm:$0xe]
        %v590 = vld [vmem:[%s319 + $0x58] sm:$0x1]
        %vm599 = vcmask 1042432
        %vm600 = vcmask 1046532
        %vm601 = vmor %vm599, %vm600
        %v602 = vrot.slane %v583, 5
        %v603 = vrot.slane %v602, 4
        %v604 = vrot.slane %v584, 5
        %v605 = vsel %vm601, %v603, %v604
        %v606 = vrot.slane %v585, 5
        %v607 = vrot.slane %v606, 4
        %v608 = vrot.slane %v586, 5
        %v609 = vsel %vm601, %v607, %v608
        %v610 = vrot.slane %v587, 5
        %v611 = vrot.slane %v610, 4
        %v612 = vrot.slane %v588, 5
        %v613 = vsel %vm601, %v611, %v612
        %v614 = vrot.slane %v589, 5
        %v615 = vrot.slane %v614, 4
        %v616 = vrot.slane %v590, 5
        %v617 = vsel %vm601, %v615, %v616
        %622 = vst [vmem:[#allocation2 + $0x14] sm:$0xf] %v605
        %623 = vst [vmem:[#allocation2 + $0x38] sm:$0xf] %v609
        %624 = vst [vmem:[#allocation2 + $0x5c] sm:$0xf] %v613
        %625 = vst [vmem:[#allocation2 + $0x80] sm:$0xf] %v617
        %s626 = scalar_lea.vmem %s319, 24
        %v627 = vld [vmem:[%s626] sm:$0xf]
        %v628 = vld [vmem:[%s626 + $0x18] sm:$0xf]
        %v629 = vld [vmem:[%s626 + $0x30] sm:$0xf]
        %630 = vst [vmem:[#allocation2 + $0x18] sm:$0xf] %v627
        %631 = vst [vmem:[#allocation2 + $0x3c] sm:$0xf] %v628
        %632 = vst [vmem:[#allocation2 + $0x60] sm:$0xf] %v629
        %v633 = vld [vmem:[%s337] sm:$0xf]
        %634 = vst [vmem:[#allocation2 + $0x84] sm:$0xf] %v633
        %v635 = vld [vmem:[%s626 + $0x4] sm:$0xf]
        %v636 = vld [vmem:[%s626 + $0x1c] sm:$0xf]
        %v637 = vld [vmem:[%s626 + $0x34] sm:$0xf]
        %638 = vst [vmem:[#allocation2 + $0x1c] sm:$0xf] %v635
        %639 = vst [vmem:[#allocation2 + $0x40] sm:$0xf] %v636
        %640 = vst [vmem:[#allocation2 + $0x64] sm:$0xf] %v637
        %v641 = vld [vmem:[%s337 + $0x4] sm:$0xf]
        %642 = vst [vmem:[#allocation2 + $0x88] sm:$0xf] %v641
        %v643 = vld [vmem:[%s626] sm:$0xf]
        %v644 = vld [vmem:[%s626 + $0x8] sm:$0x1]
        %v645 = vld [vmem:[%s626 + $0x18] sm:$0xf]
        %v646 = vld [vmem:[%s626 + $0x20] sm:$0x1]
        %v647 = vld [vmem:[%s626 + $0x30] sm:$0xf]
        %v648 = vld [vmem:[%s626 + $0x38] sm:$0x1]
        %v650 = vshrl.u32 %v643, 16
        %v652 = vrot.slane %v650, 4
        %v653 = vshll.u32 %v643, 16
        %v655 = vrot.slane %v653, 5
        %v656 = vor.u32 %v652, %v655
        %v657 = vrot.slane %v656, 4
        %v659 = vshll.u32 %v644, 16
        %v661 = vrot.slane %v659, 5
        %v662 = vsel %vm374, %v657, %v661
        %v664 = vshrl.u32 %v645, 16
        %v666 = vrot.slane %v664, 4
        %v667 = vshll.u32 %v645, 16
        %v669 = vrot.slane %v667, 5
        %v670 = vor.u32 %v666, %v669
        %v671 = vrot.slane %v670, 4
        %v673 = vshll.u32 %v646, 16
        %v675 = vrot.slane %v673, 5
        %v676 = vsel %vm374, %v671, %v675
        %v678 = vshrl.u32 %v647, 16
        %v680 = vrot.slane %v678, 4
        %v681 = vshll.u32 %v647, 16
        %v683 = vrot.slane %v681, 5
        %v684 = vor.u32 %v680, %v683
        %v685 = vrot.slane %v684, 4
        %v687 = vshll.u32 %v648, 16
        %v689 = vrot.slane %v687, 5
        %v690 = vsel %vm374, %v685, %v689
        %694 = vst [vmem:[#allocation2 + $0x20] sm:$0xf] %v662
        %695 = vst [vmem:[#allocation2 + $0x44] sm:$0xf] %v676
        %696 = vst [vmem:[#allocation2 + $0x68] sm:$0xf] %v690
        %v697 = vld [vmem:[%s337] sm:$0xf]
        %v698 = vld [vmem:[%s337 + $0x8] sm:$0x1]
        %v700 = vshrl.u32 %v697, 16
        %v702 = vrot.slane %v700, 4
        %v703 = vshll.u32 %v697, 16
        %v705 = vrot.slane %v703, 5
        %v706 = vor.u32 %v702, %v705
        %v707 = vrot.slane %v706, 4
        %v709 = vshll.u32 %v698, 16
        %v711 = vrot.slane %v709, 5
        %v712 = vsel %vm374, %v707, %v711
        %714 = vst [vmem:[#allocation2 + $0x8c] sm:$0xf] %v712
        %v715 = vld [vmem:[#allocation2] sm:$0xff]
        %v716 = vld [vmem:[#allocation2 + $0x8] sm:$0xff]
        %v717 = vld [vmem:[#allocation2 + $0x10] sm:$0xff]
        %v718 = vld [vmem:[#allocation2 + $0x18] sm:$0xff]
        %v719 = vld [vmem:[#allocation2 + $0x20] sm:$0xf]
        %v720 = vld [vmem:[#allocation2 + $0x24] sm:$0xff]
        %v721 = vld [vmem:[#allocation2 + $0x2c] sm:$0xff]
        %v722 = vld [vmem:[#allocation2 + $0x34] sm:$0xff]
        %v723 = vld [vmem:[#allocation2 + $0x3c] sm:$0xff]
        %v724 = vld [vmem:[#allocation2 + $0x44] sm:$0xf]
        %v725 = vld [vmem:[#allocation2 + $0x48] sm:$0xff]
        %v726 = vld [vmem:[#allocation2 + $0x50] sm:$0xff]
        %v727 = vld [vmem:[#allocation2 + $0x58] sm:$0xff]
        %v728 = vld [vmem:[#allocation2 + $0x60] sm:$0xff]
        %v729 = vld [vmem:[#allocation2 + $0x68] sm:$0xf]
        %v730 = vld [vmem:[#allocation2 + $0x6c] sm:$0xff]
        %v731 = vld [vmem:[#allocation2 + $0x74] sm:$0xff]
        %v732 = vld [vmem:[#allocation2 + $0x7c] sm:$0xff]
        %v733 = vld [vmem:[#allocation2 + $0x84] sm:$0xff]
        %v734 = vld [vmem:[#allocation2 + $0x8c] sm:$0xf]
        %v735 = vld [vmem:[%s343] sm:$0xf]
        %v736 = vld [vmem:[%s343 + $0x4] sm:$0xf]
        %v737 = vld [vmem:[%s343 + $0x8] sm:$0xf]
        %v738 = vld [vmem:[%s343 + $0xc] sm:$0xf]
        %v739 = vld [vmem:[%s343 + $0x10] sm:$0xf]
        %v740 = vld [vmem:[%s343 + $0x14] sm:$0xf]
        %v741 = vld [vmem:[%s343 + $0x18] sm:$0xf]
        %v742 = vld [vmem:[%s343 + $0x1c] sm:$0xf]
        %v743 = vld [vmem:[%s343 + $0x20] sm:$0xf]
        %v744 = vld [vmem:[%s343 + $0x24] sm:$0xf]
        %v745 = vld [vmem:[%s343 + $0x28] sm:$0xf]
        %v746 = vld [vmem:[%s343 + $0x2c] sm:$0xf]
        %v747 = vld [vmem:[%s343 + $0x30] sm:$0xf]
        %v748 = vld [vmem:[%s343 + $0x34] sm:$0xf]
        %v749 = vld [vmem:[%s343 + $0x38] sm:$0xf]
        %v750 = vld [vmem:[%s343 + $0x3c] sm:$0xf]
        %v751 = vld [vmem:[%s343 + $0x40] sm:$0xf]
        %v752 = vld [vmem:[%s343 + $0x44] sm:$0xf]
        %v753 = vld [vmem:[%s343 + $0x48] sm:$0xf]
        %v754 = vld [vmem:[%s343 + $0x4c] sm:$0xf]
        %v755 = vld [vmem:[%s343 + $0x50] sm:$0xf]
        %v756 = vld [vmem:[%s343 + $0x54] sm:$0xf]
        %v757 = vld [vmem:[%s343 + $0x58] sm:$0xf]
        %v758 = vld [vmem:[%s343 + $0x5c] sm:$0xf]
        %v759 = vld [vmem:[%s343 + $0x60] sm:$0xf]
        %v760 = vld [vmem:[%s343 + $0x64] sm:$0xf]
        %v761 = vld [vmem:[%s343 + $0x68] sm:$0xf]
        %v762 = vld [vmem:[%s343 + $0x6c] sm:$0xf]
        %v763 = vld [vmem:[%s343 + $0x70] sm:$0xf]
        %v764 = vld [vmem:[%s343 + $0x74] sm:$0xf]
        %v765 = vld [vmem:[%s343 + $0x78] sm:$0xf]
        %v766 = vld [vmem:[%s343 + $0x7c] sm:$0xf]
        %v767 = vld [vmem:[%s343 + $0x80] sm:$0xf]
        %v768 = vld [vmem:[%s343 + $0x84] sm:$0xf]
        %v769 = vld [vmem:[%s343 + $0x88] sm:$0xf]
        %v770 = vld [vmem:[%s343 + $0x8c] sm:$0xf]
        %v771 = vld [vmem:[%s343 + $0x90] sm:$0xf]
        %v772 = vld [vmem:[%s343 + $0x94] sm:$0xf]
        %v773 = vld [vmem:[%s343 + $0x98] sm:$0xf]
        %v774 = vld [vmem:[%s343 + $0x9c] sm:$0xf]
        %v775 = vld [vmem:[%s343 + $0xa0] sm:$0xf]
        %v776 = vld [vmem:[%s343 + $0xa4] sm:$0xf]
        %v777 = vld [vmem:[%s343 + $0xa8] sm:$0xf]
        %v778 = vld [vmem:[%s343 + $0xac] sm:$0xf]
        %v779 = vld [vmem:[%s343 + $0xb0] sm:$0xf]
        %v780 = vld [vmem:[%s343 + $0xb4] sm:$0xf]
        %v781 = vld [vmem:[%s343 + $0xb8] sm:$0xf]
        %v782 = vld [vmem:[%s343 + $0xbc] sm:$0xf]
        %v783 = vld [vmem:[%s343 + $0xc0] sm:$0xf]
        %v784 = vld [vmem:[%s343 + $0xc4] sm:$0xf]
        %v785 = vld [vmem:[%s343 + $0xc8] sm:$0xf]
        %v786 = vld [vmem:[%s343 + $0xcc] sm:$0xf]
        %v787 = vld [vmem:[%s343 + $0xd0] sm:$0xf]
        %v788 = vld [vmem:[%s343 + $0xd4] sm:$0xf]
        %v789 = vld [vmem:[%s343 + $0xd8] sm:$0xf]
        %v790 = vld [vmem:[%s343 + $0xdc] sm:$0xf]
        %v791 = vld [vmem:[%s343 + $0xe0] sm:$0xf]
        %v792 = vld [vmem:[%s343 + $0xe4] sm:$0xf]
        %v793 = vld [vmem:[%s343 + $0xe8] sm:$0xf]
        %v794 = vld [vmem:[%s343 + $0xec] sm:$0xf]
        %v795 = vld [vmem:[%s343 + $0xf0] sm:$0xf]
        %v796 = vld [vmem:[%s343 + $0xf4] sm:$0xf]
        %v797 = vld [vmem:[%s343 + $0xf8] sm:$0xf]
        %v798 = vld [vmem:[%s343 + $0xfc] sm:$0xf]
        %v799 = vld [vmem:[%s343 + $0x100] sm:$0xf]
        %v800 = vld [vmem:[%s343 + $0x104] sm:$0xf]
        %v801 = vld [vmem:[%s343 + $0x108] sm:$0xf]
        %v802 = vld [vmem:[%s343 + $0x10c] sm:$0xf]
        %v803 = vld [vmem:[%s343 + $0x110] sm:$0xf]
        %v804 = vld [vmem:[%s343 + $0x114] sm:$0xf]
        %v805 = vld [vmem:[%s343 + $0x118] sm:$0xf]
        %v806 = vld [vmem:[%s343 + $0x11c] sm:$0xf]
        %v807 = vld [vmem:[%s343 + $0x120] sm:$0xf]
        %v808 = vld [vmem:[%s343 + $0x124] sm:$0xf]
        %v809 = vld [vmem:[%s343 + $0x128] sm:$0xf]
        %v810 = vld [vmem:[%s343 + $0x12c] sm:$0xf]
        %v811 = vld [vmem:[%s343 + $0x130] sm:$0xf]
        %v812 = vld [vmem:[%s343 + $0x134] sm:$0xf]
        %v813 = vld [vmem:[%s343 + $0x138] sm:$0xf]
        %v814 = vld [vmem:[%s343 + $0x13c] sm:$0xf]
        %v815 = vld [vmem:[%s343 + $0x140] sm:$0xf]
        %v816 = vld [vmem:[%s343 + $0x144] sm:$0xf]
        %v817 = vld [vmem:[%s343 + $0x148] sm:$0xf]
        %v818 = vld [vmem:[%s343 + $0x14c] sm:$0xf]
        %v819 = vld [vmem:[%s343 + $0x150] sm:$0xf]
        %v820 = vld [vmem:[%s343 + $0x154] sm:$0xf]
        %v821 = vld [vmem:[%s343 + $0x158] sm:$0xf]
        %v822 = vld [vmem:[%s343 + $0x15c] sm:$0xf]
        %v823 = vld [vmem:[%s343 + $0x160] sm:$0xf]
        %v824 = vld [vmem:[%s343 + $0x164] sm:$0xf]
        %v825 = vld [vmem:[%s343 + $0x168] sm:$0xf]
        %v826 = vld [vmem:[%s343 + $0x16c] sm:$0xf]
        %v827 = vld [vmem:[%s343 + $0x170] sm:$0xf]
        %v828 = vld [vmem:[%s343 + $0x174] sm:$0xf]
        %v829 = vld [vmem:[%s343 + $0x178] sm:$0xf]
        %v830 = vld [vmem:[%s343 + $0x17c] sm:$0xf]
        %v831 = vld [vmem:[%s343 + $0x180] sm:$0xf]
        %v832 = vld [vmem:[%s343 + $0x184] sm:$0xf]
        %v833 = vld [vmem:[%s343 + $0x188] sm:$0xf]
        %v834 = vld [vmem:[%s343 + $0x18c] sm:$0xf]
        %v835 = vld [vmem:[%s343 + $0x190] sm:$0xf]
        %v836 = vld [vmem:[%s343 + $0x194] sm:$0xf]
        %v837 = vld [vmem:[%s343 + $0x198] sm:$0xf]
        %v838 = vld [vmem:[%s343 + $0x19c] sm:$0xf]
        %v839 = vld [vmem:[%s343 + $0x1a0] sm:$0xf]
        %v840 = vld [vmem:[%s343 + $0x1a4] sm:$0xf]
        %v841 = vld [vmem:[%s343 + $0x1a8] sm:$0xf]
        %v842 = vld [vmem:[%s343 + $0x1ac] sm:$0xf]
        %v843 = vld [vmem:[%s343 + $0x1b0] sm:$0xf]
        %v844 = vld [vmem:[%s343 + $0x1b4] sm:$0xf]
        %v845 = vld [vmem:[%s343 + $0x1b8] sm:$0xf]
        %v846 = vld [vmem:[%s343 + $0x1bc] sm:$0xf]
        %v847 = vld [vmem:[%s343 + $0x1c0] sm:$0xf]
        %v848 = vld [vmem:[%s343 + $0x1c4] sm:$0xf]
        %v849 = vld [vmem:[%s343 + $0x1c8] sm:$0xf]
        %v850 = vld [vmem:[%s343 + $0x1cc] sm:$0xf]
        %v851 = vld [vmem:[%s343 + $0x1d0] sm:$0xf]
        %v852 = vld [vmem:[%s343 + $0x1d4] sm:$0xf]
        %v853 = vld [vmem:[%s343 + $0x1d8] sm:$0xf]
        %v854 = vld [vmem:[%s343 + $0x1dc] sm:$0xf]
        %v855 = vld [vmem:[%s343 + $0x1e0] sm:$0xf]
        %v856 = vld [vmem:[%s343 + $0x1e4] sm:$0xf]
        %v857 = vld [vmem:[%s343 + $0x1e8] sm:$0xf]
        %v858 = vld [vmem:[%s343 + $0x1ec] sm:$0xf]
        %v859 = vld [vmem:[%s343 + $0x1f0] sm:$0xf]
        %v860 = vld [vmem:[%s343 + $0x1f4] sm:$0xf]
        %v861 = vld [vmem:[%s343 + $0x1f8] sm:$0xf]
        %v862 = vld [vmem:[%s343 + $0x1fc] sm:$0xf]
        %v863 = vld [vmem:[%s343 + $0x200] sm:$0xf]
        %v864 = vld [vmem:[%s343 + $0x204] sm:$0xf]
        %v865 = vld [vmem:[%s343 + $0x208] sm:$0xf]
        %v866 = vld [vmem:[%s343 + $0x20c] sm:$0xf]
        %v867 = vld [vmem:[%s343 + $0x210] sm:$0xf]
        %v868 = vld [vmem:[%s343 + $0x214] sm:$0xf]
        %v869 = vld [vmem:[%s343 + $0x218] sm:$0xf]
        %v870 = vld [vmem:[%s343 + $0x21c] sm:$0xf]
        %v871 = vld [vmem:[%s343 + $0x220] sm:$0xf]
        %v872 = vld [vmem:[%s343 + $0x224] sm:$0xf]
        %v873 = vld [vmem:[%s343 + $0x228] sm:$0xf]
        %v874 = vld [vmem:[%s343 + $0x22c] sm:$0xf]
        %v875 = vld [vmem:[%s343 + $0x230] sm:$0xf]
        %v876 = vld [vmem:[%s343 + $0x234] sm:$0xf]
        %v877 = vld [vmem:[%s343 + $0x238] sm:$0xf]
        %v878 = vld [vmem:[%s343 + $0x23c] sm:$0xf]
        %v879 = vld [vmem:[%s346] sm:$0x1]
        %v881 = vperm.slane %v879, 0
        %v903 = vunpack.c.l.b16 %v715
        %v904 = vunpack.c.h.b16 %v715
        %v905 = vunpack.c.l.b16 %v716
        %v906 = vunpack.c.h.b16 %v716
        %v907 = vunpack.c.l.b16 %v717
        %v908 = vunpack.c.h.b16 %v717
        %v909 = vunpack.c.l.b16 %v718
        %v910 = vunpack.c.h.b16 %v718
        %v911 = vunpack.c.l.b16 %v719
        %v912 = vunpack.c.l.b16 %v720
        %v913 = vunpack.c.h.b16 %v720
        %v914 = vunpack.c.l.b16 %v721
        %v915 = vunpack.c.h.b16 %v721
        %v916 = vunpack.c.l.b16 %v722
        %v917 = vunpack.c.h.b16 %v722
        %v918 = vunpack.c.l.b16 %v723
        %v919 = vunpack.c.h.b16 %v723
        %v920 = vunpack.c.l.b16 %v724
        %v921 = vunpack.c.l.b16 %v725
        %v922 = vunpack.c.h.b16 %v725
        %v923 = vunpack.c.l.b16 %v726
        %v924 = vunpack.c.h.b16 %v726
        %v925 = vunpack.c.l.b16 %v727
        %v926 = vunpack.c.h.b16 %v727
        %v927 = vunpack.c.l.b16 %v728
        %v928 = vunpack.c.h.b16 %v728
        %v929 = vunpack.c.l.b16 %v729
        %v930 = vunpack.c.l.b16 %v730
        %v931 = vunpack.c.h.b16 %v730
        %v932 = vunpack.c.l.b16 %v731
        %v933 = vunpack.c.h.b16 %v731
        %v934 = vunpack.c.l.b16 %v732
        %v935 = vunpack.c.h.b16 %v732
        %v936 = vunpack.c.l.b16 %v733
        %v937 = vunpack.c.h.b16 %v733
        %v938 = vunpack.c.l.b16 %v734
        %v939 = vpack.c.b16 %v912, %v903
        %v940 = vpack.c.b16 %v913, %v904
        %v941 = vpack.c.b16 %v914, %v905
        %v942 = vpack.c.b16 %v915, %v906
        %v943 = vpack.c.b16 %v916, %v907
        %v944 = vpack.c.b16 %v917, %v908
        %v945 = vpack.c.b16 %v918, %v909
        %v946 = vpack.c.b16 %v919, %v910
        %v947 = vpack.c.b16 %v920, %v911
        %v948 = vpack.c.b16 %v930, %v921
        %v949 = vpack.c.b16 %v931, %v922
        %v950 = vpack.c.b16 %v932, %v923
        %v951 = vpack.c.b16 %v933, %v924
        %v952 = vpack.c.b16 %v934, %v925
        %v953 = vpack.c.b16 %v935, %v926
        %v954 = vpack.c.b16 %v936, %v927
        %v955 = vpack.c.b16 %v937, %v928
        %v956 = vpack.c.b16 %v938, %v929
        %v1119 = vunpack.c.l.b16 %v735
        %v1120 = vunpack.c.l.b16 %v736
        %v1121 = vunpack.c.l.b16 %v737
        %v1122 = vunpack.c.l.b16 %v738
        %v1123 = vunpack.c.l.b16 %v739
        %v1124 = vunpack.c.l.b16 %v740
        %v1125 = vunpack.c.l.b16 %v741
        %v1126 = vunpack.c.l.b16 %v742
        %v1127 = vunpack.c.l.b16 %v743
        %v1128 = vunpack.c.l.b16 %v744
        %v1129 = vunpack.c.l.b16 %v745
        %v1130 = vunpack.c.l.b16 %v746
        %v1131 = vunpack.c.l.b16 %v747
        %v1132 = vunpack.c.l.b16 %v748
        %v1133 = vunpack.c.l.b16 %v749
        %v1134 = vunpack.c.l.b16 %v750
        %v1135 = vunpack.c.l.b16 %v751
        %v1136 = vunpack.c.l.b16 %v752
        %v1137 = vunpack.c.l.b16 %v753
        %v1138 = vunpack.c.l.b16 %v754
        %v1139 = vunpack.c.l.b16 %v755
        %v1140 = vunpack.c.l.b16 %v756
        %v1141 = vunpack.c.l.b16 %v757
        %v1142 = vunpack.c.l.b16 %v758
        %v1143 = vunpack.c.l.b16 %v759
        %v1144 = vunpack.c.l.b16 %v760
        %v1145 = vunpack.c.l.b16 %v761
        %v1146 = vunpack.c.l.b16 %v762
        %v1147 = vunpack.c.l.b16 %v763
        %v1148 = vunpack.c.l.b16 %v764
        %v1149 = vunpack.c.l.b16 %v765
        %v1150 = vunpack.c.l.b16 %v766
        %v1151 = vunpack.c.l.b16 %v767
        %v1152 = vunpack.c.l.b16 %v768
        %v1153 = vunpack.c.l.b16 %v769
        %v1154 = vunpack.c.l.b16 %v770
        %v1155 = vunpack.c.l.b16 %v771
        %v1156 = vunpack.c.l.b16 %v772
        %v1157 = vunpack.c.l.b16 %v773
        %v1158 = vunpack.c.l.b16 %v774
        %v1159 = vunpack.c.l.b16 %v775
        %v1160 = vunpack.c.l.b16 %v776
        %v1161 = vunpack.c.l.b16 %v777
        %v1162 = vunpack.c.l.b16 %v778
        %v1163 = vunpack.c.l.b16 %v779
        %v1164 = vunpack.c.l.b16 %v780
        %v1165 = vunpack.c.l.b16 %v781
        %v1166 = vunpack.c.l.b16 %v782
        %v1167 = vunpack.c.l.b16 %v783
        %v1168 = vunpack.c.l.b16 %v784
        %v1169 = vunpack.c.l.b16 %v785
        %v1170 = vunpack.c.l.b16 %v786
        %v1171 = vunpack.c.l.b16 %v787
        %v1172 = vunpack.c.l.b16 %v788
        %v1173 = vunpack.c.l.b16 %v789
        %v1174 = vunpack.c.l.b16 %v790
        %v1175 = vunpack.c.l.b16 %v791
        %v1176 = vunpack.c.l.b16 %v792
        %v1177 = vunpack.c.l.b16 %v793
        %v1178 = vunpack.c.l.b16 %v794
        %v1179 = vunpack.c.l.b16 %v795
        %v1180 = vunpack.c.l.b16 %v796
        %v1181 = vunpack.c.l.b16 %v797
        %v1182 = vunpack.c.l.b16 %v798
        %v1183 = vunpack.c.l.b16 %v799
        %v1184 = vunpack.c.l.b16 %v800
        %v1185 = vunpack.c.l.b16 %v801
        %v1186 = vunpack.c.l.b16 %v802
        %v1187 = vunpack.c.l.b16 %v803
        %v1188 = vunpack.c.l.b16 %v804
        %v1189 = vunpack.c.l.b16 %v805
        %v1190 = vunpack.c.l.b16 %v806
        %v1191 = vunpack.c.l.b16 %v807
        %v1192 = vunpack.c.l.b16 %v808
        %v1193 = vunpack.c.l.b16 %v809
        %v1194 = vunpack.c.l.b16 %v810
        %v1195 = vunpack.c.l.b16 %v811
        %v1196 = vunpack.c.l.b16 %v812
        %v1197 = vunpack.c.l.b16 %v813
        %v1198 = vunpack.c.l.b16 %v814
        %v1199 = vunpack.c.l.b16 %v815
        %v1200 = vunpack.c.l.b16 %v816
        %v1201 = vunpack.c.l.b16 %v817
        %v1202 = vunpack.c.l.b16 %v818
        %v1203 = vunpack.c.l.b16 %v819
        %v1204 = vunpack.c.l.b16 %v820
        %v1205 = vunpack.c.l.b16 %v821
        %v1206 = vunpack.c.l.b16 %v822
        %v1207 = vunpack.c.l.b16 %v823
        %v1208 = vunpack.c.l.b16 %v824
        %v1209 = vunpack.c.l.b16 %v825
        %v1210 = vunpack.c.l.b16 %v826
        %v1211 = vunpack.c.l.b16 %v827
        %v1212 = vunpack.c.l.b16 %v828
        %v1213 = vunpack.c.l.b16 %v829
        %v1214 = vunpack.c.l.b16 %v830
        %v1215 = vunpack.c.l.b16 %v831
        %v1216 = vunpack.c.l.b16 %v832
        %v1217 = vunpack.c.l.b16 %v833
        %v1218 = vunpack.c.l.b16 %v834
        %v1219 = vunpack.c.l.b16 %v835
        %v1220 = vunpack.c.l.b16 %v836
        %v1221 = vunpack.c.l.b16 %v837
        %v1222 = vunpack.c.l.b16 %v838
        %v1223 = vunpack.c.l.b16 %v839
        %v1224 = vunpack.c.l.b16 %v840
        %v1225 = vunpack.c.l.b16 %v841
        %v1226 = vunpack.c.l.b16 %v842
        %v1227 = vunpack.c.l.b16 %v843
        %v1228 = vunpack.c.l.b16 %v844
        %v1229 = vunpack.c.l.b16 %v845
        %v1230 = vunpack.c.l.b16 %v846
        %v1231 = vunpack.c.l.b16 %v847
        %v1232 = vunpack.c.l.b16 %v848
        %v1233 = vunpack.c.l.b16 %v849
        %v1234 = vunpack.c.l.b16 %v850
        %v1235 = vunpack.c.l.b16 %v851
        %v1236 = vunpack.c.l.b16 %v852
        %v1237 = vunpack.c.l.b16 %v853
        %v1238 = vunpack.c.l.b16 %v854
        %v1239 = vunpack.c.l.b16 %v855
        %v1240 = vunpack.c.l.b16 %v856
        %v1241 = vunpack.c.l.b16 %v857
        %v1242 = vunpack.c.l.b16 %v858
        %v1243 = vunpack.c.l.b16 %v859
        %v1244 = vunpack.c.l.b16 %v860
        %v1245 = vunpack.c.l.b16 %v861
        %v1246 = vunpack.c.l.b16 %v862
        %v1247 = vunpack.c.l.b16 %v863
        %v1248 = vunpack.c.l.b16 %v864
        %v1249 = vunpack.c.l.b16 %v865
        %v1250 = vunpack.c.l.b16 %v866
        %v1251 = vunpack.c.l.b16 %v867
        %v1252 = vunpack.c.l.b16 %v868
        %v1253 = vunpack.c.l.b16 %v869
        %v1254 = vunpack.c.l.b16 %v870
        %v1255 = vunpack.c.l.b16 %v871
        %v1256 = vunpack.c.l.b16 %v872
        %v1257 = vunpack.c.l.b16 %v873
        %v1258 = vunpack.c.l.b16 %v874
        %v1259 = vunpack.c.l.b16 %v875
        %v1260 = vunpack.c.l.b16 %v876
        %v1261 = vunpack.c.l.b16 %v877
        %v1262 = vunpack.c.l.b16 %v878
        %v1263 = vpack.c.b16 %v1120, %v1119
        %v1264 = vpack.c.b16 %v1122, %v1121
        %v1265 = vpack.c.b16 %v1124, %v1123
        %v1266 = vpack.c.b16 %v1126, %v1125
        %v1267 = vpack.c.b16 %v1128, %v1127
        %v1268 = vpack.c.b16 %v1130, %v1129
        %v1269 = vpack.c.b16 %v1132, %v1131
        %v1270 = vpack.c.b16 %v1134, %v1133
        %v1271 = vpack.c.b16 %v1136, %v1135
        %v1272 = vpack.c.b16 %v1138, %v1137
        %v1273 = vpack.c.b16 %v1140, %v1139
        %v1274 = vpack.c.b16 %v1142, %v1141
        %v1275 = vpack.c.b16 %v1144, %v1143
        %v1276 = vpack.c.b16 %v1146, %v1145
        %v1277 = vpack.c.b16 %v1148, %v1147
        %v1278 = vpack.c.b16 %v1150, %v1149
        %v1279 = vpack.c.b16 %v1152, %v1151
        %v1280 = vpack.c.b16 %v1154, %v1153
        %v1281 = vpack.c.b16 %v1156, %v1155
        %v1282 = vpack.c.b16 %v1158, %v1157
        %v1283 = vpack.c.b16 %v1160, %v1159
        %v1284 = vpack.c.b16 %v1162, %v1161
        %v1285 = vpack.c.b16 %v1164, %v1163
        %v1286 = vpack.c.b16 %v1166, %v1165
        %v1287 = vpack.c.b16 %v1168, %v1167
        %v1288 = vpack.c.b16 %v1170, %v1169
        %v1289 = vpack.c.b16 %v1172, %v1171
        %v1290 = vpack.c.b16 %v1174, %v1173
        %v1291 = vpack.c.b16 %v1176, %v1175
        %v1292 = vpack.c.b16 %v1178, %v1177
        %v1293 = vpack.c.b16 %v1180, %v1179
        %v1294 = vpack.c.b16 %v1182, %v1181
        %v1295 = vpack.c.b16 %v1184, %v1183
        %v1296 = vpack.c.b16 %v1186, %v1185
        %v1297 = vpack.c.b16 %v1188, %v1187
        %v1298 = vpack.c.b16 %v1190, %v1189
        %v1299 = vpack.c.b16 %v1192, %v1191
        %v1300 = vpack.c.b16 %v1194, %v1193
        %v1301 = vpack.c.b16 %v1196, %v1195
        %v1302 = vpack.c.b16 %v1198, %v1197
        %v1303 = vpack.c.b16 %v1200, %v1199
        %v1304 = vpack.c.b16 %v1202, %v1201
        %v1305 = vpack.c.b16 %v1204, %v1203
        %v1306 = vpack.c.b16 %v1206, %v1205
        %v1307 = vpack.c.b16 %v1208, %v1207
        %v1308 = vpack.c.b16 %v1210, %v1209
        %v1309 = vpack.c.b16 %v1212, %v1211
        %v1310 = vpack.c.b16 %v1214, %v1213
        %v1311 = vpack.c.b16 %v1216, %v1215
        %v1312 = vpack.c.b16 %v1218, %v1217
        %v1313 = vpack.c.b16 %v1220, %v1219
        %v1314 = vpack.c.b16 %v1222, %v1221
        %v1315 = vpack.c.b16 %v1224, %v1223
        %v1316 = vpack.c.b16 %v1226, %v1225
        %v1317 = vpack.c.b16 %v1228, %v1227
        %v1318 = vpack.c.b16 %v1230, %v1229
        %v1319 = vpack.c.b16 %v1232, %v1231
        %v1320 = vpack.c.b16 %v1234, %v1233
        %v1321 = vpack.c.b16 %v1236, %v1235
        %v1322 = vpack.c.b16 %v1238, %v1237
        %v1323 = vpack.c.b16 %v1240, %v1239
        %v1324 = vpack.c.b16 %v1242, %v1241
        %v1325 = vpack.c.b16 %v1244, %v1243
        %v1326 = vpack.c.b16 %v1246, %v1245
        %v1327 = vpack.c.b16 %v1248, %v1247
        %v1328 = vpack.c.b16 %v1250, %v1249
        %v1329 = vpack.c.b16 %v1252, %v1251
        %v1330 = vpack.c.b16 %v1254, %v1253
        %v1331 = vpack.c.b16 %v1256, %v1255
        %v1332 = vpack.c.b16 %v1258, %v1257
        %v1333 = vpack.c.b16 %v1260, %v1259
        %v1334 = vpack.c.b16 %v1262, %v1261
        %1407 = vmatpush.bf16.msra.mxu0 %v1270
        %1408 = vmatpush.bf16.msra.mxu0 %v1269
        %1409 = vmatpush.bf16.msra.mxu0 %v1268
        %1410 = vmatpush.bf16.msra.mxu0 %v1267
        %1411 = vmatpush.bf16.msra.mxu0 %v1266
        %1412 = vmatpush.bf16.msra.mxu0 %v1265
        %1413 = vmatpush.bf16.msra.mxu0 %v1264
        %1414 = vmatpush.bf16.msra.mxu0 %v1263
        %1415 = vmatmul.bf16.gmra.mxu0 %v939
        %v1416 = vpop.f32.mrf.mxu0
        %v1417 = vadd.f32 %v881, %v1416
        %v1418 = vpop.f32.mrf.mxu0
        %v1419 = vadd.f32 %v881, %v1418
        %1420 = vmatmul.bf16.gmra.mxu0 %v948
        %v1421 = vpop.f32.mrf.mxu0
        %v1422 = vadd.f32 %v881, %v1421
        %v1423 = vpop.f32.mrf.mxu0
        %v1424 = vadd.f32 %v881, %v1423
        %1425 = vdwg.mxu0
        %1426 = vmatpush.bf16.msra.mxu0 %v1278
        %1427 = vmatpush.bf16.msra.mxu0 %v1277
        %1428 = vmatpush.bf16.msra.mxu0 %v1276
        %1429 = vmatpush.bf16.msra.mxu0 %v1275
        %1430 = vmatpush.bf16.msra.mxu0 %v1274
        %1431 = vmatpush.bf16.msra.mxu0 %v1273
        %1432 = vmatpush.bf16.msra.mxu0 %v1272
        %1433 = vmatpush.bf16.msra.mxu0 %v1271
        %1434 = vmatmul.bf16.gmra.mxu0 %v940
        %v1435 = vpop.f32.mrf.mxu0
        %v1436 = vadd.f32 %v1417, %v1435
        %v1437 = vpop.f32.mrf.mxu0
        %v1438 = vadd.f32 %v1419, %v1437
        %1439 = vmatmul.bf16.gmra.mxu0 %v949
        %v1440 = vpop.f32.mrf.mxu0
        %v1441 = vadd.f32 %v1422, %v1440
        %v1442 = vpop.f32.mrf.mxu0
        %v1443 = vadd.f32 %v1424, %v1442
        %1444 = vdwg.mxu0
        %1445 = vmatpush.bf16.msra.mxu0 %v1286
        %1446 = vmatpush.bf16.msra.mxu0 %v1285
        %1447 = vmatpush.bf16.msra.mxu0 %v1284
        %1448 = vmatpush.bf16.msra.mxu0 %v1283
        %1449 = vmatpush.bf16.msra.mxu0 %v1282
        %1450 = vmatpush.bf16.msra.mxu0 %v1281
        %1451 = vmatpush.bf16.msra.mxu0 %v1280
        %1452 = vmatpush.bf16.msra.mxu0 %v1279
        %1453 = vmatmul.bf16.gmra.mxu0 %v941
        %v1454 = vpop.f32.mrf.mxu0
        %v1455 = vadd.f32 %v1436, %v1454
        %v1456 = vpop.f32.mrf.mxu0
        %v1457 = vadd.f32 %v1438, %v1456
        %1458 = vmatmul.bf16.gmra.mxu0 %v950
        %v1459 = vpop.f32.mrf.mxu0
        %v1460 = vadd.f32 %v1441, %v1459
        %v1461 = vpop.f32.mrf.mxu0
        %v1462 = vadd.f32 %v1443, %v1461
        %1463 = vdwg.mxu0
        %1464 = vmatpush.bf16.msra.mxu0 %v1294
        %1465 = vmatpush.bf16.msra.mxu0 %v1293
        %1466 = vmatpush.bf16.msra.mxu0 %v1292
        %1467 = vmatpush.bf16.msra.mxu0 %v1291
        %1468 = vmatpush.bf16.msra.mxu0 %v1290
        %1469 = vmatpush.bf16.msra.mxu0 %v1289
        %1470 = vmatpush.bf16.msra.mxu0 %v1288
        %1471 = vmatpush.bf16.msra.mxu0 %v1287
        %1472 = vmatmul.bf16.gmra.mxu0 %v942
        %v1473 = vpop.f32.mrf.mxu0
        %v1474 = vadd.f32 %v1455, %v1473
        %v1475 = vpop.f32.mrf.mxu0
        %v1476 = vadd.f32 %v1457, %v1475
        %1477 = vmatmul.bf16.gmra.mxu0 %v951
        %v1478 = vpop.f32.mrf.mxu0
        %v1479 = vadd.f32 %v1460, %v1478
        %v1480 = vpop.f32.mrf.mxu0
        %v1481 = vadd.f32 %v1462, %v1480
        %1482 = vdwg.mxu0
        %1483 = vmatpush.bf16.msra.mxu0 %v1302
        %1484 = vmatpush.bf16.msra.mxu0 %v1301
        %1485 = vmatpush.bf16.msra.mxu0 %v1300
        %1486 = vmatpush.bf16.msra.mxu0 %v1299
        %1487 = vmatpush.bf16.msra.mxu0 %v1298
        %1488 = vmatpush.bf16.msra.mxu0 %v1297
        %1489 = vmatpush.bf16.msra.mxu0 %v1296
        %1490 = vmatpush.bf16.msra.mxu0 %v1295
        %1491 = vmatmul.bf16.gmra.mxu0 %v943
        %v1492 = vpop.f32.mrf.mxu0
        %v1493 = vadd.f32 %v1474, %v1492
        %v1494 = vpop.f32.mrf.mxu0
        %v1495 = vadd.f32 %v1476, %v1494
        %1496 = vmatmul.bf16.gmra.mxu0 %v952
        %v1497 = vpop.f32.mrf.mxu0
        %v1498 = vadd.f32 %v1479, %v1497
        %v1499 = vpop.f32.mrf.mxu0
        %v1500 = vadd.f32 %v1481, %v1499
        %1501 = vdwg.mxu0
        %1502 = vmatpush.bf16.msra.mxu0 %v1310
        %1503 = vmatpush.bf16.msra.mxu0 %v1309
        %1504 = vmatpush.bf16.msra.mxu0 %v1308
        %1505 = vmatpush.bf16.msra.mxu0 %v1307
        %1506 = vmatpush.bf16.msra.mxu0 %v1306
        %1507 = vmatpush.bf16.msra.mxu0 %v1305
        %1508 = vmatpush.bf16.msra.mxu0 %v1304
        %1509 = vmatpush.bf16.msra.mxu0 %v1303
        %1510 = vmatmul.bf16.gmra.mxu0 %v944
        %v1511 = vpop.f32.mrf.mxu0
        %v1512 = vadd.f32 %v1493, %v1511
        %v1513 = vpop.f32.mrf.mxu0
        %v1514 = vadd.f32 %v1495, %v1513
        %1515 = vmatmul.bf16.gmra.mxu0 %v953
        %v1516 = vpop.f32.mrf.mxu0
        %v1517 = vadd.f32 %v1498, %v1516
        %v1518 = vpop.f32.mrf.mxu0
        %v1519 = vadd.f32 %v1500, %v1518
        %1520 = vdwg.mxu0
        %1521 = vmatpush.bf16.msra.mxu0 %v1318
        %1522 = vmatpush.bf16.msra.mxu0 %v1317
        %1523 = vmatpush.bf16.msra.mxu0 %v1316
        %1524 = vmatpush.bf16.msra.mxu0 %v1315
        %1525 = vmatpush.bf16.msra.mxu0 %v1314
        %1526 = vmatpush.bf16.msra.mxu0 %v1313
        %1527 = vmatpush.bf16.msra.mxu0 %v1312
        %1528 = vmatpush.bf16.msra.mxu0 %v1311
        %1529 = vmatmul.bf16.gmra.mxu0 %v945
        %v1530 = vpop.f32.mrf.mxu0
        %v1531 = vadd.f32 %v1512, %v1530
        %v1532 = vpop.f32.mrf.mxu0
        %v1533 = vadd.f32 %v1514, %v1532
        %1534 = vmatmul.bf16.gmra.mxu0 %v954
        %v1535 = vpop.f32.mrf.mxu0
        %v1536 = vadd.f32 %v1517, %v1535
        %v1537 = vpop.f32.mrf.mxu0
        %v1538 = vadd.f32 %v1519, %v1537
        %1539 = vdwg.mxu0
        %1540 = vmatpush.bf16.msra.mxu0 %v1326
        %1541 = vmatpush.bf16.msra.mxu0 %v1325
        %1542 = vmatpush.bf16.msra.mxu0 %v1324
        %1543 = vmatpush.bf16.msra.mxu0 %v1323
        %1544 = vmatpush.bf16.msra.mxu0 %v1322
        %1545 = vmatpush.bf16.msra.mxu0 %v1321
        %1546 = vmatpush.bf16.msra.mxu0 %v1320
        %1547 = vmatpush.bf16.msra.mxu0 %v1319
        %1548 = vmatmul.bf16.gmra.mxu0 %v946
        %v1549 = vpop.f32.mrf.mxu0
        %v1550 = vadd.f32 %v1531, %v1549
        %v1551 = vpop.f32.mrf.mxu0
        %v1552 = vadd.f32 %v1533, %v1551
        %1553 = vmatmul.bf16.gmra.mxu0 %v955
        %v1554 = vpop.f32.mrf.mxu0
        %v1555 = vadd.f32 %v1536, %v1554
        %v1556 = vpop.f32.mrf.mxu0
        %v1557 = vadd.f32 %v1538, %v1556
        %1558 = vdwg.mxu0
        %1559 = vmatpush.bf16.msra.mxu0 %v1334
        %1560 = vmatpush.bf16.msra.mxu0 %v1333
        %1561 = vmatpush.bf16.msra.mxu0 %v1332
        %1562 = vmatpush.bf16.msra.mxu0 %v1331
        %1563 = vmatpush.bf16.msra.mxu0 %v1330
        %1564 = vmatpush.bf16.msra.mxu0 %v1329
        %1565 = vmatpush.bf16.msra.mxu0 %v1328
        %1566 = vmatpush.bf16.msra.mxu0 %v1327
        %1567 = vmatmul.bf16.gmra.mxu0 %v947
        %v1568 = vpop.f32.mrf.mxu0
        %v1569 = vadd.f32 %v1550, %v1568
        %v1570 = vpop.f32.mrf.mxu0
        %v1571 = vadd.f32 %v1552, %v1570
        %1572 = vmatmul.bf16.gmra.mxu0 %v956
        %v1573 = vpop.f32.mrf.mxu0
        %v1574 = vadd.f32 %v1555, %v1573
        %v1575 = vpop.f32.mrf.mxu0
        %v1576 = vadd.f32 %v1557, %v1575
        %1577 = vdwg.mxu0
        %v1578 = vpack.c.bf16 %v1569, %v1569
        %v1579 = vpack.c.bf16 %v1571, %v1571
        %v1580 = vpack.c.bf16 %v1574, %v1574
        %v1581 = vpack.c.bf16 %v1576, %v1576
        %1582 = vst [vmem:[%s303] sm:$0xf] %v1578
        %1583 = vst [vmem:[%s303 + $0x4] sm:$0xf] %v1579
        %1584 = vst [vmem:[%s303 + $0x8] sm:$0xf] %v1580
        %1585 = vst [vmem:[%s303 + $0xc] sm:$0xf] %v1581
        %s1586 = sand.u32 %s161, 1
        %s1587 = scalar_lea.sflag [#allocation4], %s1586
        %s1588 = sand.u32 %s161, 1
        %s1589 = smul.addr %s1588, 16
        %s1590 = scalar_lea.vmem [#allocation3], %s1589
        // Predicated region
        $region37: #{tpu_custom_call.1} parent=35 // pred_check
          %p1591 = pneg %p171
        $region38: #{tpu_custom_call.1} parent=35 // pred_check_branch
          %1593 = sbr.rel (%p1591) target = $region40
        $region39: #{tpu_custom_call.1} parent=35 // pred_region
          %s1594 = smul.u32 4, %s25
          %1596 = vsyncadd %s1587, 0
          %s1597 = sadd.s32 %s23, %s1594
          %s1598 = smul.addr %s24, 8
          %s1599 = sadd.s32 %s1597, %s1598
          %s1600 = smul.addr %s1599, 4
          %s1601 = scalar_lea.hbm %s4, %s1600
          %s1602 = sshll.u32 %s1590, 4
          %s1603 = int_to_ptr.vmem [resolvable:$true] %s1602
          %s1604 = sshll.u32 %s1601, 4
          %s1605 = int_to_ptr.hbm [resolvable:$true] %s1604
          %1610 = dma.vmem_to_hbm [thread:$0]  %s1603, 256, %s1605, %s1587, 64, 64, 4
        $region40: #{tpu_custom_call.1} parent=35 // pred_fallthru
          _
      $region36: #{tpu_custom_call.1} parent=5 // pred_fallthru
        _
      %p1611 = scmp.le.s32.totalorder 2, %s13
      // Predicated region
      $region41: #{tpu_custom_call.1} parent=5 // pred_check
        %p1612 = pneg %p1611
      $region42: #{tpu_custom_call.1} parent=5 // pred_check_branch
        %1614 = sbr.rel (%p1612) target = $region44
      $region43: #{tpu_custom_call.1} parent=5 // pred_region
        %s1615 = ssub.s32 %s13, 2
        // Predicated region
        $region45: #{tpu_custom_call.1} parent=43 // pred_check
          %p1616 = pneg %p177
        $region46: #{tpu_custom_call.1} parent=43 // pred_check_branch
          %1618 = sbr.rel (%p1616) target = $region48
        $region47: #{tpu_custom_call.1} parent=43 // pred_region
          %s1619 = sand.u32 %s162, 1
          %s1620 = scalar_lea.sflag [#allocation4], %s1619
          %s1621 = sand.u32 %s162, 1
          %s1622 = smul.addr %s1621, 16
          %s1623 = scalar_lea.vmem [#allocation3], %s1622
          %1625 = dma.done %s1620, 256
        $region48: #{tpu_custom_call.1} parent=43 // pred_fallthru
          _
      $region44: #{tpu_custom_call.1} parent=5 // pred_fallthru
        _
    $region6: #{tpu_custom_call.1} parent=1 // loop_footer
      %s17 = sadd.s32 1, %s13
    $region7: #{tpu_custom_call.1} parent=1 // loop_footer_branch
      %12 = sbr.rel target = $region3
    $region8: #{tpu_custom_call.1} parent=1 // loop_exit
      _
    %1626 = vsyncpa [#allocation4], 1
    %s1627 = scalar_lea.sflag [#allocation4], 1
    %1628 = vsyncpa %s1627, 1

// kernel: tpu_custom_call.1
$region0: #{tpu_custom_call.1}
  #allocation0 [shape = 'u32[]', space=smem, size = 0x4, offset = 0x4, fixed_abs, tag = 'smem constant byte address 0x4 - core index']
  #allocation1 [shape = 'u32[72,128]{1,0:T(1,128)}', space=vmem, size = 0x9000, scoped, tag = 'internal scratch']
  #allocation2 [shape = 'bf16[32,1152]{1,0:T(8,128)(2,1)}', space=vmem, size = 0x12000, scoped, tag = 'scratch operand']
  %s0 = inlined_call_operand.vmem [shape: bf16[2,9,18,256], index: 0, kind: input, shape index: {}]
  %s1 = inlined_call_operand.vmem [shape: bf16[2,9,18,256], index: 1, kind: input, shape index: {}]
  %s2 = inlined_call_operand.vmem [shape: bf16[1152,128], index: 2, kind: input, shape index: {}]
  %s3 = inlined_call_operand.vmem [shape: f32[1,128], index: 3, kind: input, shape index: {}]
  %s4 = inlined_call_operand.hbm [shape: bf16[2,8,8,128], index: 4, kind: output, shape index: {}]
  %s5 = sld [smem:[#allocation0]]
  $region49: #{tpu_custom_call.1} parent=0
    _
  %s7 = ssub.s32 1, %s5
  %s8 = scalar_select 0, %s7, %s5
  $region1: #{tpu_custom_call.1} parent=0
    #allocation3 [shape = 'u8[16384]{0}', space=vmem, size = 0x4000, scoped, tag = 'output window, operand 0']
    #allocation4 [shape = 's32[2]{0}', space=sflag, size = 0x8, scoped, tag = 'scoped memory for tpu_custom_call.1']
    %9 = vsyncpa [#allocation4], 0
    %s10 = scalar_lea.sflag [#allocation4], 1
    %11 = vsyncpa %s10, 0
    loop: start=0, step=1, limit=6
    $region2: #{tpu_custom_call.1} parent=1 // loop_pre_header
      _
    $region3: #{tpu_custom_call.1} parent=1 // loop_header
      %s13 = sphi 0, %s17
      %p14 = scmp.ge.s32.totalorder %s13, 6
      %s20 = sphi 0, %s39
      %s21 = sphi 0, %s35
      %s22 = sphi 0, %s31
      %s23 = sphi 0, %s20
      %s24 = sphi 0, %s21
      %s25 = sphi 0, %s22
      %s26 = sphi 0, %s23
      %s27 = sphi 0, %s24
      %s28 = sphi 0, %s25
      %s44 = sphi 0, %s46
      %s47 = sphi 0, %s44
      %s48 = sphi 0, %s47
      %s64 = sphi 0, %s48
      %s76 = sphi 0, %s78
      %s79 = sphi 0, %s76
      %s80 = sphi 0, %s79
      %s96 = sphi 0, %s80
      %s102 = sphi 0, %s104
      %s105 = sphi 0, %s102
      %s106 = sphi 0, %s105
      %s122 = sphi 0, %s106
      %s128 = sphi 0, %s130
      %s131 = sphi 0, %s128
      %s132 = sphi 0, %s131
      %s148 = sphi 0, %s132
      %s158 = sphi 0, %s160
      %s161 = sphi 0, %s158
      %s162 = sphi 0, %s161
      %s178 = sphi 0, %s162
    $region4: #{tpu_custom_call.1} parent=1 // loop_header_branch
      %16 = sbr.rel (%p14) target = $region8
    $region5: #{tpu_custom_call.1} parent=1 // loop_body
      %s18 = ssub.s32 %s13, 1
      %s19 = ssub.s32 %s13, 2
      %s29 = sadd.s32 1, %s22
      %p30 = scmp.ge.s32.totalorder %s29, 2
      %s31 = scalar_select %p30, 0, %s29
      %s32 = sadd.s32 1, %s21
      %s33 = scalar_select %p30, %s32, %s21
      %p34 = scmp.ge.s32.totalorder %s33, 2
      %s35 = scalar_select %p34, 0, %s33
      %s36 = sadd.s32 1, %s20
      %s37 = scalar_select %p34, %s36, %s20
      %p38 = scmp.ge.s32.totalorder %s37, 1
      %s39 = scalar_select %p38, 0, %s37
      %s40 = ssub.s32 %s21, %s35
      %s41 = ssub.s32 %s22, %s31
      %s42 = sor.u32 %s40, %s41
      %p43 = scmp.eq.s32.totalorder %s42, 0
      %s45 = sadd.s32 %s44, 1
      %s46 = scalar_select %p43, %s44, %s45
      %p49 = pneg %p43
      %p50 = scmp.eq.s32.totalorder %s13, 3
      %p51 = por %p49, %p50
      %p52 = scmp.ne.s32.totalorder %s44, %s47
      %p53 = scmp.eq.s32.totalorder %s13, 0
      %p54 = por %p52, %p53
      %p55 = scmp.ne.s32.totalorder %s44, %s47
      %p56 = scmp.eq.s32.totalorder %s18, 3
      %p57 = por %p55, %p56
      %p58 = scmp.ne.s32.totalorder %s47, %s48
      %p59 = scmp.eq.s32.totalorder %s18, 0
      %p60 = por %p58, %p59
      %p61 = scmp.ne.s32.totalorder %s47, %s48
      %p62 = scmp.eq.s32.totalorder %s19, 3
      %p63 = por %p61, %p62
      %p65 = scmp.ne.s32.totalorder %s48, %s64
      %p66 = scmp.eq.s32.totalorder %s19, 0
      %p67 = por %p65, %p66
      %s68 = sadd.s32 %s22, 1
      %s69 = smul.u32 %s68, 4
      %s70 = sadd.s32 %s31, 1
      %s71 = smul.u32 %s70, 4
      %s72 = ssub.s32 %s21, %s35
      %s73 = ssub.s32 %s69, %s71
      %s74 = sor.u32 %s72, %s73
      %p75 = scmp.eq.s32.totalorder %s74, 0
      %s77 = sadd.s32 %s76, 1
      %s78 = scalar_select %p75, %s76, %s77
      %p81 = pneg %p75
      %p82 = scmp.eq.s32.totalorder %s13, 3
      %p83 = por %p81, %p82
      %p84 = scmp.ne.s32.totalorder %s76, %s79
      %p85 = scmp.eq.s32.totalorder %s13, 0
      %p86 = por %p84, %p85
      %p87 = scmp.ne.s32.totalorder %s76, %s79
      %p88 = scmp.eq.s32.totalorder %s18, 3
      %p89 = por %p87, %p88
      %p90 = scmp.ne.s32.totalorder %s79, %s80
      %p91 = scmp.eq.s32.totalorder %s18, 0
      %p92 = por %p90, %p91
      %p93 = scmp.ne.s32.totalorder %s79, %s80
      %p94 = scmp.eq.s32.totalorder %s19, 3
      %p95 = por %p93, %p94
      %p97 = scmp.ne.s32.totalorder %s80, %s96
      %p98 = scmp.eq.s32.totalorder %s19, 0
      %p99 = por %p97, %p98
      %s100 = ssub.s32 %s20, %s39
      %p101 = scmp.eq.s32.totalorder %s100, 0
      %s103 = sadd.s32 %s102, 1
      %s104 = scalar_select %p101, %s102, %s103
      %p107 = pneg %p101
      %p108 = scmp.eq.s32.totalorder %s13, 3
      %p109 = por %p107, %p108
      %p110 = scmp.ne.s32.totalorder %s102, %s105
      %p111 = scmp.eq.s32.totalorder %s13, 0
      %p112 = por %p110, %p111
      %p113 = scmp.ne.s32.totalorder %s102, %s105
      %p114 = scmp.eq.s32.totalorder %s18, 3
      %p115 = por %p113, %p114
      %p116 = scmp.ne.s32.totalorder %s105, %s106
      %p117 = scmp.eq.s32.totalorder %s18, 0
      %p118 = por %p116, %p117
      %p119 = scmp.ne.s32.totalorder %s105, %s106
      %p120 = scmp.eq.s32.totalorder %s19, 3
      %p121 = por %p119, %p120
      %p123 = scmp.ne.s32.totalorder %s106, %s122
      %p124 = scmp.eq.s32.totalorder %s19, 0
      %p125 = por %p123, %p124
      %s126 = ssub.s32 %s20, %s39
      %p127 = scmp.eq.s32.totalorder %s126, 0
      %s129 = sadd.s32 %s128, 1
      %s130 = scalar_select %p127, %s128, %s129
      %p133 = pneg %p127
      %p134 = scmp.eq.s32.totalorder %s13, 3
      %p135 = por %p133, %p134
      %p136 = scmp.ne.s32.totalorder %s128, %s131
      %p137 = scmp.eq.s32.totalorder %s13, 0
      %p138 = por %p136, %p137
      %p139 = scmp.ne.s32.totalorder %s128, %s131
      %p140 = scmp.eq.s32.totalorder %s18, 3
      %p141 = por %p139, %p140
      %p142 = scmp.ne.s32.totalorder %s131, %s132
      %p143 = scmp.eq.s32.totalorder %s18, 0
      %p144 = por %p142, %p143
      %p145 = scmp.ne.s32.totalorder %s131, %s132
      %p146 = scmp.eq.s32.totalorder %s19, 3
      %p147 = por %p145, %p146
      %p149 = scmp.ne.s32.totalorder %s132, %s148
      %p150 = scmp.eq.s32.totalorder %s19, 0
      %p151 = por %p149, %p150
      %s152 = ssub.s32 %s21, %s35
      %s153 = ssub.s32 %s22, %s31
      %s154 = sor.u32 %s152, %s153
      %s155 = ssub.s32 %s20, %s39
      %s156 = sor.u32 %s154, %s155
      %p157 = scmp.eq.s32.totalorder %s156, 0
      %s159 = sadd.s32 %s158, 1
      %s160 = scalar_select %p157, %s158, %s159
      %p163 = pneg %p157
      %p164 = scmp.eq.s32.totalorder %s13, 3
      %p165 = por %p163, %p164
      %p166 = scmp.ne.s32.totalorder %s158, %s161
      %p167 = scmp.eq.s32.totalorder %s13, 0
      %p168 = por %p166, %p167
      %p169 = scmp.ne.s32.totalorder %s158, %s161
      %p170 = scmp.eq.s32.totalorder %s18, 3
      %p171 = por %p169, %p170
      %p172 = scmp.ne.s32.totalorder %s161, %s162
      %p173 = scmp.eq.s32.totalorder %s18, 0
      %p174 = por %p172, %p173
      %p175 = scmp.ne.s32.totalorder %s161, %s162
      %p176 = scmp.eq.s32.totalorder %s19, 3
      %p177 = por %p175, %p176
      %p179 = scmp.ne.s32.totalorder %s162, %s178
      %p180 = scmp.eq.s32.totalorder %s19, 0
      %p181 = por %p179, %p180
      %p182 = scmp.le.s32.totalorder 1, %s13
      %p183 = scmp.lt.s32.totalorder %s13, 5
      %p184 = pnand %p182, %p183
      %p185 = pneg %p184
      // Predicated region
      $region9: #{tpu_custom_call.1} parent=5 // pred_check
        _
      $region10: #{tpu_custom_call.1} parent=5 // pred_check_branch
        %187 = sbr.rel (%p184) target = $region12
      $region11: #{tpu_custom_call.1} parent=5 // pred_region
        %s188 = ssub.s32 %s13, 1
        // Predicated region
        $region13: #{tpu_custom_call.1} parent=11 // pred_check
          %p189 = pneg %p118
        $region14: #{tpu_custom_call.1} parent=11 // pred_check_branch
          %191 = sbr.rel (%p189) target = $region16
        $region15: #{tpu_custom_call.1} parent=11 // pred_region
          %p192 = scmp.lt.s32.totalorder %s23, 0
          %s193 = scalar_select %p192, %s23, 0
          %s194 = smul.addr %s193, 4
          %s195 = scalar_lea.vmem %s2, %s194
        $region16: #{tpu_custom_call.1} parent=11 // pred_fallthru
          _
        // Predicated region
        $region17: #{tpu_custom_call.1} parent=11 // pred_check
          %p196 = pneg %p144
        $region18: #{tpu_custom_call.1} parent=11 // pred_check_branch
          %198 = sbr.rel (%p196) target = $region20
        $region19: #{tpu_custom_call.1} parent=11 // pred_region
          %p199 = scmp.lt.s32.totalorder %s23, 0
          %s200 = scalar_select %p199, %s23, 0
          %s201 = scalar_lea.vmem %s3, %s200
        $region20: #{tpu_custom_call.1} parent=11 // pred_fallthru
          _
      $region12: #{tpu_custom_call.1} parent=5 // pred_fallthru
        _
      %p202 = scmp.lt.s32.totalorder %s13, 4
      // Predicated region
      $region21: #{tpu_custom_call.1} parent=5 // pred_check
        %p203 = pneg %p202
      $region22: #{tpu_custom_call.1} parent=5 // pred_check_branch
        %205 = sbr.rel (%p203) target = $region24
      $region23: #{tpu_custom_call.1} parent=5 // pred_region
        // Predicated region
        $region25: #{tpu_custom_call.1} parent=23 // pred_check
          %p206 = pneg %p54
        $region26: #{tpu_custom_call.1} parent=23 // pred_check_branch
          %208 = sbr.rel (%p206) target = $region28
        $region27: #{tpu_custom_call.1} parent=23 // pred_region
          %s209 = smul.u32 4, %s22
          %s210 = ssub.s32 9, %s209
          %p211 = scmp.lt.s32.totalorder %s210, 4
          %s212 = scalar_select %p211, %s210, 4
          %s213 = smul.u32 4, %s212
          %s214 = smul.u32 %s213, 3
          %s215 = smul.u32 %s214, 2
          %p216 = scmp.lt.s32.totalorder %s21, 1
          %s217 = scalar_select %p216, %s21, 1
          %p218 = scmp.lt.s32.totalorder %s209, 8
          %s219 = scalar_select %p218, %s209, 8
          %s220 = smul.addr %s219, 6
          %s221 = smul.addr %s217, 54
          %s222 = sadd.s32 %s220, %s221
          %s223 = smul.addr %s222, 4
          %s224 = scalar_lea.vmem %s0, %s223
          %s225 = smul.u32 4, %s22
          %s226 = ssub.s32 9, %s225
          %p227 = scmp.lt.s32.totalorder %s226, 4
          %s228 = scalar_select %p227, %s226, 4
          %s229 = smul.u32 4, %s228
          %s230 = smul.u32 %s229, 3
          %s231 = smul.u32 %s230, 2
        $region28: #{tpu_custom_call.1} parent=23 // pred_fallthru
          _
        // Predicated region
        $region29: #{tpu_custom_call.1} parent=23 // pred_check
          %p232 = pneg %p86
        $region30: #{tpu_custom_call.1} parent=23 // pred_check_branch
          %234 = sbr.rel (%p232) target = $region32
        $region31: #{tpu_custom_call.1} parent=23 // pred_region
          %s235 = sadd.s32 %s22, 1
          %s236 = smul.u32 %s235, 4
          %p237 = scmp.lt.s32.totalorder %s21, 1
          %s238 = scalar_select %p237, %s21, 1
          %p239 = scmp.lt.s32.totalorder %s236, 8
          %s240 = scalar_select %p239, %s236, 8
          %s241 = smul.addr %s240, 6
          %s242 = smul.addr %s238, 54
          %s243 = sadd.s32 %s241, %s242
          %s244 = smul.addr %s243, 4
          %s245 = scalar_lea.vmem %s1, %s244
          %s246 = sadd.s32 %s22, 1
          %s247 = smul.u32 %s246, 4
        $region32: #{tpu_custom_call.1} parent=23 // pred_fallthru
          _
      $region24: #{tpu_custom_call.1} parent=5 // pred_fallthru
        _
      %p248 = scmp.le.s32.totalorder 1, %s13
      %p249 = scmp.lt.s32.totalorder %s13, 5
      %p250 = pnand %p248, %p249
      %p251 = pneg %p250
      // Predicated region
      $region33: #{tpu_custom_call.1} parent=5 // pred_check
        _
      $region34: #{tpu_custom_call.1} parent=5 // pred_check_branch
        %253 = sbr.rel (%p250) target = $region36
      $region35: #{tpu_custom_call.1} parent=5 // pred_region
        %s254 = ssub.s32 %s13, 1
        %s255 = smul.u32 4, %s25
        %s256 = ssub.s32 9, %s255
        %p257 = scmp.lt.s32.totalorder %s256, 4
        %s258 = scalar_select %p257, %s256, 4
        %s259 = smul.u32 4, %s258
        %s260 = smul.u32 %s259, 3
        %s261 = smul.u32 %s260, 2
        %p262 = scmp.lt.s32.totalorder %s24, 1
        %s263 = scalar_select %p262, %s24, 1
        %p264 = scmp.lt.s32.totalorder %s255, 8
        %s265 = scalar_select %p264, %s255, 8
        %s266 = smul.addr %s265, 6
        %s267 = smul.addr %s263, 54
        %s268 = sadd.s32 %s266, %s267
        %s269 = smul.addr %s268, 4
        %s270 = scalar_lea.vmem %s0, %s269
        %p271 = pneg %p60
        %p272 = pneg %p57
        %s273 = sadd.s32 %s25, 1
        %s274 = smul.u32 %s273, 4
        %p275 = scmp.lt.s32.totalorder %s24, 1
        %s276 = scalar_select %p275, %s24, 1
        %p277 = scmp.lt.s32.totalorder %s274, 8
        %s278 = scalar_select %p277, %s274, 8
        %s279 = smul.addr %s278, 6
        %s280 = smul.addr %s276, 54
        %s281 = sadd.s32 %s279, %s280
        %s282 = smul.addr %s281, 4
        %s283 = scalar_lea.vmem %s1, %s282
        %p284 = pneg %p92
        %p285 = pneg %p89
        %p286 = scmp.lt.s32.totalorder %s23, 0
        %s287 = scalar_select %p286, %s23, 0
        %s288 = smul.addr %s287, 4
        %s289 = scalar_lea.vmem %s2, %s288
        %p290 = pneg %p118
        %p291 = pneg %p115
        %p292 = scmp.lt.s32.totalorder %s23, 0
        %s293 = scalar_select %p292, %s23, 0
        %s294 = scalar_lea.vmem %s3, %s293
        %p295 = pneg %p144
        %p296 = pneg %p141
        %p297 = pneg %p174
        %p298 = pneg %p171
        %s299 = sand.u32 %s161, 1
        %s300 = scalar_lea.sflag [#allocation4], %s299
        %s301 = sand.u32 %s161, 1
        %s302 = smul.addr %s301, 16
        %s303 = scalar_lea.vmem [#allocation3], %s302
        %s304 = smul.u32 4, %s25
        %s305 = ssub.s32 9, %s304
        %p306 = scmp.lt.s32.totalorder %s305, 4
        %s307 = scalar_select %p306, %s305, 4
        %s308 = smul.u32 4, %s307
        %s309 = smul.u32 %s308, 3
        %s310 = smul.u32 %s309, 2
        %p311 = scmp.lt.s32.totalorder %s24, 1
        %s312 = scalar_select %p311, %s24, 1
        %p313 = scmp.lt.s32.totalorder %s304, 8
        %s314 = scalar_select %p313, %s304, 8
        %s315 = smul.addr %s314, 6
        %s316 = smul.addr %s312, 54
        %s317 = sadd.s32 %s315, %s316
        %s318 = smul.addr %s317, 4
        %s319 = scalar_lea.vmem %s0, %s318
        %s320 = smul.u32 4, %s25
        %s321 = ssub.s32 9, %s320
        %p322 = scmp.lt.s32.totalorder %s321, 4
        %s323 = scalar_select %p322, %s321, 4
        %s324 = smul.u32 4, %s323
        %s325 = smul.u32 %s324, 3
        %s326 = smul.u32 %s325, 2
        %s327 = sadd.s32 %s25, 1
        %s328 = smul.u32 %s327, 4
        %p329 = scmp.lt.s32.totalorder %s24, 1
        %s330 = scalar_select %p329, %s24, 1
        %p331 = scmp.lt.s32.totalorder %s328, 8
        %s332 = scalar_select %p331, %s328, 8
        %s333 = smul.addr %s332, 6
        %s334 = smul.addr %s330, 54
        %s335 = sadd.s32 %s333, %s334
        %s336 = smul.addr %s335, 4
        %s337 = scalar_lea.vmem %s1, %s336
        %s338 = sadd.s32 %s25, 1
        %s339 = smul.u32 %s338, 4
        %p340 = scmp.lt.s32.totalorder %s23, 0
        %s341 = scalar_select %p340, %s23, 0
        %s342 = smul.addr %s341, 4
        %s343 = scalar_lea.vmem %s2, %s342
        %p344 = scmp.lt.s32.totalorder %s23, 0
        %s345 = scalar_select %p344, %s23, 0
        %s346 = scalar_lea.vmem %s3, %s345
        %s347 = smul.u32 4, %s25
        %v348 = vld [vmem:[%s319] sm:$0xf]
        %v349 = vld [vmem:[%s319 + $0x18] sm:$0xf]
        %v350 = vld [vmem:[%s319 + $0x30] sm:$0xf]
        %v351 = vld [vmem:[%s319 + $0x48] sm:$0xf]
        %352 = vst [vmem:[#allocation2] sm:$0xf] %v348
        %353 = vst [vmem:[#allocation2 + $0x24] sm:$0xf] %v349
        %354 = vst [vmem:[#allocation2 + $0x48] sm:$0xf] %v350
        %355 = vst [vmem:[#allocation2 + $0x6c] sm:$0xf] %v351
        %v356 = vld [vmem:[%s319 + $0x4] sm:$0xf]
        %v357 = vld [vmem:[%s319 + $0x1c] sm:$0xf]
        %v358 = vld [vmem:[%s319 + $0x34] sm:$0xf]
        %v359 = vld [vmem:[%s319 + $0x4c] sm:$0xf]
        %360 = vst [vmem:[#allocation2 + $0x4] sm:$0xf] %v356
        %361 = vst [vmem:[#allocation2 + $0x28] sm:$0xf] %v357
        %362 = vst [vmem:[#allocation2 + $0x4c] sm:$0xf] %v358
        %363 = vst [vmem:[#allocation2 + $0x70] sm:$0xf] %v359
        %v364 = vld [vmem:[%s319] sm:$0xf]
        %v365 = vld [vmem:[%s319 + $0x8] sm:$0x1]
        %v366 = vld [vmem:[%s319 + $0x18] sm:$0xf]
        %v367 = vld [vmem:[%s319 + $0x20] sm:$0x1]
        %v368 = vld [vmem:[%s319 + $0x30] sm:$0xf]
        %v369 = vld [vmem:[%s319 + $0x38] sm:$0x1]
        %v370 = vld [vmem:[%s319 + $0x48] sm:$0xf]
        %v371 = vld [vmem:[%s319 + $0x50] sm:$0x1]
        %vm372 = vsmask.f32 3328
        %vm373 = vsmask.f32 7440
        %vm374 = vmor %vm372, %vm373
        %v376 = vshrl.u32 %v364, 16
        %v378 = vrot.slane %v376, 4
        %v379 = vshll.u32 %v364, 16
        %v381 = vrot.slane %v379, 5
        %v382 = vor.u32 %v378, %v381
        %v383 = vrot.slane %v382, 4
        %v385 = vshll.u32 %v365, 16
        %v387 = vrot.slane %v385, 5
        %v388 = vsel %vm374, %v383, %v387
        %v390 = vshrl.u32 %v366, 16
        %v392 = vrot.slane %v390, 4
        %v393 = vshll.u32 %v366, 16
        %v395 = vrot.slane %v393, 5
        %v396 = vor.u32 %v392, %v395
        %v397 = vrot.slane %v396, 4
        %v399 = vshll.u32 %v367, 16
        %v401 = vrot.slane %v399, 5
        %v402 = vsel %vm374, %v397, %v401
        %v404 = vshrl.u32 %v368, 16
        %v406 = vrot.slane %v404, 4
        %v407 = vshll.u32 %v368, 16
        %v409 = vrot.slane %v407, 5
        %v410 = vor.u32 %v406, %v409
        %v411 = vrot.slane %v410, 4
        %v413 = vshll.u32 %v369, 16
        %v415 = vrot.slane %v413, 5
        %v416 = vsel %vm374, %v411, %v415
        %v418 = vshrl.u32 %v370, 16
        %v420 = vrot.slane %v418, 4
        %v421 = vshll.u32 %v370, 16
        %v423 = vrot.slane %v421, 5
        %v424 = vor.u32 %v420, %v423
        %v425 = vrot.slane %v424, 4
        %v427 = vshll.u32 %v371, 16
        %v429 = vrot.slane %v427, 5
        %v430 = vsel %vm374, %v425, %v429
        %435 = vst [vmem:[#allocation2 + $0x8] sm:$0xf] %v388
        %436 = vst [vmem:[#allocation2 + $0x2c] sm:$0xf] %v402
        %437 = vst [vmem:[#allocation2 + $0x50] sm:$0xf] %v416
        %438 = vst [vmem:[#allocation2 + $0x74] sm:$0xf] %v430
        %v439 = vld [vmem:[%s319 + $0x8] sm:$0xf]
        %v440 = vld [vmem:[%s319 + $0x10] sm:$0x1]
        %v441 = vld [vmem:[%s319 + $0x20] sm:$0xf]
        %v442 = vld [vmem:[%s319 + $0x28] sm:$0x1]
        %v443 = vld [vmem:[%s319 + $0x38] sm:$0xf]
        %v444 = vld [vmem:[%s319 + $0x40] sm:$0x1]
        %v445 = vld [vmem:[%s319 + $0x50] sm:$0xf]
        %v446 = vld [vmem:[%s319 + $0x58] sm:$0x1]
        %v448 = vshrl.u32 %v439, 16
        %v450 = vrot.slane %v448, 4
        %v451 = vshll.u32 %v439, 16
        %v453 = vrot.slane %v451, 5
        %v454 = vor.u32 %v450, %v453
        %v455 = vrot.slane %v454, 4
        %v457 = vshll.u32 %v440, 16
        %v459 = vrot.slane %v457, 5
        %v460 = vsel %vm374, %v455, %v459
        %v462 = vshrl.u32 %v441, 16
        %v464 = vrot.slane %v462, 4
        %v465 = vshll.u32 %v441, 16
        %v467 = vrot.slane %v465, 5
        %v468 = vor.u32 %v464, %v467
        %v469 = vrot.slane %v468, 4
        %v471 = vshll.u32 %v442, 16
        %v473 = vrot.slane %v471, 5
        %v474 = vsel %vm374, %v469, %v473
        %v476 = vshrl.u32 %v443, 16
        %v478 = vrot.slane %v476, 4
        %v479 = vshll.u32 %v443, 16
        %v481 = vrot.slane %v479, 5
        %v482 = vor.u32 %v478, %v481
        %v483 = vrot.slane %v482, 4
        %v485 = vshll.u32 %v444, 16
        %v487 = vrot.slane %v485, 5
        %v488 = vsel %vm374, %v483, %v487
        %v490 = vshrl.u32 %v445, 16
        %v492 = vrot.slane %v490, 4
        %v493 = vshll.u32 %v445, 16
        %v495 = vrot.slane %v493, 5
        %v496 = vor.u32 %v492, %v495
        %v497 = vrot.slane %v496, 4
        %v499 = vshll.u32 %v446, 16
        %v501 = vrot.slane %v499, 5
        %v502 = vsel %vm374, %v497, %v501
        %507 = vst [vmem:[#allocation2 + $0xc] sm:$0xf] %v460
        %508 = vst [vmem:[#allocation2 + $0x30] sm:$0xf] %v474
        %509 = vst [vmem:[#allocation2 + $0x54] sm:$0xf] %v488
        %510 = vst [vmem:[#allocation2 + $0x78] sm:$0xf] %v502
        %v511 = vld [vmem:[%s319 + $0xc] sm:$0xf]
        %v512 = vld [vmem:[%s319 + $0x14] sm:$0x1]
        %v513 = vld [vmem:[%s319 + $0x24] sm:$0xf]
        %v514 = vld [vmem:[%s319 + $0x2c] sm:$0x1]
        %v515 = vld [vmem:[%s319 + $0x3c] sm:$0xf]
        %v516 = vld [vmem:[%s319 + $0x44] sm:$0x1]
        %v517 = vld [vmem:[%s319 + $0x54] sm:$0xf]
        %v518 = vld [vmem:[%s319 + $0x5c] sm:$0x1]
        %v520 = vshrl.u32 %v511, 16
        %v522 = vrot.slane %v520, 4
        %v523 = vshll.u32 %v511, 16
        %v525 = vrot.slane %v523, 5
        %v526 = vor.u32 %v522, %v525
        %v527 = vrot.slane %v526, 4
        %v529 = vshll.u32 %v512, 16
        %v531 = vrot.slane %v529, 5
        %v532 = vsel %vm374, %v527, %v531
        %v534 = vshrl.u32 %v513, 16
        %v536 = vrot.slane %v534, 4
        %v537 = vshll.u32 %v513, 16
        %v539 = vrot.slane %v537, 5
        %v540 = vor.u32 %v536, %v539
        %v541 = vrot.slane %v540, 4
        %v543 = vshll.u32 %v514, 16
        %v545 = vrot.slane %v543, 5
        %v546 = vsel %vm374, %v541, %v545
        %v548 = vshrl.u32 %v515, 16
        %v550 = vrot.slane %v548, 4
        %v551 = vshll.u32 %v515, 16
        %v553 = vrot.slane %v551, 5
        %v554 = vor.u32 %v550, %v553
        %v555 = vrot.slane %v554, 4
        %v557 = vshll.u32 %v516, 16
        %v559 = vrot.slane %v557, 5
        %v560 = vsel %vm374, %v555, %v559
        %v562 = vshrl.u32 %v517, 16
        %v564 = vrot.slane %v562, 4
        %v565 = vshll.u32 %v517, 16
        %v567 = vrot.slane %v565, 5
        %v568 = vor.u32 %v564, %v567
        %v569 = vrot.slane %v568, 4
        %v571 = vshll.u32 %v518, 16
        %v573 = vrot.slane %v571, 5
        %v574 = vsel %vm374, %v569, %v573
        %579 = vst [vmem:[#allocation2 + $0x10] sm:$0xf] %v532
        %580 = vst [vmem:[#allocation2 + $0x34] sm:$0xf] %v546
        %581 = vst [vmem:[#allocation2 + $0x58] sm:$0xf] %v560
        %582 = vst [vmem:[#allocation2 + $0x7c] sm:$0xf] %v574
        %v583 = vld [vmem:[%s319 + $0x8] sm:$0xe]
        %v584 = vld [vmem:[%s319 + $0x10] sm:$0x1]
        %v585 = vld [vmem:[%s319 + $0x20] sm:$0xe]
        %v586 = vld [vmem:[%s319 + $0x28] sm:$0x1]
        %v587 = vld [vmem:[%s319 + $0x38] sm:$0xe]
        %v588 = vld [vmem:[%s319 + $0x40] sm:$0x1]
        %v589 = vld [vmem:[%s319 + $0x50] sm:$0xe]
        %v590 = vld [vmem:[%s319 + $0x58] sm:$0x1]
        %vm599 = vcmask 1042432
        %vm600 = vcmask 1046532
        %vm601 = vmor %vm599, %vm600
        %v602 = vrot.slane %v583, 5
        %v603 = vrot.slane %v602, 4
        %v604 = vrot.slane %v584, 5
        %v605 = vsel %vm601, %v603, %v604
        %v606 = vrot.slane %v585, 5
        %v607 = vrot.slane %v606, 4
        %v608 = vrot.slane %v586, 5
        %v609 = vsel %vm601, %v607, %v608
        %v610 = vrot.slane %v587, 5
        %v611 = vrot.slane %v610, 4
        %v612 = vrot.slane %v588, 5
        %v613 = vsel %vm601, %v611, %v612
        %v614 = vrot.slane %v589, 5
        %v615 = vrot.slane %v614, 4
        %v616 = vrot.slane %v590, 5
        %v617 = vsel %vm601, %v615, %v616
        %622 = vst [vmem:[#allocation2 + $0x14] sm:$0xf] %v605
        %623 = vst [vmem:[#allocation2 + $0x38] sm:$0xf] %v609
        %624 = vst [vmem:[#allocation2 + $0x5c] sm:$0xf] %v613
        %625 = vst [vmem:[#allocation2 + $0x80] sm:$0xf] %v617
        %s626 = scalar_lea.vmem %s319, 24
        %v627 = vld [vmem:[%s626] sm:$0xf]
        %v628 = vld [vmem:[%s626 + $0x18] sm:$0xf]
        %v629 = vld [vmem:[%s626 + $0x30] sm:$0xf]
        %630 = vst [vmem:[#allocation2 + $0x18] sm:$0xf] %v627
        %631 = vst [vmem:[#allocation2 + $0x3c] sm:$0xf] %v628
        %632 = vst [vmem:[#allocation2 + $0x60] sm:$0xf] %v629
        %v633 = vld [vmem:[%s337] sm:$0xf]
        %634 = vst [vmem:[#allocation2 + $0x84] sm:$0xf] %v633
        %v635 = vld [vmem:[%s626 + $0x4] sm:$0xf]
        %v636 = vld [vmem:[%s626 + $0x1c] sm:$0xf]
        %v637 = vld [vmem:[%s626 + $0x34] sm:$0xf]
        %638 = vst [vmem:[#allocation2 + $0x1c] sm:$0xf] %v635
        %639 = vst [vmem:[#allocation2 + $0x40] sm:$0xf] %v636
        %640 = vst [vmem:[#allocation2 + $0x64] sm:$0xf] %v637
        %v641 = vld [vmem:[%s337 + $0x4] sm:$0xf]
        %642 = vst [vmem:[#allocation2 + $0x88] sm:$0xf] %v641
        %v643 = vld [vmem:[%s626] sm:$0xf]
        %v644 = vld [vmem:[%s626 + $0x8] sm:$0x1]
        %v645 = vld [vmem:[%s626 + $0x18] sm:$0xf]
        %v646 = vld [vmem:[%s626 + $0x20] sm:$0x1]
        %v647 = vld [vmem:[%s626 + $0x30] sm:$0xf]
        %v648 = vld [vmem:[%s626 + $0x38] sm:$0x1]
        %v650 = vshrl.u32 %v643, 16
        %v652 = vrot.slane %v650, 4
        %v653 = vshll.u32 %v643, 16
        %v655 = vrot.slane %v653, 5
        %v656 = vor.u32 %v652, %v655
        %v657 = vrot.slane %v656, 4
        %v659 = vshll.u32 %v644, 16
        %v661 = vrot.slane %v659, 5
        %v662 = vsel %vm374, %v657, %v661
        %v664 = vshrl.u32 %v645, 16
        %v666 = vrot.slane %v664, 4
        %v667 = vshll.u32 %v645, 16
        %v669 = vrot.slane %v667, 5
        %v670 = vor.u32 %v666, %v669
        %v671 = vrot.slane %v670, 4
        %v673 = vshll.u32 %v646, 16
        %v675 = vrot.slane %v673, 5
        %v676 = vsel %vm374, %v671, %v675
        %v678 = vshrl.u32 %v647, 16
        %v680 = vrot.slane %v678, 4
        %v681 = vshll.u32 %v647, 16
        %v683 = vrot.slane %v681, 5
        %v684 = vor.u32 %v680, %v683
        %v685 = vrot.slane %v684, 4
        %v687 = vshll.u32 %v648, 16
        %v689 = vrot.slane %v687, 5
        %v690 = vsel %vm374, %v685, %v689
        %694 = vst [vmem:[#allocation2 + $0x20] sm:$0xf] %v662
        %695 = vst [vmem:[#allocation2 + $0x44] sm:$0xf] %v676
        %696 = vst [vmem:[#allocation2 + $0x68] sm:$0xf] %v690
        %v697 = vld [vmem:[%s337] sm:$0xf]
        %v698 = vld [vmem:[%s337 + $0x8] sm:$0x1]
        %v700 = vshrl.u32 %v697, 16
        %v702 = vrot.slane %v700, 4
        %v703 = vshll.u32 %v697, 16
        %v705 = vrot.slane %v703, 5
        %v706 = vor.u32 %v702, %v705
        %v707 = vrot.slane %v706, 4
        %v709 = vshll.u32 %v698, 16
        %v711 = vrot.slane %v709, 5
        %v712 = vsel %vm374, %v707, %v711
        %714 = vst [vmem:[#allocation2 + $0x8c] sm:$0xf] %v712
        %v715 = vld [vmem:[#allocation2] sm:$0xff]
        %v716 = vld [vmem:[#allocation2 + $0x8] sm:$0xff]
        %v717 = vld [vmem:[#allocation2 + $0x10] sm:$0xff]
        %v718 = vld [vmem:[#allocation2 + $0x18] sm:$0xff]
        %v719 = vld [vmem:[#allocation2 + $0x20] sm:$0xf]
        %v720 = vld [vmem:[#allocation2 + $0x24] sm:$0xff]
        %v721 = vld [vmem:[#allocation2 + $0x2c] sm:$0xff]
        %v722 = vld [vmem:[#allocation2 + $0x34] sm:$0xff]
        %v723 = vld [vmem:[#allocation2 + $0x3c] sm:$0xff]
        %v724 = vld [vmem:[#allocation2 + $0x44] sm:$0xf]
        %v725 = vld [vmem:[#allocation2 + $0x48] sm:$0xff]
        %v726 = vld [vmem:[#allocation2 + $0x50] sm:$0xff]
        %v727 = vld [vmem:[#allocation2 + $0x58] sm:$0xff]
        %v728 = vld [vmem:[#allocation2 + $0x60] sm:$0xff]
        %v729 = vld [vmem:[#allocation2 + $0x68] sm:$0xf]
        %v730 = vld [vmem:[#allocation2 + $0x6c] sm:$0xff]
        %v731 = vld [vmem:[#allocation2 + $0x74] sm:$0xff]
        %v732 = vld [vmem:[#allocation2 + $0x7c] sm:$0xff]
        %v733 = vld [vmem:[#allocation2 + $0x84] sm:$0xff]
        %v734 = vld [vmem:[#allocation2 + $0x8c] sm:$0xf]
        %v735 = vld [vmem:[%s343] sm:$0xf]
        %v736 = vld [vmem:[%s343 + $0x4] sm:$0xf]
        %v737 = vld [vmem:[%s343 + $0x8] sm:$0xf]
        %v738 = vld [vmem:[%s343 + $0xc] sm:$0xf]
        %v739 = vld [vmem:[%s343 + $0x10] sm:$0xf]
        %v740 = vld [vmem:[%s343 + $0x14] sm:$0xf]
        %v741 = vld [vmem:[%s343 + $0x18] sm:$0xf]
        %v742 = vld [vmem:[%s343 + $0x1c] sm:$0xf]
        %v743 = vld [vmem:[%s343 + $0x20] sm:$0xf]
        %v744 = vld [vmem:[%s343 + $0x24] sm:$0xf]
        %v745 = vld [vmem:[%s343 + $0x28] sm:$0xf]
        %v746 = vld [vmem:[%s343 + $0x2c] sm:$0xf]
        %v747 = vld [vmem:[%s343 + $0x30] sm:$0xf]
        %v748 = vld [vmem:[%s343 + $0x34] sm:$0xf]
        %v749 = vld [vmem:[%s343 + $0x38] sm:$0xf]
        %v750 = vld [vmem:[%s343 + $0x3c] sm:$0xf]
        %v751 = vld [vmem:[%s343 + $0x40] sm:$0xf]
        %v752 = vld [vmem:[%s343 + $0x44] sm:$0xf]
        %v753 = vld [vmem:[%s343 + $0x48] sm:$0xf]
        %v754 = vld [vmem:[%s343 + $0x4c] sm:$0xf]
        %v755 = vld [vmem:[%s343 + $0x50] sm:$0xf]
        %v756 = vld [vmem:[%s343 + $0x54] sm:$0xf]
        %v757 = vld [vmem:[%s343 + $0x58] sm:$0xf]
        %v758 = vld [vmem:[%s343 + $0x5c] sm:$0xf]
        %v759 = vld [vmem:[%s343 + $0x60] sm:$0xf]
        %v760 = vld [vmem:[%s343 + $0x64] sm:$0xf]
        %v761 = vld [vmem:[%s343 + $0x68] sm:$0xf]
        %v762 = vld [vmem:[%s343 + $0x6c] sm:$0xf]
        %v763 = vld [vmem:[%s343 + $0x70] sm:$0xf]
        %v764 = vld [vmem:[%s343 + $0x74] sm:$0xf]
        %v765 = vld [vmem:[%s343 + $0x78] sm:$0xf]
        %v766 = vld [vmem:[%s343 + $0x7c] sm:$0xf]
        %v767 = vld [vmem:[%s343 + $0x80] sm:$0xf]
        %v768 = vld [vmem:[%s343 + $0x84] sm:$0xf]
        %v769 = vld [vmem:[%s343 + $0x88] sm:$0xf]
        %v770 = vld [vmem:[%s343 + $0x8c] sm:$0xf]
        %v771 = vld [vmem:[%s343 + $0x90] sm:$0xf]
        %v772 = vld [vmem:[%s343 + $0x94] sm:$0xf]
        %v773 = vld [vmem:[%s343 + $0x98] sm:$0xf]
        %v774 = vld [vmem:[%s343 + $0x9c] sm:$0xf]
        %v775 = vld [vmem:[%s343 + $0xa0] sm:$0xf]
        %v776 = vld [vmem:[%s343 + $0xa4] sm:$0xf]
        %v777 = vld [vmem:[%s343 + $0xa8] sm:$0xf]
        %v778 = vld [vmem:[%s343 + $0xac] sm:$0xf]
        %v779 = vld [vmem:[%s343 + $0xb0] sm:$0xf]
        %v780 = vld [vmem:[%s343 + $0xb4] sm:$0xf]
        %v781 = vld [vmem:[%s343 + $0xb8] sm:$0xf]
        %v782 = vld [vmem:[%s343 + $0xbc] sm:$0xf]
        %v783 = vld [vmem:[%s343 + $0xc0] sm:$0xf]
        %v784 = vld [vmem:[%s343 + $0xc4] sm:$0xf]
        %v785 = vld [vmem:[%s343 + $0xc8] sm:$0xf]
        %v786 = vld [vmem:[%s343 + $0xcc] sm:$0xf]
        %v787 = vld [vmem:[%s343 + $0xd0] sm:$0xf]
        %v788 = vld [vmem:[%s343 + $0xd4] sm:$0xf]
        %v789 = vld [vmem:[%s343 + $0xd8] sm:$0xf]
        %v790 = vld [vmem:[%s343 + $0xdc] sm:$0xf]
        %v791 = vld [vmem:[%s343 + $0xe0] sm:$0xf]
        %v792 = vld [vmem:[%s343 + $0xe4] sm:$0xf]
        %v793 = vld [vmem:[%s343 + $0xe8] sm:$0xf]
        %v794 = vld [vmem:[%s343 + $0xec] sm:$0xf]
        %v795 = vld [vmem:[%s343 + $0xf0] sm:$0xf]
        %v796 = vld [vmem:[%s343 + $0xf4] sm:$0xf]
        %v797 = vld [vmem:[%s343 + $0xf8] sm:$0xf]
        %v798 = vld [vmem:[%s343 + $0xfc] sm:$0xf]
        %v799 = vld [vmem:[%s343 + $0x100] sm:$0xf]
        %v800 = vld [vmem:[%s343 + $0x104] sm:$0xf]
        %v801 = vld [vmem:[%s343 + $0x108] sm:$0xf]
        %v802 = vld [vmem:[%s343 + $0x10c] sm:$0xf]
        %v803 = vld [vmem:[%s343 + $0x110] sm:$0xf]
        %v804 = vld [vmem:[%s343 + $0x114] sm:$0xf]
        %v805 = vld [vmem:[%s343 + $0x118] sm:$0xf]
        %v806 = vld [vmem:[%s343 + $0x11c] sm:$0xf]
        %v807 = vld [vmem:[%s343 + $0x120] sm:$0xf]
        %v808 = vld [vmem:[%s343 + $0x124] sm:$0xf]
        %v809 = vld [vmem:[%s343 + $0x128] sm:$0xf]
        %v810 = vld [vmem:[%s343 + $0x12c] sm:$0xf]
        %v811 = vld [vmem:[%s343 + $0x130] sm:$0xf]
        %v812 = vld [vmem:[%s343 + $0x134] sm:$0xf]
        %v813 = vld [vmem:[%s343 + $0x138] sm:$0xf]
        %v814 = vld [vmem:[%s343 + $0x13c] sm:$0xf]
        %v815 = vld [vmem:[%s343 + $0x140] sm:$0xf]
        %v816 = vld [vmem:[%s343 + $0x144] sm:$0xf]
        %v817 = vld [vmem:[%s343 + $0x148] sm:$0xf]
        %v818 = vld [vmem:[%s343 + $0x14c] sm:$0xf]
        %v819 = vld [vmem:[%s343 + $0x150] sm:$0xf]
        %v820 = vld [vmem:[%s343 + $0x154] sm:$0xf]
        %v821 = vld [vmem:[%s343 + $0x158] sm:$0xf]
        %v822 = vld [vmem:[%s343 + $0x15c] sm:$0xf]
        %v823 = vld [vmem:[%s343 + $0x160] sm:$0xf]
        %v824 = vld [vmem:[%s343 + $0x164] sm:$0xf]
        %v825 = vld [vmem:[%s343 + $0x168] sm:$0xf]
        %v826 = vld [vmem:[%s343 + $0x16c] sm:$0xf]
        %v827 = vld [vmem:[%s343 + $0x170] sm:$0xf]
        %v828 = vld [vmem:[%s343 + $0x174] sm:$0xf]
        %v829 = vld [vmem:[%s343 + $0x178] sm:$0xf]
        %v830 = vld [vmem:[%s343 + $0x17c] sm:$0xf]
        %v831 = vld [vmem:[%s343 + $0x180] sm:$0xf]
        %v832 = vld [vmem:[%s343 + $0x184] sm:$0xf]
        %v833 = vld [vmem:[%s343 + $0x188] sm:$0xf]
        %v834 = vld [vmem:[%s343 + $0x18c] sm:$0xf]
        %v835 = vld [vmem:[%s343 + $0x190] sm:$0xf]
        %v836 = vld [vmem:[%s343 + $0x194] sm:$0xf]
        %v837 = vld [vmem:[%s343 + $0x198] sm:$0xf]
        %v838 = vld [vmem:[%s343 + $0x19c] sm:$0xf]
        %v839 = vld [vmem:[%s343 + $0x1a0] sm:$0xf]
        %v840 = vld [vmem:[%s343 + $0x1a4] sm:$0xf]
        %v841 = vld [vmem:[%s343 + $0x1a8] sm:$0xf]
        %v842 = vld [vmem:[%s343 + $0x1ac] sm:$0xf]
        %v843 = vld [vmem:[%s343 + $0x1b0] sm:$0xf]
        %v844 = vld [vmem:[%s343 + $0x1b4] sm:$0xf]
        %v845 = vld [vmem:[%s343 + $0x1b8] sm:$0xf]
        %v846 = vld [vmem:[%s343 + $0x1bc] sm:$0xf]
        %v847 = vld [vmem:[%s343 + $0x1c0] sm:$0xf]
        %v848 = vld [vmem:[%s343 + $0x1c4] sm:$0xf]
        %v849 = vld [vmem:[%s343 + $0x1c8] sm:$0xf]
        %v850 = vld [vmem:[%s343 + $0x1cc] sm:$0xf]
        %v851 = vld [vmem:[%s343 + $0x1d0] sm:$0xf]
        %v852 = vld [vmem:[%s343 + $0x1d4] sm:$0xf]
        %v853 = vld [vmem:[%s343 + $0x1d8] sm:$0xf]
        %v854 = vld [vmem:[%s343 + $0x1dc] sm:$0xf]
        %v855 = vld [vmem:[%s343 + $0x1e0] sm:$0xf]
        %v856 = vld [vmem:[%s343 + $0x1e4] sm:$0xf]
        %v857 = vld [vmem:[%s343 + $0x1e8] sm:$0xf]
        %v858 = vld [vmem:[%s343 + $0x1ec] sm:$0xf]
        %v859 = vld [vmem:[%s343 + $0x1f0] sm:$0xf]
        %v860 = vld [vmem:[%s343 + $0x1f4] sm:$0xf]
        %v861 = vld [vmem:[%s343 + $0x1f8] sm:$0xf]
        %v862 = vld [vmem:[%s343 + $0x1fc] sm:$0xf]
        %v863 = vld [vmem:[%s343 + $0x200] sm:$0xf]
        %v864 = vld [vmem:[%s343 + $0x204] sm:$0xf]
        %v865 = vld [vmem:[%s343 + $0x208] sm:$0xf]
        %v866 = vld [vmem:[%s343 + $0x20c] sm:$0xf]
        %v867 = vld [vmem:[%s343 + $0x210] sm:$0xf]
        %v868 = vld [vmem:[%s343 + $0x214] sm:$0xf]
        %v869 = vld [vmem:[%s343 + $0x218] sm:$0xf]
        %v870 = vld [vmem:[%s343 + $0x21c] sm:$0xf]
        %v871 = vld [vmem:[%s343 + $0x220] sm:$0xf]
        %v872 = vld [vmem:[%s343 + $0x224] sm:$0xf]
        %v873 = vld [vmem:[%s343 + $0x228] sm:$0xf]
        %v874 = vld [vmem:[%s343 + $0x22c] sm:$0xf]
        %v875 = vld [vmem:[%s343 + $0x230] sm:$0xf]
        %v876 = vld [vmem:[%s343 + $0x234] sm:$0xf]
        %v877 = vld [vmem:[%s343 + $0x238] sm:$0xf]
        %v878 = vld [vmem:[%s343 + $0x23c] sm:$0xf]
        %v879 = vld [vmem:[%s346] sm:$0x1]
        %v881 = vperm.slane %v879, 0
        %v903 = vunpack.c.l.b16 %v715
        %v904 = vunpack.c.h.b16 %v715
        %v905 = vunpack.c.l.b16 %v716
        %v906 = vunpack.c.h.b16 %v716
        %v907 = vunpack.c.l.b16 %v717
        %v908 = vunpack.c.h.b16 %v717
        %v909 = vunpack.c.l.b16 %v718
        %v910 = vunpack.c.h.b16 %v718
        %v911 = vunpack.c.l.b16 %v719
        %v912 = vunpack.c.l.b16 %v720
        %v913 = vunpack.c.h.b16 %v720
        %v914 = vunpack.c.l.b16 %v721
        %v915 = vunpack.c.h.b16 %v721
        %v916 = vunpack.c.l.b16 %v722
        %v917 = vunpack.c.h.b16 %v722
        %v918 = vunpack.c.l.b16 %v723
        %v919 = vunpack.c.h.b16 %v723
        %v920 = vunpack.c.l.b16 %v724
        %v921 = vunpack.c.l.b16 %v725
        %v922 = vunpack.c.h.b16 %v725
        %v923 = vunpack.c.l.b16 %v726
        %v924 = vunpack.c.h.b16 %v726
        %v925 = vunpack.c.l.b16 %v727
        %v926 = vunpack.c.h.b16 %v727
        %v927 = vunpack.c.l.b16 %v728
        %v928 = vunpack.c.h.b16 %v728
        %v929 = vunpack.c.l.b16 %v729
        %v930 = vunpack.c.l.b16 %v730
        %v931 = vunpack.c.h.b16 %v730
        %v932 = vunpack.c.l.b16 %v731
        %v933 = vunpack.c.h.b16 %v731
        %v934 = vunpack.c.l.b16 %v732
        %v935 = vunpack.c.h.b16 %v732
        %v936 = vunpack.c.l.b16 %v733
        %v937 = vunpack.c.h.b16 %v733
        %v938 = vunpack.c.l.b16 %v734
        %v939 = vpack.c.b16 %v912, %v903
        %v940 = vpack.c.b16 %v913, %v904
        %v941 = vpack.c.b16 %v914, %v905
        %v942 = vpack.c.b16 %v915, %v906
        %v943 = vpack.c.b16 %v916, %v907
        %v944 = vpack.c.b16 %v917, %v908
        %v945 = vpack.c.b16 %v918, %v909
        %v946 = vpack.c.b16 %v919, %v910
        %v947 = vpack.c.b16 %v920, %v911
        %v948 = vpack.c.b16 %v930, %v921
        %v949 = vpack.c.b16 %v931, %v922
        %v950 = vpack.c.b16 %v932, %v923
        %v951 = vpack.c.b16 %v933, %v924
        %v952 = vpack.c.b16 %v934, %v925
        %v953 = vpack.c.b16 %v935, %v926
        %v954 = vpack.c.b16 %v936, %v927
        %v955 = vpack.c.b16 %v937, %v928
        %v956 = vpack.c.b16 %v938, %v929
        %v1119 = vunpack.c.l.b16 %v735
        %v1120 = vunpack.c.l.b16 %v736
        %v1121 = vunpack.c.l.b16 %v737
        %v1122 = vunpack.c.l.b16 %v738
        %v1123 = vunpack.c.l.b16 %v739
        %v1124 = vunpack.c.l.b16 %v740
        %v1125 = vunpack.c.l.b16 %v741
        %v1126 = vunpack.c.l.b16 %v742
        %v1127 = vunpack.c.l.b16 %v743
        %v1128 = vunpack.c.l.b16 %v744
        %v1129 = vunpack.c.l.b16 %v745
        %v1130 = vunpack.c.l.b16 %v746
        %v1131 = vunpack.c.l.b16 %v747
        %v1132 = vunpack.c.l.b16 %v748
        %v1133 = vunpack.c.l.b16 %v749
        %v1134 = vunpack.c.l.b16 %v750
        %v1135 = vunpack.c.l.b16 %v751
        %v1136 = vunpack.c.l.b16 %v752
        %v1137 = vunpack.c.l.b16 %v753
        %v1138 = vunpack.c.l.b16 %v754
        %v1139 = vunpack.c.l.b16 %v755
        %v1140 = vunpack.c.l.b16 %v756
        %v1141 = vunpack.c.l.b16 %v757
        %v1142 = vunpack.c.l.b16 %v758
        %v1143 = vunpack.c.l.b16 %v759
        %v1144 = vunpack.c.l.b16 %v760
        %v1145 = vunpack.c.l.b16 %v761
        %v1146 = vunpack.c.l.b16 %v762
        %v1147 = vunpack.c.l.b16 %v763
        %v1148 = vunpack.c.l.b16 %v764
        %v1149 = vunpack.c.l.b16 %v765
        %v1150 = vunpack.c.l.b16 %v766
        %v1151 = vunpack.c.l.b16 %v767
        %v1152 = vunpack.c.l.b16 %v768
        %v1153 = vunpack.c.l.b16 %v769
        %v1154 = vunpack.c.l.b16 %v770
        %v1155 = vunpack.c.l.b16 %v771
        %v1156 = vunpack.c.l.b16 %v772
        %v1157 = vunpack.c.l.b16 %v773
        %v1158 = vunpack.c.l.b16 %v774
        %v1159 = vunpack.c.l.b16 %v775
        %v1160 = vunpack.c.l.b16 %v776
        %v1161 = vunpack.c.l.b16 %v777
        %v1162 = vunpack.c.l.b16 %v778
        %v1163 = vunpack.c.l.b16 %v779
        %v1164 = vunpack.c.l.b16 %v780
        %v1165 = vunpack.c.l.b16 %v781
        %v1166 = vunpack.c.l.b16 %v782
        %v1167 = vunpack.c.l.b16 %v783
        %v1168 = vunpack.c.l.b16 %v784
        %v1169 = vunpack.c.l.b16 %v785
        %v1170 = vunpack.c.l.b16 %v786
        %v1171 = vunpack.c.l.b16 %v787
        %v1172 = vunpack.c.l.b16 %v788
        %v1173 = vunpack.c.l.b16 %v789
        %v1174 = vunpack.c.l.b16 %v790
        %v1175 = vunpack.c.l.b16 %v791
        %v1176 = vunpack.c.l.b16 %v792
        %v1177 = vunpack.c.l.b16 %v793
        %v1178 = vunpack.c.l.b16 %v794
        %v1179 = vunpack.c.l.b16 %v795
        %v1180 = vunpack.c.l.b16 %v796
        %v1181 = vunpack.c.l.b16 %v797
        %v1182 = vunpack.c.l.b16 %v798
        %v1183 = vunpack.c.l.b16 %v799
        %v1184 = vunpack.c.l.b16 %v800
        %v1185 = vunpack.c.l.b16 %v801
        %v1186 = vunpack.c.l.b16 %v802
        %v1187 = vunpack.c.l.b16 %v803
        %v1188 = vunpack.c.l.b16 %v804
        %v1189 = vunpack.c.l.b16 %v805
        %v1190 = vunpack.c.l.b16 %v806
        %v1191 = vunpack.c.l.b16 %v807
        %v1192 = vunpack.c.l.b16 %v808
        %v1193 = vunpack.c.l.b16 %v809
        %v1194 = vunpack.c.l.b16 %v810
        %v1195 = vunpack.c.l.b16 %v811
        %v1196 = vunpack.c.l.b16 %v812
        %v1197 = vunpack.c.l.b16 %v813
        %v1198 = vunpack.c.l.b16 %v814
        %v1199 = vunpack.c.l.b16 %v815
        %v1200 = vunpack.c.l.b16 %v816
        %v1201 = vunpack.c.l.b16 %v817
        %v1202 = vunpack.c.l.b16 %v818
        %v1203 = vunpack.c.l.b16 %v819
        %v1204 = vunpack.c.l.b16 %v820
        %v1205 = vunpack.c.l.b16 %v821
        %v1206 = vunpack.c.l.b16 %v822
        %v1207 = vunpack.c.l.b16 %v823
        %v1208 = vunpack.c.l.b16 %v824
        %v1209 = vunpack.c.l.b16 %v825
        %v1210 = vunpack.c.l.b16 %v826
        %v1211 = vunpack.c.l.b16 %v827
        %v1212 = vunpack.c.l.b16 %v828
        %v1213 = vunpack.c.l.b16 %v829
        %v1214 = vunpack.c.l.b16 %v830
        %v1215 = vunpack.c.l.b16 %v831
        %v1216 = vunpack.c.l.b16 %v832
        %v1217 = vunpack.c.l.b16 %v833
        %v1218 = vunpack.c.l.b16 %v834
        %v1219 = vunpack.c.l.b16 %v835
        %v1220 = vunpack.c.l.b16 %v836
        %v1221 = vunpack.c.l.b16 %v837
        %v1222 = vunpack.c.l.b16 %v838
        %v1223 = vunpack.c.l.b16 %v839
        %v1224 = vunpack.c.l.b16 %v840
        %v1225 = vunpack.c.l.b16 %v841
        %v1226 = vunpack.c.l.b16 %v842
        %v1227 = vunpack.c.l.b16 %v843
        %v1228 = vunpack.c.l.b16 %v844
        %v1229 = vunpack.c.l.b16 %v845
        %v1230 = vunpack.c.l.b16 %v846
        %v1231 = vunpack.c.l.b16 %v847
        %v1232 = vunpack.c.l.b16 %v848
        %v1233 = vunpack.c.l.b16 %v849
        %v1234 = vunpack.c.l.b16 %v850
        %v1235 = vunpack.c.l.b16 %v851
        %v1236 = vunpack.c.l.b16 %v852
        %v1237 = vunpack.c.l.b16 %v853
        %v1238 = vunpack.c.l.b16 %v854
        %v1239 = vunpack.c.l.b16 %v855
        %v1240 = vunpack.c.l.b16 %v856
        %v1241 = vunpack.c.l.b16 %v857
        %v1242 = vunpack.c.l.b16 %v858
        %v1243 = vunpack.c.l.b16 %v859
        %v1244 = vunpack.c.l.b16 %v860
        %v1245 = vunpack.c.l.b16 %v861
        %v1246 = vunpack.c.l.b16 %v862
        %v1247 = vunpack.c.l.b16 %v863
        %v1248 = vunpack.c.l.b16 %v864
        %v1249 = vunpack.c.l.b16 %v865
        %v1250 = vunpack.c.l.b16 %v866
        %v1251 = vunpack.c.l.b16 %v867
        %v1252 = vunpack.c.l.b16 %v868
        %v1253 = vunpack.c.l.b16 %v869
        %v1254 = vunpack.c.l.b16 %v870
        %v1255 = vunpack.c.l.b16 %v871
        %v1256 = vunpack.c.l.b16 %v872
        %v1257 = vunpack.c.l.b16 %v873
        %v1258 = vunpack.c.l.b16 %v874
        %v1259 = vunpack.c.l.b16 %v875
        %v1260 = vunpack.c.l.b16 %v876
        %v1261 = vunpack.c.l.b16 %v877
        %v1262 = vunpack.c.l.b16 %v878
        %v1263 = vpack.c.b16 %v1120, %v1119
        %v1264 = vpack.c.b16 %v1122, %v1121
        %v1265 = vpack.c.b16 %v1124, %v1123
        %v1266 = vpack.c.b16 %v1126, %v1125
        %v1267 = vpack.c.b16 %v1128, %v1127
        %v1268 = vpack.c.b16 %v1130, %v1129
        %v1269 = vpack.c.b16 %v1132, %v1131
        %v1270 = vpack.c.b16 %v1134, %v1133
        %v1271 = vpack.c.b16 %v1136, %v1135
        %v1272 = vpack.c.b16 %v1138, %v1137
        %v1273 = vpack.c.b16 %v1140, %v1139
        %v1274 = vpack.c.b16 %v1142, %v1141
        %v1275 = vpack.c.b16 %v1144, %v1143
        %v1276 = vpack.c.b16 %v1146, %v1145
        %v1277 = vpack.c.b16 %v1148, %v1147
        %v1278 = vpack.c.b16 %v1150, %v1149
        %v1279 = vpack.c.b16 %v1152, %v1151
        %v1280 = vpack.c.b16 %v1154, %v1153
        %v1281 = vpack.c.b16 %v1156, %v1155
        %v1282 = vpack.c.b16 %v1158, %v1157
        %v1283 = vpack.c.b16 %v1160, %v1159
        %v1284 = vpack.c.b16 %v1162, %v1161
        %v1285 = vpack.c.b16 %v1164, %v1163
        %v1286 = vpack.c.b16 %v1166, %v1165
        %v1287 = vpack.c.b16 %v1168, %v1167
        %v1288 = vpack.c.b16 %v1170, %v1169
        %v1289 = vpack.c.b16 %v1172, %v1171
        %v1290 = vpack.c.b16 %v1174, %v1173
        %v1291 = vpack.c.b16 %v1176, %v1175
        %v1292 = vpack.c.b16 %v1178, %v1177
        %v1293 = vpack.c.b16 %v1180, %v1179
        %v1294 = vpack.c.b16 %v1182, %v1181
        %v1295 = vpack.c.b16 %v1184, %v1183
        %v1296 = vpack.c.b16 %v1186, %v1185
        %v1297 = vpack.c.b16 %v1188, %v1187
        %v1298 = vpack.c.b16 %v1190, %v1189
        %v1299 = vpack.c.b16 %v1192, %v1191
        %v1300 = vpack.c.b16 %v1194, %v1193
        %v1301 = vpack.c.b16 %v1196, %v1195
        %v1302 = vpack.c.b16 %v1198, %v1197
        %v1303 = vpack.c.b16 %v1200, %v1199
        %v1304 = vpack.c.b16 %v1202, %v1201
        %v1305 = vpack.c.b16 %v1204, %v1203
        %v1306 = vpack.c.b16 %v1206, %v1205
        %v1307 = vpack.c.b16 %v1208, %v1207
        %v1308 = vpack.c.b16 %v1210, %v1209
        %v1309 = vpack.c.b16 %v1212, %v1211
        %v1310 = vpack.c.b16 %v1214, %v1213
        %v1311 = vpack.c.b16 %v1216, %v1215
        %v1312 = vpack.c.b16 %v1218, %v1217
        %v1313 = vpack.c.b16 %v1220, %v1219
        %v1314 = vpack.c.b16 %v1222, %v1221
        %v1315 = vpack.c.b16 %v1224, %v1223
        %v1316 = vpack.c.b16 %v1226, %v1225
        %v1317 = vpack.c.b16 %v1228, %v1227
        %v1318 = vpack.c.b16 %v1230, %v1229
        %v1319 = vpack.c.b16 %v1232, %v1231
        %v1320 = vpack.c.b16 %v1234, %v1233
        %v1321 = vpack.c.b16 %v1236, %v1235
        %v1322 = vpack.c.b16 %v1238, %v1237
        %v1323 = vpack.c.b16 %v1240, %v1239
        %v1324 = vpack.c.b16 %v1242, %v1241
        %v1325 = vpack.c.b16 %v1244, %v1243
        %v1326 = vpack.c.b16 %v1246, %v1245
        %v1327 = vpack.c.b16 %v1248, %v1247
        %v1328 = vpack.c.b16 %v1250, %v1249
        %v1329 = vpack.c.b16 %v1252, %v1251
        %v1330 = vpack.c.b16 %v1254, %v1253
        %v1331 = vpack.c.b16 %v1256, %v1255
        %v1332 = vpack.c.b16 %v1258, %v1257
        %v1333 = vpack.c.b16 %v1260, %v1259
        %v1334 = vpack.c.b16 %v1262, %v1261
        %1407 = vmatpush.bf16.msra.mxu0 %v1270
        %1408 = vmatpush.bf16.msra.mxu0 %v1269
        %1409 = vmatpush.bf16.msra.mxu0 %v1268
        %1410 = vmatpush.bf16.msra.mxu0 %v1267
        %1411 = vmatpush.bf16.msra.mxu0 %v1266
        %1412 = vmatpush.bf16.msra.mxu0 %v1265
        %1413 = vmatpush.bf16.msra.mxu0 %v1264
        %1414 = vmatpush.bf16.msra.mxu0 %v1263
        %1415 = vmatmul.bf16.gmra.mxu0 %v939
        %v1416 = vpop.f32.mrf.mxu0
        %v1417 = vadd.f32 %v881, %v1416
        %v1418 = vpop.f32.mrf.mxu0
        %v1419 = vadd.f32 %v881, %v1418
        %1420 = vmatmul.bf16.gmra.mxu0 %v948
        %v1421 = vpop.f32.mrf.mxu0
        %v1422 = vadd.f32 %v881, %v1421
        %v1423 = vpop.f32.mrf.mxu0
        %v1424 = vadd.f32 %v881, %v1423
        %1425 = vdwg.mxu0
        %1426 = vmatpush.bf16.msra.mxu0 %v1278
        %1427 = vmatpush.bf16.msra.mxu0 %v1277
        %1428 = vmatpush.bf16.msra.mxu0 %v1276
        %1429 = vmatpush.bf16.msra.mxu0 %v1275
        %1430 = vmatpush.bf16.msra.mxu0 %v1274
        %1431 = vmatpush.bf16.msra.mxu0 %v1273
        %1432 = vmatpush.bf16.msra.mxu0 %v1272
        %1433 = vmatpush.bf16.msra.mxu0 %v1271
        %1434 = vmatmul.bf16.gmra.mxu0 %v940
        %v1435 = vpop.f32.mrf.mxu0
        %v1436 = vadd.f32 %v1417, %v1435
        %v1437 = vpop.f32.mrf.mxu0
        %v1438 = vadd.f32 %v1419, %v1437
        %1439 = vmatmul.bf16.gmra.mxu0 %v949
        %v1440 = vpop.f32.mrf.mxu0
        %v1441 = vadd.f32 %v1422, %v1440
        %v1442 = vpop.f32.mrf.mxu0
        %v1443 = vadd.f32 %v1424, %v1442
        %1444 = vdwg.mxu0
        %1445 = vmatpush.bf16.msra.mxu0 %v1286
        %1446 = vmatpush.bf16.msra.mxu0 %v1285
        %1447 = vmatpush.bf16.msra.mxu0 %v1284
        %1448 = vmatpush.bf16.msra.mxu0 %v1283
        %1449 = vmatpush.bf16.msra.mxu0 %v1282
        %1450 = vmatpush.bf16.msra.mxu0 %v1281
        %1451 = vmatpush.bf16.msra.mxu0 %v1280
        %1452 = vmatpush.bf16.msra.mxu0 %v1279
        %1453 = vmatmul.bf16.gmra.mxu0 %v941
        %v1454 = vpop.f32.mrf.mxu0
        %v1455 = vadd.f32 %v1436, %v1454
        %v1456 = vpop.f32.mrf.mxu0
        %v1457 = vadd.f32 %v1438, %v1456
        %1458 = vmatmul.bf16.gmra.mxu0 %v950
        %v1459 = vpop.f32.mrf.mxu0
        %v1460 = vadd.f32 %v1441, %v1459
        %v1461 = vpop.f32.mrf.mxu0
        %v1462 = vadd.f32 %v1443, %v1461
        %1463 = vdwg.mxu0
        %1464 = vmatpush.bf16.msra.mxu0 %v1294
        %1465 = vmatpush.bf16.msra.mxu0 %v1293
        %1466 = vmatpush.bf16.msra.mxu0 %v1292
        %1467 = vmatpush.bf16.msra.mxu0 %v1291
        %1468 = vmatpush.bf16.msra.mxu0 %v1290
        %1469 = vmatpush.bf16.msra.mxu0 %v1289
        %1470 = vmatpush.bf16.msra.mxu0 %v1288
        %1471 = vmatpush.bf16.msra.mxu0 %v1287
        %1472 = vmatmul.bf16.gmra.mxu0 %v942
        %v1473 = vpop.f32.mrf.mxu0
        %v1474 = vadd.f32 %v1455, %v1473
        %v1475 = vpop.f32.mrf.mxu0
        %v1476 = vadd.f32 %v1457, %v1475
        %1477 = vmatmul.bf16.gmra.mxu0 %v951
        %v1478 = vpop.f32.mrf.mxu0
        %v1479 = vadd.f32 %v1460, %v1478
        %v1480 = vpop.f32.mrf.mxu0
        %v1481 = vadd.f32 %v1462, %v1480
        %1482 = vdwg.mxu0
        %1483 = vmatpush.bf16.msra.mxu0 %v1302
        %1484 = vmatpush.bf16.msra.mxu0 %v1301
        %1485 = vmatpush.bf16.msra.mxu0 %v1300
        %1486 = vmatpush.bf16.msra.mxu0 %v1299
        %1487 = vmatpush.bf16.msra.mxu0 %v1298
        %1488 = vmatpush.bf16.msra.mxu0 %v1297
        %1489 = vmatpush.bf16.msra.mxu0 %v1296
        %1490 = vmatpush.bf16.msra.mxu0 %v1295
        %1491 = vmatmul.bf16.gmra.mxu0 %v943
        %v1492 = vpop.f32.mrf.mxu0
        %v1493 = vadd.f32 %v1474, %v1492
        %v1494 = vpop.f32.mrf.mxu0
        %v1495 = vadd.f32 %v1476, %v1494
        %1496 = vmatmul.bf16.gmra.mxu0 %v952
        %v1497 = vpop.f32.mrf.mxu0
        %v1498 = vadd.f32 %v1479, %v1497
        %v1499 = vpop.f32.mrf.mxu0
        %v1500 = vadd.f32 %v1481, %v1499
        %1501 = vdwg.mxu0
        %1502 = vmatpush.bf16.msra.mxu0 %v1310
        %1503 = vmatpush.bf16.msra.mxu0 %v1309
        %1504 = vmatpush.bf16.msra.mxu0 %v1308
        %1505 = vmatpush.bf16.msra.mxu0 %v1307
        %1506 = vmatpush.bf16.msra.mxu0 %v1306
        %1507 = vmatpush.bf16.msra.mxu0 %v1305
        %1508 = vmatpush.bf16.msra.mxu0 %v1304
        %1509 = vmatpush.bf16.msra.mxu0 %v1303
        %1510 = vmatmul.bf16.gmra.mxu0 %v944
        %v1511 = vpop.f32.mrf.mxu0
        %v1512 = vadd.f32 %v1493, %v1511
        %v1513 = vpop.f32.mrf.mxu0
        %v1514 = vadd.f32 %v1495, %v1513
        %1515 = vmatmul.bf16.gmra.mxu0 %v953
        %v1516 = vpop.f32.mrf.mxu0
        %v1517 = vadd.f32 %v1498, %v1516
        %v1518 = vpop.f32.mrf.mxu0
        %v1519 = vadd.f32 %v1500, %v1518
        %1520 = vdwg.mxu0
        %1521 = vmatpush.bf16.msra.mxu0 %v1318
        %1522 = vmatpush.bf16.msra.mxu0 %v1317
        %1523 = vmatpush.bf16.msra.mxu0 %v1316
        %1524 = vmatpush.bf16.msra.mxu0 %v1315
        %1525 = vmatpush.bf16.msra.mxu0 %v1314
        %1526 = vmatpush.bf16.msra.mxu0 %v1313
        %1527 = vmatpush.bf16.msra.mxu0 %v1312
        %1528 = vmatpush.bf16.msra.mxu0 %v1311
        %1529 = vmatmul.bf16.gmra.mxu0 %v945
        %v1530 = vpop.f32.mrf.mxu0
        %v1531 = vadd.f32 %v1512, %v1530
        %v1532 = vpop.f32.mrf.mxu0
        %v1533 = vadd.f32 %v1514, %v1532
        %1534 = vmatmul.bf16.gmra.mxu0 %v954
        %v1535 = vpop.f32.mrf.mxu0
        %v1536 = vadd.f32 %v1517, %v1535
        %v1537 = vpop.f32.mrf.mxu0
        %v1538 = vadd.f32 %v1519, %v1537
        %1539 = vdwg.mxu0
        %1540 = vmatpush.bf16.msra.mxu0 %v1326
        %1541 = vmatpush.bf16.msra.mxu0 %v1325
        %1542 = vmatpush.bf16.msra.mxu0 %v1324
        %1543 = vmatpush.bf16.msra.mxu0 %v1323
        %1544 = vmatpush.bf16.msra.mxu0 %v1322
        %1545 = vmatpush.bf16.msra.mxu0 %v1321
        %1546 = vmatpush.bf16.msra.mxu0 %v1320
        %1547 = vmatpush.bf16.msra.mxu0 %v1319
        %1548 = vmatmul.bf16.gmra.mxu0 %v946
        %v1549 = vpop.f32.mrf.mxu0
        %v1550 = vadd.f32 %v1531, %v1549
        %v1551 = vpop.f32.mrf.mxu0
        %v1552 = vadd.f32 %v1533, %v1551
        %1553 = vmatmul.bf16.gmra.mxu0 %v955
        %v1554 = vpop.f32.mrf.mxu0
        %v1555 = vadd.f32 %v1536, %v1554
        %v1556 = vpop.f32.mrf.mxu0
        %v1557 = vadd.f32 %v1538, %v1556
        %1558 = vdwg.mxu0
        %1559 = vmatpush.bf16.msra.mxu0 %v1334
        %1560 = vmatpush.bf16.msra.mxu0 %v1333
        %1561 = vmatpush.bf16.msra.mxu0 %v1332
        %1562 = vmatpush.bf16.msra.mxu0 %v1331
        %1563 = vmatpush.bf16.msra.mxu0 %v1330
        %1564 = vmatpush.bf16.msra.mxu0 %v1329
        %1565 = vmatpush.bf16.msra.mxu0 %v1328
        %1566 = vmatpush.bf16.msra.mxu0 %v1327
        %1567 = vmatmul.bf16.gmra.mxu0 %v947
        %v1568 = vpop.f32.mrf.mxu0
        %v1569 = vadd.f32 %v1550, %v1568
        %v1570 = vpop.f32.mrf.mxu0
        %v1571 = vadd.f32 %v1552, %v1570
        %1572 = vmatmul.bf16.gmra.mxu0 %v956
        %v1573 = vpop.f32.mrf.mxu0
        %v1574 = vadd.f32 %v1555, %v1573
        %v1575 = vpop.f32.mrf.mxu0
        %v1576 = vadd.f32 %v1557, %v1575
        %1577 = vdwg.mxu0
        %v1578 = vpack.c.bf16 %v1569, %v1569
        %v1579 = vpack.c.bf16 %v1571, %v1571
        %v1580 = vpack.c.bf16 %v1574, %v1574
        %v1581 = vpack.c.bf16 %v1576, %v1576
        %1582 = vst [vmem:[%s303] sm:$0xf] %v1578
        %1583 = vst [vmem:[%s303 + $0x4] sm:$0xf] %v1579
        %1584 = vst [vmem:[%s303 + $0x8] sm:$0xf] %v1580
        %1585 = vst [vmem:[%s303 + $0xc] sm:$0xf] %v1581
        %s1586 = sand.u32 %s161, 1
        %s1587 = scalar_lea.sflag [#allocation4], %s1586
        %s1588 = sand.u32 %s161, 1
        %s1589 = smul.addr %s1588, 16
        %s1590 = scalar_lea.vmem [#allocation3], %s1589
        // Predicated region
        $region37: #{tpu_custom_call.1} parent=35 // pred_check
          %p1591 = pneg %p171
        $region38: #{tpu_custom_call.1} parent=35 // pred_check_branch
          %1593 = sbr.rel (%p1591) target = $region40
        $region39: #{tpu_custom_call.1} parent=35 // pred_region
          %s1594 = smul.u32 4, %s25
          %1596 = vsyncadd %s1587, 0
          %s1597 = sadd.s32 %s23, %s1594
          %s1598 = smul.addr %s24, 8
          %s1599 = sadd.s32 %s1597, %s1598
          %s1600 = smul.addr %s1599, 4
          %s1601 = scalar_lea.hbm %s4, %s1600
          %s1602 = sshll.u32 %s1590, 4
          %s1603 = int_to_ptr.vmem [resolvable:$true] %s1602
          %s1604 = sshll.u32 %s1601, 4
          %s1605 = int_to_ptr.hbm [resolvable:$true] %s1604
          %1610 = dma.vmem_to_hbm [thread:$0]  %s1603, 256, %s1605, %s1587, 64, 64, 4
        $region40: #{tpu_custom_call.1} parent=35 // pred_fallthru
          _
      $region36: #{tpu_custom_call.1} parent=5 // pred_fallthru
        _
      %p1611 = scmp.le.s32.totalorder 2, %s13
      // Predicated region
      $region41: #{tpu_custom_call.1} parent=5 // pred_check
        %p1612 = pneg %p1611
      $region42: #{tpu_custom_call.1} parent=5 // pred_check_branch
        %1614 = sbr.rel (%p1612) target = $region44
      $region43: #{tpu_custom_call.1} parent=5 // pred_region
        %s1615 = ssub.s32 %s13, 2
        // Predicated region
        $region45: #{tpu_custom_call.1} parent=43 // pred_check
          %p1616 = pneg %p177
        $region46: #{tpu_custom_call.1} parent=43 // pred_check_branch
          %1618 = sbr.rel (%p1616) target = $region48
        $region47: #{tpu_custom_call.1} parent=43 // pred_region
          %s1619 = sand.u32 %s162, 1
          %s1620 = scalar_lea.sflag [#allocation4], %s1619
          %s1621 = sand.u32 %s162, 1
          %s1622 = smul.addr %s1621, 16
          %s1623 = scalar_lea.vmem [#allocation3], %s1622
          %1625 = dma.done %s1620, 256
        $region48: #{tpu_custom_call.1} parent=43 // pred_fallthru
          _
      $region44: #{tpu_custom_call.1} parent=5 // pred_fallthru
        _
    $region6: #{tpu_custom_call.1} parent=1 // loop_footer
      %s17 = sadd.s32 1, %s13
    $region7: #{tpu_custom_call.1} parent=1 // loop_footer_branch
      %12 = sbr.rel target = $region3
    $region8: #{tpu_custom_call.1} parent=1 // loop_exit
      _
    %1626 = vsyncpa [#allocation4], 1
    %s1627 = scalar_lea.sflag [#allocation4], 1
    %1628 = vsyncpa %s1627, 1

</llo_original>
